<compile_context>
chip_gen: v6e
topology: v6e:2x2x1
jax: 0.10.0
libtpu: 0.0.40
codegen_flags: <defaults>
</compile_context>

<pallas_src>
import functools
import math

import numpy as np
import jax
import jax.numpy as jnp
from jax import lax
from jax.experimental import pallas as pl
from jax.experimental.pallas import tpu as pltpu


# ----------------------------- fixed point helpers ------------------------------

def _round_clamp(scaled, total_bits):
    lo = -(2.0 ** (total_bits - 1))
    hi = 2.0 ** (total_bits - 1) - 1
    return jnp.clip(jnp.round(scaled), lo, hi)


def fxp(x, total_bits, frac_bits):
    """tensor_float_to_fixed_torch: round+clamp, keeping integer values as float32."""
    return _round_clamp(x * (2.0 ** frac_bits), total_bits)


# ----------------------------- fused Pallas kernel ------------------------------

def _fused_attn_kernel(hs_ref, w_ref, b_ref, probsq_ref, ctx_ref, *,
                       num_heads, head_size, h_param, ratio):
    N = hs_ref.shape[1]
    d = head_size
    A = num_heads * d

    # --- quantize activations / fused QKV weights + bias (once) ---
    hs_q = fxp(hs_ref[0], 16, 8)                        # (N, H)  int-valued f32
    w_q = fxp(w_ref[...], 16, 8)                        # (H, 3A)
    b_q = fxp(b_ref[...], 32, 16)                       # (1, 3A)

    # fused Q/K/V projection: one MXU pass instead of 3*nH tiny ones
    y = jnp.dot(hs_q, w_q, preferred_element_type=jnp.float32) + b_q
    # dequant (2^-16) + requant (2^8) folded into one exact power-of-two multiply
    qkv = _round_clamp(y * (2.0 ** -8), 16)             # (N, 3A)  fixed(16,8)

    # fold the 1/(2^16 * sqrt(d)) dequant+scale into Q once (N*A mults, not nH*N*N)
    scale = 1.0 / (65536.0 * math.sqrt(d))
    q_scaled = qkv[:, 0:A] * scale                      # (N, A)

    # --- row-0 (CLS query) pre-pass: per-head softmax of query row 0 only ---
    # The only cross-head dependency of the pruning decision is the sum over heads
    # of row-0 probabilities, so the full (N,N) probs never need to persist.
    ts_row = jnp.zeros((1, N), jnp.float32)
    for h in range(num_heads):
        q_blk = q_scaled[0:8, h * d:(h + 1) * d]        # (8, d) sublane-aligned block
        k_h = qkv[:, A + h * d:A + (h + 1) * d]         # (N, d)
        s_blk = lax.dot_general(q_blk, k_h, (((1,), (1,)), ((), ())),
                                preferred_element_type=jnp.float32)   # (8, N)
        s0 = s_blk[0:1, :]                              # CLS query row
        e0 = jnp.exp(s0 - jnp.max(s0, axis=-1, keepdims=True))
        ts_row = ts_row + e0 / jnp.sum(e0, axis=-1, keepdims=True)

    # --- adaptive token pruning, fully on device (sort-free formulation) ---
    # Token i (i>=1) is kept iff the sum of scores of tokens ranked strictly before it
    # (descending score, ties broken by lower index) is still < threshold.  Exactly
    # equivalent to the reference sort + cumulative while loop.  Token 0 always kept.
    idx_i = lax.broadcasted_iota(jnp.int32, (N, N), 0)
    idx_j = lax.broadcasted_iota(jnp.int32, (N, N), 1)
    # score_i as a column: diagonal select of ts_row (reuses iotas; no float eye / mul)
    ts_col = jnp.sum(jnp.where(idx_i == idx_j, ts_row, 0.0),
                     axis=-1, keepdims=True)            # (N, 1) == ts_row^T
    ranked_before = (ts_row > ts_col) | ((ts_row == ts_col) & (idx_j < idx_i))
    contrib = jnp.where(ranked_before & (idx_j >= 1), ts_row, 0.0)
    prefix = jnp.sum(contrib, axis=-1, keepdims=True)   # (N, 1)
    threshold = (h_param - ts_row[0:1, 0:1]) * ratio    # (1, 1)
    row_idx = idx_i[:, 0:1]                             # (N, 1)
    # keep mask folded with the 2^8 re-quantization scale: keep in {0, 256}
    keep_q8 = jnp.where((prefix < threshold) | (row_idx == 0), 256.0, 0.0)

    # --- fused per-head: scores -> softmax -> prune-mask -> requant -> P@V ---
    dequant = 1.0 / 65536.0
    for h in range(num_heads):
        q_h = q_scaled[:, h * d:(h + 1) * d]            # (N, d), already scaled
        k_h = qkv[:, A + h * d:A + (h + 1) * d]         # (N, d)
        v_h = qkv[:, 2 * A + h * d:2 * A + (h + 1) * d] # (N, d)
        s = lax.dot_general(q_h, k_h, (((1,), (1,)), ((), ())),
                            preferred_element_type=jnp.float32)       # q_h @ k_h^T
        e = jnp.exp(s - jnp.max(s, axis=-1, keepdims=True))
        # NOTE: pl.reciprocal(approx=True) rejected: its relative error can flip
        # fxp(.,16,8) roundings below, breaking parity with the fixed-point reference.
        p = e / jnp.sum(e, axis=-1, keepdims=True)
        pf = _round_clamp(p * keep_q8, 16)              # fixed(16,8) probs, rows pruned
        # head-major sublane offset (h*N, multiple of 8) -> aligned, lane-dense store
        probsq_ref[0, h * N:(h + 1) * N, :] = pf
        # per-head sliced PV: (N,N)x(N,d) — exactly the needed FLOPs, no masking
        ctx_ref[0, :, h * d:(h + 1) * d] = jnp.dot(
            pf, v_h, preferred_element_type=jnp.float32) * dequant


def fused_vit_self_attention(hs, w_qkv, b_qkv, *, num_heads, head_size,
                             h_param=16.0, ratio=1.0):
    B, N, H = hs.shape
    A = num_heads * head_size
    kernel = functools.partial(_fused_attn_kernel, num_heads=num_heads,
                               head_size=head_size, h_param=h_param, ratio=ratio)
    probsq, ctx = pl.pallas_call(
        kernel,
        out_shape=(jax.ShapeDtypeStruct((B, num_heads * N, N), jnp.float32),
                   jax.ShapeDtypeStruct((B, N, A), jnp.float32)),
        grid=(1,),
        in_specs=[
            pl.BlockSpec((B, N, H), lambda i: (0, 0, 0)),
            pl.BlockSpec((H, 3 * A), lambda i: (0, 0)),
            pl.BlockSpec((1, 3 * A), lambda i: (0, 0)),
        ],
        out_specs=(
            pl.BlockSpec((B, num_heads * N, N), lambda i: (0, 0, 0)),
            pl.BlockSpec((B, N, A), lambda i: (0, 0, 0)),
        ),
        compiler_params=pltpu.CompilerParams(
            dimension_semantics=("arbitrary",),
            vmem_limit_bytes=32 * 1024 * 1024),
    )(hs, w_qkv, b_qkv)
    return ctx, probsq


@functools.partial(jax.jit, static_argnames=("num_heads", "head_size"))
def vit_self_attention_forward(hidden_states, params, num_heads, head_size):
    B, N, H = hidden_states.shape
    assert B == 1, "reference pruning logic assumes batch size 1"
    A = num_heads * head_size
    # fused QKV weight in natural (H, 3A) layout: [Wq^T | Wk^T | Wv^T]
    w_qkv = jnp.concatenate(
        [params["wq"].T, params["wk"].T, params["wv"].T], axis=1)
    b_qkv = jnp.concatenate(
        [params["bq"], params["bk"], params["bv"]]).reshape(1, 3 * A)
    # layer_count == 0  ->  ratio = 1, h = 16, G = all ones (mask dropped in-kernel)
    ctx, probsq = fused_vit_self_attention(
        hidden_states, w_qkv, b_qkv, num_heads=num_heads, head_size=head_size,
        h_param=16.0, ratio=1.0)
    # secondary (output_attentions-style) output: (B, nH*N, N) -> (B, nH, N, N)
    # is a pure metadata reshape (no transpose, no HBM round trip).
    probs_q = probsq.reshape(B, num_heads, N, N)
    return ctx, probs_q


# ----------------------------- numpy float64 oracle -----------------------------

def _reference_forward_np(hidden_states, params, num_heads, head_size,
                          h_param=16.0, ratio=1.0):
    """float64 numpy oracle of the torch forward (layer_count == 0, eval dropout)."""
    def fxp_np(x, total_bits, frac_bits):
        scaled = x * (2.0 ** frac_bits)
        lo = -(2.0 ** (total_bits - 1))
        hi = 2.0 ** (total_bits - 1) - 1
        return np.clip(np.round(scaled), lo, hi)

    hs = np.asarray(hidden_states, np.float64)
    _, N, _ = hs.shape
    d = head_size
    A = num_heads * d
    hs_q = fxp_np(hs[0], 16, 8)

    def proj(w, b):
        wq = fxp_np(np.asarray(w, np.float64), 16, 8)
        bq = fxp_np(np.asarray(b, np.float64), 32, 16)
        y = hs_q @ wq.T + bq
        return fxp_np(y / 65536.0, 16, 8)

    q = proj(params["wq"], params["bq"]).reshape(N, num_heads, d).transpose(1, 0, 2)
    k = proj(params["wk"], params["bk"]).reshape(N, num_heads, d).transpose(1, 0, 2)
    v = proj(params["wv"], params["bv"]).reshape(N, num_heads, d).transpose(1, 0, 2)

    scores = np.einsum("hnd,hmd->hnm", q, k) / 65536.0 / math.sqrt(d)
    scores = scores - scores.max(-1, keepdims=True)
    e = np.exp(scores)
    probs = e / e.sum(-1, keepdims=True)                       # (nH, N, N)

    token_score = probs.sum(0)[0]                              # (N,)
    threshold = (h_param - token_score[0]) * ratio
    rest = token_score[1:]
    order = np.argsort(-rest, kind="stable")
    srt = rest[order]
    part_sum, keep_num = 0.0, 0
    while part_sum < threshold and keep_num < srt.shape[0]:
        part_sum += srt[keep_num]
        keep_num += 1
    keep = np.zeros(N, np.float64)
    keep[0] = 1.0
    keep[order[:keep_num] + 1] = 1.0

    probs_q = fxp_np(probs * keep[None, :, None], 16, 8)       # (nH, N, N)
    ctx = np.einsum("hnm,hmd->hnd", probs_q, v) / 65536.0
    ctx = ctx.transpose(1, 0, 2).reshape(N, A)
    return ctx[None], probs_q[None]


# ----------------------------- main --------------------------------------------

if __name__ == "__main__":
    B, N, H = 1, 64, 32
    num_heads, head_size = 4, 8
    A = num_heads * head_size                                  # all_head_size

    key = jax.random.PRNGKey(0)
    k_hs, k_wq, k_wk, k_wv, k_bq, k_bk, k_bv = jax.random.split(key, 7)

    # small magnitudes so fixed-point integer products stay exactly representable
    hidden_states = 0.1 * jax.random.normal(k_hs, (B, N, H), dtype=jnp.float32)
    bound = 1.0 / math.sqrt(H)                                 # nn.Linear-style init
    params = {
        "wq": jax.random.uniform(k_wq, (A, H), jnp.float32, -bound, bound),
        "wk": jax.random.uniform(k_wk, (A, H), jnp.float32, -bound, bound),
        "wv": jax.random.uniform(k_wv, (A, H), jnp.float32, -bound, bound),
        "bq": jax.random.uniform(k_bq, (A,), jnp.float32, -bound, bound),
        "bk": jax.random.uniform(k_bk, (A,), jnp.float32, -bound, bound),
        "bv": jax.random.uniform(k_bv, (A,), jnp.float32, -bound, bound),
    }

    context, probs_q = vit_self_attention_forward(hidden_states, params,
                                                  num_heads, head_size)
    context = jax.block_until_ready(context)

    assert context.shape == (B, N, A)
    assert probs_q.shape == (B, num_heads, N, N)
    assert bool(jnp.all(jnp.isfinite(context)))
    assert bool(jnp.all(jnp.isfinite(probs_q)))

    # correctness check against the float64 numpy oracle (tolerances allow at most
    # 1-LSB fixed-point rounding differences from f32/exp implementation ulps)
    ctx_ref, probsq_ref = _reference_forward_np(
        np.asarray(hidden_states), {k: np.asarray(v) for k, v in params.items()},
        num_heads, head_size)
    assert float(np.max(np.abs(np.asarray(context, np.float64) - ctx_ref))) < 2e-2
    assert float(np.max(np.abs(np.asarray(probs_q, np.float64) - probsq_ref))) <= 1.0 + 1e-6

    print("KERNEL_OK")
</pallas_src>

<mosaic_0001>
module attributes {stable_mosaic.version = 11 : i64} {
  func.func @_fused_attn_kernel(%arg0: i32, %arg1: memref<1x64x32xf32, #tpu.memory_space<vmem>>, %arg2: memref<32x96xf32, #tpu.memory_space<vmem>>, %arg3: memref<1x96xf32, #tpu.memory_space<vmem>>, %arg4: memref<1x256x64xf32, #tpu.memory_space<vmem>>, %arg5: memref<1x64x32xf32, #tpu.memory_space<vmem>>) attributes {dimension_semantics = [#tpu.dimension_semantics<arbitrary>], iteration_bounds = array<i64: 1>, scalar_prefetch = 0 : i64, scratch_operands = 0 : i64, tpu.core_type = #tpu.core_type<tc>, window_params = [{pipeline_mode = #tpu.pipeline_mode<synchronous>, transform_indices = @transform_0, window_bounds = array<i64: 1, 64, 32>}, {pipeline_mode = #tpu.pipeline_mode<synchronous>, transform_indices = @transform_1, window_bounds = array<i64: 32, 96>}, {pipeline_mode = #tpu.pipeline_mode<synchronous>, transform_indices = @transform_2, window_bounds = array<i64: 1, 96>}, {pipeline_mode = #tpu.pipeline_mode<synchronous>, transform_indices = @transform_3, window_bounds = array<i64: 1, 256, 64>}, {pipeline_mode = #tpu.pipeline_mode<synchronous>, transform_indices = @transform_4, window_bounds = array<i64: 1, 64, 32>}]} {
    %c0 = arith.constant 0 : index
    %c0_0 = arith.constant 0 : index
    %c0_1 = arith.constant 0 : index
    %0 = vector.load %arg1[%c0, %c0_0, %c0_1] : memref<1x64x32xf32, #tpu.memory_space<vmem>>, vector<1x64x32xf32>
    %1 = vector.shape_cast %0 : vector<1x64x32xf32> to vector<64x32xf32>
    %cst = arith.constant 2.560000e+02 : f32
    %2 = vector.broadcast %cst : f32 to vector<64x32xf32>
    %3 = arith.mulf %1, %2 : vector<64x32xf32>
    %4 = math.roundeven %3 : vector<64x32xf32>
    %cst_2 = arith.constant -3.276800e+04 : f32
    %cst_3 = arith.constant 3.276700e+04 : f32
    %5 = vector.broadcast %cst_2 : f32 to vector<64x32xf32>
    %6 = arith.maximumf %5, %4 : vector<64x32xf32>
    %7 = vector.broadcast %cst_3 : f32 to vector<64x32xf32>
    %8 = arith.minimumf %7, %6 : vector<64x32xf32>
    %c0_4 = arith.constant 0 : index
    %c0_5 = arith.constant 0 : index
    %9 = vector.load %arg2[%c0_4, %c0_5] : memref<32x96xf32, #tpu.memory_space<vmem>>, vector<32x96xf32>
    %cst_6 = arith.constant 2.560000e+02 : f32
    %10 = vector.broadcast %cst_6 : f32 to vector<32x96xf32>
    %11 = arith.mulf %9, %10 : vector<32x96xf32>
    %12 = math.roundeven %11 : vector<32x96xf32>
    %cst_7 = arith.constant -3.276800e+04 : f32
    %cst_8 = arith.constant 3.276700e+04 : f32
    %13 = vector.broadcast %cst_7 : f32 to vector<32x96xf32>
    %14 = arith.maximumf %13, %12 : vector<32x96xf32>
    %15 = vector.broadcast %cst_8 : f32 to vector<32x96xf32>
    %16 = arith.minimumf %15, %14 : vector<32x96xf32>
    %c0_9 = arith.constant 0 : index
    %c0_10 = arith.constant 0 : index
    %17 = vector.load %arg3[%c0_9, %c0_10] : memref<1x96xf32, #tpu.memory_space<vmem>>, vector<1x96xf32>
    %cst_11 = arith.constant 6.553600e+04 : f32
    %18 = vector.broadcast %cst_11 : f32 to vector<1x96xf32>
    %19 = arith.mulf %17, %18 : vector<1x96xf32>
    %20 = math.roundeven %19 : vector<1x96xf32>
    %cst_12 = arith.constant -2.14748365E+9 : f32
    %cst_13 = arith.constant 2.14748365E+9 : f32
    %21 = vector.broadcast %cst_12 : f32 to vector<1x96xf32>
    %22 = arith.maximumf %21, %20 : vector<1x96xf32>
    %23 = vector.broadcast %cst_13 : f32 to vector<1x96xf32>
    %24 = arith.minimumf %23, %22 : vector<1x96xf32>
    %cst_14 = arith.constant dense<0.000000e+00> : vector<64x96xf32>
    %25 = tpu.matmul %8, %16, %cst_14 {dimension_numbers = #tpu.dot_dimension_numbers<[1], [0], [0], [1], [0, 0, 1, 1], [], []>} : vector<64x32xf32>, vector<32x96xf32>, vector<64x96xf32> -> vector<64x96xf32>
    %26 = vector.broadcast %24 : vector<1x96xf32> to vector<64x96xf32>
    %27 = arith.addf %25, %26 : vector<64x96xf32>
    %cst_15 = arith.constant 3.906250e-03 : f32
    %28 = vector.broadcast %cst_15 : f32 to vector<64x96xf32>
    %29 = arith.mulf %27, %28 : vector<64x96xf32>
    %30 = math.roundeven %29 : vector<64x96xf32>
    %cst_16 = arith.constant -3.276800e+04 : f32
    %cst_17 = arith.constant 3.276700e+04 : f32
    %31 = vector.broadcast %cst_16 : f32 to vector<64x96xf32>
    %32 = arith.maximumf %31, %30 : vector<64x96xf32>
    %33 = vector.broadcast %cst_17 : f32 to vector<64x96xf32>
    %34 = arith.minimumf %33, %32 : vector<64x96xf32>
    %35 = vector.extract_strided_slice %34 {offsets = [0, 0], sizes = [64, 32], strides = [1, 1]} : vector<64x96xf32> to vector<64x32xf32>
    %cst_18 = arith.constant 5.39479652E-6 : f32
    %36 = vector.broadcast %cst_18 : f32 to vector<64x32xf32>
    %37 = arith.mulf %35, %36 : vector<64x32xf32>
    %cst_19 = arith.constant 0.000000e+00 : f32
    %38 = vector.broadcast %cst_19 : f32 to vector<1x64xf32>
    %39 = vector.extract_strided_slice %37 {offsets = [0, 0], sizes = [8, 8], strides = [1, 1]} : vector<64x32xf32> to vector<8x8xf32>
    %40 = vector.extract_strided_slice %34 {offsets = [0, 32], sizes = [64, 8], strides = [1, 1]} : vector<64x96xf32> to vector<64x8xf32>
    %cst_20 = arith.constant dense<0.000000e+00> : vector<8x64xf32>
    %41 = tpu.matmul %39, %40, %cst_20 {dimension_numbers = #tpu.dot_dimension_numbers<[1], [1], [0], [0], [0, 0, 1, 0], [], []>} : vector<8x8xf32>, vector<64x8xf32>, vector<8x64xf32> -> vector<8x64xf32>
    %42 = vector.extract_strided_slice %41 {offsets = [0, 0], sizes = [1, 64], strides = [1, 1]} : vector<8x64xf32> to vector<1x64xf32>
    %cst_21 = arith.constant dense<0xFF800000> : vector<1xf32>
    %43 = vector.multi_reduction <maximumf>, %42, %cst_21 [1] : vector<1x64xf32> to vector<1xf32>
    %44 = vector.shape_cast %43 : vector<1xf32> to vector<1x1xf32>
    %45 = vector.broadcast %44 : vector<1x1xf32> to vector<1x64xf32>
    %46 = arith.subf %42, %45 : vector<1x64xf32>
    %47 = math.exp %46 : vector<1x64xf32>
    %cst_22 = arith.constant dense<0.000000e+00> : vector<1xf32>
    %48 = vector.multi_reduction <add>, %47, %cst_22 [1] : vector<1x64xf32> to vector<1xf32>
    %49 = vector.shape_cast %48 : vector<1xf32> to vector<1x1xf32>
    %50 = vector.broadcast %49 : vector<1x1xf32> to vector<1x64xf32>
    %51 = arith.divf %47, %50 : vector<1x64xf32>
    %52 = arith.addf %38, %51 : vector<1x64xf32>
    %53 = vector.extract_strided_slice %37 {offsets = [0, 8], sizes = [8, 8], strides = [1, 1]} : vector<64x32xf32> to vector<8x8xf32>
    %54 = vector.extract_strided_slice %34 {offsets = [0, 40], sizes = [64, 8], strides = [1, 1]} : vector<64x96xf32> to vector<64x8xf32>
    %cst_23 = arith.constant dense<0.000000e+00> : vector<8x64xf32>
    %55 = tpu.matmul %53, %54, %cst_23 {dimension_numbers = #tpu.dot_dimension_numbers<[1], [1], [0], [0], [0, 0, 1, 0], [], []>} : vector<8x8xf32>, vector<64x8xf32>, vector<8x64xf32> -> vector<8x64xf32>
    %56 = vector.extract_strided_slice %55 {offsets = [0, 0], sizes = [1, 64], strides = [1, 1]} : vector<8x64xf32> to vector<1x64xf32>
    %cst_24 = arith.constant dense<0xFF800000> : vector<1xf32>
    %57 = vector.multi_reduction <maximumf>, %56, %cst_24 [1] : vector<1x64xf32> to vector<1xf32>
    %58 = vector.shape_cast %57 : vector<1xf32> to vector<1x1xf32>
    %59 = vector.broadcast %58 : vector<1x1xf32> to vector<1x64xf32>
    %60 = arith.subf %56, %59 : vector<1x64xf32>
    %61 = math.exp %60 : vector<1x64xf32>
    %cst_25 = arith.constant dense<0.000000e+00> : vector<1xf32>
    %62 = vector.multi_reduction <add>, %61, %cst_25 [1] : vector<1x64xf32> to vector<1xf32>
    %63 = vector.shape_cast %62 : vector<1xf32> to vector<1x1xf32>
    %64 = vector.broadcast %63 : vector<1x1xf32> to vector<1x64xf32>
    %65 = arith.divf %61, %64 : vector<1x64xf32>
    %66 = arith.addf %52, %65 : vector<1x64xf32>
    %67 = vector.extract_strided_slice %37 {offsets = [0, 16], sizes = [8, 8], strides = [1, 1]} : vector<64x32xf32> to vector<8x8xf32>
    %68 = vector.extract_strided_slice %34 {offsets = [0, 48], sizes = [64, 8], strides = [1, 1]} : vector<64x96xf32> to vector<64x8xf32>
    %cst_26 = arith.constant dense<0.000000e+00> : vector<8x64xf32>
    %69 = tpu.matmul %67, %68, %cst_26 {dimension_numbers = #tpu.dot_dimension_numbers<[1], [1], [0], [0], [0, 0, 1, 0], [], []>} : vector<8x8xf32>, vector<64x8xf32>, vector<8x64xf32> -> vector<8x64xf32>
    %70 = vector.extract_strided_slice %69 {offsets = [0, 0], sizes = [1, 64], strides = [1, 1]} : vector<8x64xf32> to vector<1x64xf32>
    %cst_27 = arith.constant dense<0xFF800000> : vector<1xf32>
    %71 = vector.multi_reduction <maximumf>, %70, %cst_27 [1] : vector<1x64xf32> to vector<1xf32>
    %72 = vector.shape_cast %71 : vector<1xf32> to vector<1x1xf32>
    %73 = vector.broadcast %72 : vector<1x1xf32> to vector<1x64xf32>
    %74 = arith.subf %70, %73 : vector<1x64xf32>
    %75 = math.exp %74 : vector<1x64xf32>
    %cst_28 = arith.constant dense<0.000000e+00> : vector<1xf32>
    %76 = vector.multi_reduction <add>, %75, %cst_28 [1] : vector<1x64xf32> to vector<1xf32>
    %77 = vector.shape_cast %76 : vector<1xf32> to vector<1x1xf32>
    %78 = vector.broadcast %77 : vector<1x1xf32> to vector<1x64xf32>
    %79 = arith.divf %75, %78 : vector<1x64xf32>
    %80 = arith.addf %66, %79 : vector<1x64xf32>
    %81 = vector.extract_strided_slice %37 {offsets = [0, 24], sizes = [8, 8], strides = [1, 1]} : vector<64x32xf32> to vector<8x8xf32>
    %82 = vector.extract_strided_slice %34 {offsets = [0, 56], sizes = [64, 8], strides = [1, 1]} : vector<64x96xf32> to vector<64x8xf32>
    %cst_29 = arith.constant dense<0.000000e+00> : vector<8x64xf32>
    %83 = tpu.matmul %81, %82, %cst_29 {dimension_numbers = #tpu.dot_dimension_numbers<[1], [1], [0], [0], [0, 0, 1, 0], [], []>} : vector<8x8xf32>, vector<64x8xf32>, vector<8x64xf32> -> vector<8x64xf32>
    %84 = vector.extract_strided_slice %83 {offsets = [0, 0], sizes = [1, 64], strides = [1, 1]} : vector<8x64xf32> to vector<1x64xf32>
    %cst_30 = arith.constant dense<0xFF800000> : vector<1xf32>
    %85 = vector.multi_reduction <maximumf>, %84, %cst_30 [1] : vector<1x64xf32> to vector<1xf32>
    %86 = vector.shape_cast %85 : vector<1xf32> to vector<1x1xf32>
    %87 = vector.broadcast %86 : vector<1x1xf32> to vector<1x64xf32>
    %88 = arith.subf %84, %87 : vector<1x64xf32>
    %89 = math.exp %88 : vector<1x64xf32>
    %cst_31 = arith.constant dense<0.000000e+00> : vector<1xf32>
    %90 = vector.multi_reduction <add>, %89, %cst_31 [1] : vector<1x64xf32> to vector<1xf32>
    %91 = vector.shape_cast %90 : vector<1xf32> to vector<1x1xf32>
    %92 = vector.broadcast %91 : vector<1x1xf32> to vector<1x64xf32>
    %93 = arith.divf %89, %92 : vector<1x64xf32>
    %94 = arith.addf %80, %93 : vector<1x64xf32>
    %95 = tpu.iota {dimensions = array<i32: 0>} : vector<64x64xi32>
    %96 = tpu.iota {dimensions = array<i32: 1>} : vector<64x64xi32>
    %97 = arith.cmpi eq, %95, %96 : vector<64x64xi32>
    %cst_32 = arith.constant 0.000000e+00 : f32
    %98 = vector.shape_cast %94 : vector<1x64xf32> to vector<1x64xf32>
    %99 = vector.broadcast %98 : vector<1x64xf32> to vector<64x64xf32>
    %100 = vector.broadcast %cst_32 : f32 to vector<64x64xf32>
    %101 = arith.select %97, %99, %100 : vector<64x64xi1>, vector<64x64xf32>
    %cst_33 = arith.constant dense<0.000000e+00> : vector<64xf32>
    %102 = vector.multi_reduction <add>, %101, %cst_33 [1] : vector<64x64xf32> to vector<64xf32>
    %103 = vector.shape_cast %102 : vector<64xf32> to vector<64x1xf32>
    %104 = vector.broadcast %94 : vector<1x64xf32> to vector<64x64xf32>
    %105 = vector.broadcast %103 : vector<64x1xf32> to vector<64x64xf32>
    %106 = arith.cmpf ogt, %104, %105 : vector<64x64xf32>
    %107 = vector.broadcast %94 : vector<1x64xf32> to vector<64x64xf32>
    %108 = vector.broadcast %103 : vector<64x1xf32> to vector<64x64xf32>
    %109 = arith.cmpf oeq, %107, %108 : vector<64x64xf32>
    %110 = arith.cmpi slt, %96, %95 : vector<64x64xi32>
    %111 = arith.andi %109, %110 : vector<64x64xi1>
    %112 = arith.ori %106, %111 : vector<64x64xi1>
    %c1_i32 = arith.constant 1 : i32
    %113 = vector.broadcast %c1_i32 : i32 to vector<64x64xi32>
    %114 = arith.cmpi sge, %96, %113 : vector<64x64xi32>
    %115 = arith.andi %112, %114 : vector<64x64xi1>
    %cst_34 = arith.constant 0.000000e+00 : f32
    %116 = vector.shape_cast %94 : vector<1x64xf32> to vector<1x64xf32>
    %117 = vector.broadcast %116 : vector<1x64xf32> to vector<64x64xf32>
    %118 = vector.broadcast %cst_34 : f32 to vector<64x64xf32>
    %119 = arith.select %115, %117, %118 : vector<64x64xi1>, vector<64x64xf32>
    %cst_35 = arith.constant dense<0.000000e+00> : vector<64xf32>
    %120 = vector.multi_reduction <add>, %119, %cst_35 [1] : vector<64x64xf32> to vector<64xf32>
    %121 = vector.shape_cast %120 : vector<64xf32> to vector<64x1xf32>
    %122 = vector.extract_strided_slice %94 {offsets = [0, 0], sizes = [1, 1], strides = [1, 1]} : vector<1x64xf32> to vector<1x1xf32>
    %cst_36 = arith.constant 1.600000e+01 : f32
    %123 = vector.broadcast %cst_36 : f32 to vector<1x1xf32>
    %124 = arith.subf %123, %122 : vector<1x1xf32>
    %cst_37 = arith.constant 1.000000e+00 : f32
    %125 = vector.broadcast %cst_37 : f32 to vector<1x1xf32>
    %126 = arith.mulf %124, %125 : vector<1x1xf32>
    %127 = vector.extract_strided_slice %95 {offsets = [0, 0], sizes = [64, 1], strides = [1, 1]} : vector<64x64xi32> to vector<64x1xi32>
    %128 = vector.broadcast %126 : vector<1x1xf32> to vector<64x1xf32>
    %129 = arith.cmpf olt, %121, %128 : vector<64x1xf32>
    %c0_i32 = arith.constant 0 : i32
    %130 = vector.broadcast %c0_i32 : i32 to vector<64x1xi32>
    %131 = arith.cmpi eq, %127, %130 : vector<64x1xi32>
    %132 = arith.ori %129, %131 : vector<64x1xi1>
    %cst_38 = arith.constant 2.560000e+02 : f32
    %cst_39 = arith.constant 0.000000e+00 : f32
    %133 = vector.broadcast %cst_38 : f32 to vector<64x1xf32>
    %134 = vector.broadcast %cst_39 : f32 to vector<64x1xf32>
    %135 = arith.select %132, %133, %134 : vector<64x1xi1>, vector<64x1xf32>
    %136 = vector.extract_strided_slice %37 {offsets = [0, 0], sizes = [64, 8], strides = [1, 1]} : vector<64x32xf32> to vector<64x8xf32>
    %137 = vector.extract_strided_slice %34 {offsets = [0, 32], sizes = [64, 8], strides = [1, 1]} : vector<64x96xf32> to vector<64x8xf32>
    %138 = vector.extract_strided_slice %34 {offsets = [0, 64], sizes = [64, 8], strides = [1, 1]} : vector<64x96xf32> to vector<64x8xf32>
    %cst_40 = arith.constant dense<0.000000e+00> : vector<64x64xf32>
    %139 = tpu.matmul %136, %137, %cst_40 {dimension_numbers = #tpu.dot_dimension_numbers<[1], [1], [0], [0], [0, 0, 1, 0], [], []>} : vector<64x8xf32>, vector<64x8xf32>, vector<64x64xf32> -> vector<64x64xf32>
    %cst_41 = arith.constant dense<0xFF800000> : vector<64xf32>
    %140 = vector.multi_reduction <maximumf>, %139, %cst_41 [1] : vector<64x64xf32> to vector<64xf32>
    %141 = vector.shape_cast %140 : vector<64xf32> to vector<64x1xf32>
    %142 = vector.broadcast %141 : vector<64x1xf32> to vector<64x64xf32>
    %143 = arith.subf %139, %142 : vector<64x64xf32>
    %144 = math.exp %143 : vector<64x64xf32>
    %cst_42 = arith.constant dense<0.000000e+00> : vector<64xf32>
    %145 = vector.multi_reduction <add>, %144, %cst_42 [1] : vector<64x64xf32> to vector<64xf32>
    %146 = vector.shape_cast %145 : vector<64xf32> to vector<64x1xf32>
    %147 = vector.broadcast %146 : vector<64x1xf32> to vector<64x64xf32>
    %148 = arith.divf %144, %147 : vector<64x64xf32>
    %149 = vector.broadcast %135 : vector<64x1xf32> to vector<64x64xf32>
    %150 = arith.mulf %148, %149 : vector<64x64xf32>
    %151 = math.roundeven %150 : vector<64x64xf32>
    %cst_43 = arith.constant -3.276800e+04 : f32
    %cst_44 = arith.constant 3.276700e+04 : f32
    %152 = vector.broadcast %cst_43 : f32 to vector<64x64xf32>
    %153 = arith.maximumf %152, %151 : vector<64x64xf32>
    %154 = vector.broadcast %cst_44 : f32 to vector<64x64xf32>
    %155 = arith.minimumf %154, %153 : vector<64x64xf32>
    %c0_45 = arith.constant 0 : index
    %c0_46 = arith.constant 0 : index
    %c0_47 = arith.constant 0 : index
    %156 = vector.load %arg4[%c0_45, %c0_46, %c0_47] : memref<1x256x64xf32, #tpu.memory_space<vmem>>, vector<1x64x64xf32>
    %157 = vector.shape_cast %156 : vector<1x64x64xf32> to vector<64x64xf32>
    %158 = vector.shape_cast %155 : vector<64x64xf32> to vector<1x64x64xf32>
    tpu.vector_store %arg4[%c0_45, %c0_46, %c0_47], %158 {strides = array<i32>} : memref<1x256x64xf32, #tpu.memory_space<vmem>>, vector<1x64x64xf32>,
    %cst_48 = arith.constant dense<0.000000e+00> : vector<64x8xf32>
    %159 = tpu.matmul %155, %138, %cst_48 {dimension_numbers = #tpu.dot_dimension_numbers<[1], [0], [0], [1], [0, 0, 1, 1], [], []>} : vector<64x64xf32>, vector<64x8xf32>, vector<64x8xf32> -> vector<64x8xf32>
    %cst_49 = arith.constant 1.52587891E-5 : f32
    %160 = vector.broadcast %cst_49 : f32 to vector<64x8xf32>
    %161 = arith.mulf %159, %160 : vector<64x8xf32>
    %c0_50 = arith.constant 0 : index
    %c0_51 = arith.constant 0 : index
    %c0_52 = arith.constant 0 : index
    %162 = vector.load %arg5[%c0_50, %c0_51, %c0_52] : memref<1x64x32xf32, #tpu.memory_space<vmem>>, vector<1x64x8xf32>
    %163 = vector.shape_cast %162 : vector<1x64x8xf32> to vector<64x8xf32>
    %164 = vector.shape_cast %161 : vector<64x8xf32> to vector<1x64x8xf32>
    tpu.vector_store %arg5[%c0_50, %c0_51, %c0_52], %164 {strides = array<i32>} : memref<1x64x32xf32, #tpu.memory_space<vmem>>, vector<1x64x8xf32>,
    %165 = vector.extract_strided_slice %37 {offsets = [0, 8], sizes = [64, 8], strides = [1, 1]} : vector<64x32xf32> to vector<64x8xf32>
    %166 = vector.extract_strided_slice %34 {offsets = [0, 40], sizes = [64, 8], strides = [1, 1]} : vector<64x96xf32> to vector<64x8xf32>
    %167 = vector.extract_strided_slice %34 {offsets = [0, 72], sizes = [64, 8], strides = [1, 1]} : vector<64x96xf32> to vector<64x8xf32>
    %cst_53 = arith.constant dense<0.000000e+00> : vector<64x64xf32>
    %168 = tpu.matmul %165, %166, %cst_53 {dimension_numbers = #tpu.dot_dimension_numbers<[1], [1], [0], [0], [0, 0, 1, 0], [], []>} : vector<64x8xf32>, vector<64x8xf32>, vector<64x64xf32> -> vector<64x64xf32>
    %cst_54 = arith.constant dense<0xFF800000> : vector<64xf32>
    %169 = vector.multi_reduction <maximumf>, %168, %cst_54 [1] : vector<64x64xf32> to vector<64xf32>
    %170 = vector.shape_cast %169 : vector<64xf32> to vector<64x1xf32>
    %171 = vector.broadcast %170 : vector<64x1xf32> to vector<64x64xf32>
    %172 = arith.subf %168, %171 : vector<64x64xf32>
    %173 = math.exp %172 : vector<64x64xf32>
    %cst_55 = arith.constant dense<0.000000e+00> : vector<64xf32>
    %174 = vector.multi_reduction <add>, %173, %cst_55 [1] : vector<64x64xf32> to vector<64xf32>
    %175 = vector.shape_cast %174 : vector<64xf32> to vector<64x1xf32>
    %176 = vector.broadcast %175 : vector<64x1xf32> to vector<64x64xf32>
    %177 = arith.divf %173, %176 : vector<64x64xf32>
    %178 = vector.broadcast %135 : vector<64x1xf32> to vector<64x64xf32>
    %179 = arith.mulf %177, %178 : vector<64x64xf32>
    %180 = math.roundeven %179 : vector<64x64xf32>
    %cst_56 = arith.constant -3.276800e+04 : f32
    %cst_57 = arith.constant 3.276700e+04 : f32
    %181 = vector.broadcast %cst_56 : f32 to vector<64x64xf32>
    %182 = arith.maximumf %181, %180 : vector<64x64xf32>
    %183 = vector.broadcast %cst_57 : f32 to vector<64x64xf32>
    %184 = arith.minimumf %183, %182 : vector<64x64xf32>
    %c0_58 = arith.constant 0 : index
    %c64 = arith.constant 64 : index
    %c0_59 = arith.constant 0 : index
    %185 = vector.load %arg4[%c0_58, %c64, %c0_59] : memref<1x256x64xf32, #tpu.memory_space<vmem>>, vector<1x64x64xf32>
    %186 = vector.shape_cast %185 : vector<1x64x64xf32> to vector<64x64xf32>
    %187 = vector.shape_cast %184 : vector<64x64xf32> to vector<1x64x64xf32>
    tpu.vector_store %arg4[%c0_58, %c64, %c0_59], %187 {strides = array<i32>} : memref<1x256x64xf32, #tpu.memory_space<vmem>>, vector<1x64x64xf32>,
    %cst_60 = arith.constant dense<0.000000e+00> : vector<64x8xf32>
    %188 = tpu.matmul %184, %167, %cst_60 {dimension_numbers = #tpu.dot_dimension_numbers<[1], [0], [0], [1], [0, 0, 1, 1], [], []>} : vector<64x64xf32>, vector<64x8xf32>, vector<64x8xf32> -> vector<64x8xf32>
    %cst_61 = arith.constant 1.52587891E-5 : f32
    %189 = vector.broadcast %cst_61 : f32 to vector<64x8xf32>
    %190 = arith.mulf %188, %189 : vector<64x8xf32>
    %c0_62 = arith.constant 0 : index
    %c0_63 = arith.constant 0 : index
    %c8 = arith.constant 8 : index
    %191 = vector.load %arg5[%c0_62, %c0_63, %c8] : memref<1x64x32xf32, #tpu.memory_space<vmem>>, vector<1x64x8xf32>
    %192 = vector.shape_cast %191 : vector<1x64x8xf32> to vector<64x8xf32>
    %193 = vector.shape_cast %190 : vector<64x8xf32> to vector<1x64x8xf32>
    tpu.vector_store %arg5[%c0_62, %c0_63, %c8], %193 {strides = array<i32>} : memref<1x64x32xf32, #tpu.memory_space<vmem>>, vector<1x64x8xf32>,
    %194 = vector.extract_strided_slice %37 {offsets = [0, 16], sizes = [64, 8], strides = [1, 1]} : vector<64x32xf32> to vector<64x8xf32>
    %195 = vector.extract_strided_slice %34 {offsets = [0, 48], sizes = [64, 8], strides = [1, 1]} : vector<64x96xf32> to vector<64x8xf32>
    %196 = vector.extract_strided_slice %34 {offsets = [0, 80], sizes = [64, 8], strides = [1, 1]} : vector<64x96xf32> to vector<64x8xf32>
    %cst_64 = arith.constant dense<0.000000e+00> : vector<64x64xf32>
    %197 = tpu.matmul %194, %195, %cst_64 {dimension_numbers = #tpu.dot_dimension_numbers<[1], [1], [0], [0], [0, 0, 1, 0], [], []>} : vector<64x8xf32>, vector<64x8xf32>, vector<64x64xf32> -> vector<64x64xf32>
    %cst_65 = arith.constant dense<0xFF800000> : vector<64xf32>
    %198 = vector.multi_reduction <maximumf>, %197, %cst_65 [1] : vector<64x64xf32> to vector<64xf32>
    %199 = vector.shape_cast %198 : vector<64xf32> to vector<64x1xf32>
    %200 = vector.broadcast %199 : vector<64x1xf32> to vector<64x64xf32>
    %201 = arith.subf %197, %200 : vector<64x64xf32>
    %202 = math.exp %201 : vector<64x64xf32>
    %cst_66 = arith.constant dense<0.000000e+00> : vector<64xf32>
    %203 = vector.multi_reduction <add>, %202, %cst_66 [1] : vector<64x64xf32> to vector<64xf32>
    %204 = vector.shape_cast %203 : vector<64xf32> to vector<64x1xf32>
    %205 = vector.broadcast %204 : vector<64x1xf32> to vector<64x64xf32>
    %206 = arith.divf %202, %205 : vector<64x64xf32>
    %207 = vector.broadcast %135 : vector<64x1xf32> to vector<64x64xf32>
    %208 = arith.mulf %206, %207 : vector<64x64xf32>
    %209 = math.roundeven %208 : vector<64x64xf32>
    %cst_67 = arith.constant -3.276800e+04 : f32
    %cst_68 = arith.constant 3.276700e+04 : f32
    %210 = vector.broadcast %cst_67 : f32 to vector<64x64xf32>
    %211 = arith.maximumf %210, %209 : vector<64x64xf32>
    %212 = vector.broadcast %cst_68 : f32 to vector<64x64xf32>
    %213 = arith.minimumf %212, %211 : vector<64x64xf32>
    %c0_69 = arith.constant 0 : index
    %c128 = arith.constant 128 : index
    %c0_70 = arith.constant 0 : index
    %214 = vector.load %arg4[%c0_69, %c128, %c0_70] : memref<1x256x64xf32, #tpu.memory_space<vmem>>, vector<1x64x64xf32>
    %215 = vector.shape_cast %214 : vector<1x64x64xf32> to vector<64x64xf32>
    %216 = vector.shape_cast %213 : vector<64x64xf32> to vector<1x64x64xf32>
    tpu.vector_store %arg4[%c0_69, %c128, %c0_70], %216 {strides = array<i32>} : memref<1x256x64xf32, #tpu.memory_space<vmem>>, vector<1x64x64xf32>,
    %cst_71 = arith.constant dense<0.000000e+00> : vector<64x8xf32>
    %217 = tpu.matmul %213, %196, %cst_71 {dimension_numbers = #tpu.dot_dimension_numbers<[1], [0], [0], [1], [0, 0, 1, 1], [], []>} : vector<64x64xf32>, vector<64x8xf32>, vector<64x8xf32> -> vector<64x8xf32>
    %cst_72 = arith.constant 1.52587891E-5 : f32
    %218 = vector.broadcast %cst_72 : f32 to vector<64x8xf32>
    %219 = arith.mulf %217, %218 : vector<64x8xf32>
    %c0_73 = arith.constant 0 : index
    %c0_74 = arith.constant 0 : index
    %c16 = arith.constant 16 : index
    %220 = vector.load %arg5[%c0_73, %c0_74, %c16] : memref<1x64x32xf32, #tpu.memory_space<vmem>>, vector<1x64x8xf32>
    %221 = vector.shape_cast %220 : vector<1x64x8xf32> to vector<64x8xf32>
    %222 = vector.shape_cast %219 : vector<64x8xf32> to vector<1x64x8xf32>
    tpu.vector_store %arg5[%c0_73, %c0_74, %c16], %222 {strides = array<i32>} : memref<1x64x32xf32, #tpu.memory_space<vmem>>, vector<1x64x8xf32>,
    %223 = vector.extract_strided_slice %37 {offsets = [0, 24], sizes = [64, 8], strides = [1, 1]} : vector<64x32xf32> to vector<64x8xf32>
    %224 = vector.extract_strided_slice %34 {offsets = [0, 56], sizes = [64, 8], strides = [1, 1]} : vector<64x96xf32> to vector<64x8xf32>
    %225 = vector.extract_strided_slice %34 {offsets = [0, 88], sizes = [64, 8], strides = [1, 1]} : vector<64x96xf32> to vector<64x8xf32>
    %cst_75 = arith.constant dense<0.000000e+00> : vector<64x64xf32>
    %226 = tpu.matmul %223, %224, %cst_75 {dimension_numbers = #tpu.dot_dimension_numbers<[1], [1], [0], [0], [0, 0, 1, 0], [], []>} : vector<64x8xf32>, vector<64x8xf32>, vector<64x64xf32> -> vector<64x64xf32>
    %cst_76 = arith.constant dense<0xFF800000> : vector<64xf32>
    %227 = vector.multi_reduction <maximumf>, %226, %cst_76 [1] : vector<64x64xf32> to vector<64xf32>
    %228 = vector.shape_cast %227 : vector<64xf32> to vector<64x1xf32>
    %229 = vector.broadcast %228 : vector<64x1xf32> to vector<64x64xf32>
    %230 = arith.subf %226, %229 : vector<64x64xf32>
    %231 = math.exp %230 : vector<64x64xf32>
    %cst_77 = arith.constant dense<0.000000e+00> : vector<64xf32>
    %232 = vector.multi_reduction <add>, %231, %cst_77 [1] : vector<64x64xf32> to vector<64xf32>
    %233 = vector.shape_cast %232 : vector<64xf32> to vector<64x1xf32>
    %234 = vector.broadcast %233 : vector<64x1xf32> to vector<64x64xf32>
    %235 = arith.divf %231, %234 : vector<64x64xf32>
    %236 = vector.broadcast %135 : vector<64x1xf32> to vector<64x64xf32>
    %237 = arith.mulf %235, %236 : vector<64x64xf32>
    %238 = math.roundeven %237 : vector<64x64xf32>
    %cst_78 = arith.constant -3.276800e+04 : f32
    %cst_79 = arith.constant 3.276700e+04 : f32
    %239 = vector.broadcast %cst_78 : f32 to vector<64x64xf32>
    %240 = arith.maximumf %239, %238 : vector<64x64xf32>
    %241 = vector.broadcast %cst_79 : f32 to vector<64x64xf32>
    %242 = arith.minimumf %241, %240 : vector<64x64xf32>
    %c0_80 = arith.constant 0 : index
    %c192 = arith.constant 192 : index
    %c0_81 = arith.constant 0 : index
    %243 = vector.load %arg4[%c0_80, %c192, %c0_81] : memref<1x256x64xf32, #tpu.memory_space<vmem>>, vector<1x64x64xf32>
    %244 = vector.shape_cast %243 : vector<1x64x64xf32> to vector<64x64xf32>
    %245 = vector.shape_cast %242 : vector<64x64xf32> to vector<1x64x64xf32>
    tpu.vector_store %arg4[%c0_80, %c192, %c0_81], %245 {strides = array<i32>} : memref<1x256x64xf32, #tpu.memory_space<vmem>>, vector<1x64x64xf32>,
    %cst_82 = arith.constant dense<0.000000e+00> : vector<64x8xf32>
    %246 = tpu.matmul %242, %225, %cst_82 {dimension_numbers = #tpu.dot_dimension_numbers<[1], [0], [0], [1], [0, 0, 1, 1], [], []>} : vector<64x64xf32>, vector<64x8xf32>, vector<64x8xf32> -> vector<64x8xf32>
    %cst_83 = arith.constant 1.52587891E-5 : f32
    %247 = vector.broadcast %cst_83 : f32 to vector<64x8xf32>
    %248 = arith.mulf %246, %247 : vector<64x8xf32>
    %c0_84 = arith.constant 0 : index
    %c0_85 = arith.constant 0 : index
    %c24 = arith.constant 24 : index
    %249 = vector.load %arg5[%c0_84, %c0_85, %c24] : memref<1x64x32xf32, #tpu.memory_space<vmem>>, vector<1x64x8xf32>
    %250 = vector.shape_cast %249 : vector<1x64x8xf32> to vector<64x8xf32>
    %251 = vector.shape_cast %248 : vector<64x8xf32> to vector<1x64x8xf32>
    tpu.vector_store %arg5[%c0_84, %c0_85, %c24], %251 {strides = array<i32>} : memref<1x64x32xf32, #tpu.memory_space<vmem>>, vector<1x64x8xf32>,
    return
  }
  func.func @transform_0(%arg0: i32) -> (i32, i32, i32) {
    %c0_i32 = arith.constant 0 : i32
    %c0_i32_0 = arith.constant 0 : i32
    %c0_i32_1 = arith.constant 0 : i32
    %c0_i32_2 = arith.constant 0 : i32
    return %c0_i32, %c0_i32_0, %c0_i32_1 : i32, i32, i32
  }
  func.func @transform_1(%arg0: i32) -> (i32, i32) {
    %c0_i32 = arith.constant 0 : i32
    %c0_i32_0 = arith.constant 0 : i32
    %c0_i32_1 = arith.constant 0 : i32
    return %c0_i32, %c0_i32_0 : i32, i32
  }
  func.func @transform_2(%arg0: i32) -> (i32, i32) {
    %c0_i32 = arith.constant 0 : i32
    %c0_i32_0 = arith.constant 0 : i32
    %c0_i32_1 = arith.constant 0 : i32
    return %c0_i32, %c0_i32_0 : i32, i32
  }
  func.func @transform_3(%arg0: i32) -> (i32, i32, i32) {
    %c0_i32 = arith.constant 0 : i32
    %c0_i32_0 = arith.constant 0 : i32
    %c0_i32_1 = arith.constant 0 : i32
    %c0_i32_2 = arith.constant 0 : i32
    return %c0_i32, %c0_i32_0, %c0_i32_1 : i32, i32, i32
  }
  func.func @transform_4(%arg0: i32) -> (i32, i32, i32) {
    %c0_i32 = arith.constant 0 : i32
    %c0_i32_0 = arith.constant 0 : i32
    %c0_i32_1 = arith.constant 0 : i32
    %c0_i32_2 = arith.constant 0 : i32
    return %c0_i32, %c0_i32_0, %c0_i32_1 : i32, i32, i32
  }
}

</mosaic_0001>

<llo_original>
// kernel: vit_self_attention_forward.1
$region0: #{vit_self_attention_forward.1}
  #allocation0 [shape = 'u32[]', space=smem, size = 0x4, offset = 0x4, fixed_abs, tag = 'smem constant byte address 0x4 - core index']
  #allocation1 [shape = 'u32[144,128]{1,0:T(1,128)}', space=vmem, size = 0x12000, scoped, tag = 'internal scratch']
  %s0 = inlined_call_operand.vmem [shape: f32[1,64,32], index: 0, kind: input, shape index: {}]
  %s1 = inlined_call_operand.vmem [shape: f32[32,96], index: 1, kind: input, shape index: {}]
  %s2 = inlined_call_operand.vmem [shape: f32[1,96], index: 2, kind: input, shape index: {}]
  %s3 = inlined_call_operand.hbm [shape: f32[1,256,64], index: 3, kind: output, shape index: {0}]
  %s4 = inlined_call_operand.vmem [shape: f32[1,64,32], index: 4, kind: output, shape index: {1}]
  %5 = xla_tuple %s3, %s4
  %s6 = sld [smem:[#allocation0]]
  $region30: #{vit_self_attention_forward.1} parent=0
    _
  %s8 = ssub.s32 1, %s6
  %s9 = scalar_select 0, %s8, %s6
  $region1: #{vit_self_attention_forward.1} parent=0
    #allocation2 [shape = 'u8[131072]{0}', space=vmem, size = 0x20000, scoped, tag = 'output window, operand 0, single buffered']
    #allocation3 [shape = 's32[1]{0}', space=sflag, size = 0x4, scoped, tag = 'scoped memory for vit_self_attention_forward.1']
    %10 = vsyncpa [#allocation3], 0
    // Predicated region
    $region2: #{vit_self_attention_forward.1} parent=1 // pred_check
      _
    $region3: #{vit_self_attention_forward.1} parent=1 // pred_check_branch
      %12 = sbr.rel (0) target = $region5
    $region4: #{vit_self_attention_forward.1} parent=1 // pred_region
      _
    $region5: #{vit_self_attention_forward.1} parent=1 // pred_fallthru
      _
    // Predicated region
    $region6: #{vit_self_attention_forward.1} parent=1 // pred_check
      _
    $region7: #{vit_self_attention_forward.1} parent=1 // pred_check_branch
      %14 = sbr.rel (0) target = $region9
    $region8: #{vit_self_attention_forward.1} parent=1 // pred_region
      _
    $region9: #{vit_self_attention_forward.1} parent=1 // pred_fallthru
      _
    // Predicated region
    $region10: #{vit_self_attention_forward.1} parent=1 // pred_check
      _
    $region11: #{vit_self_attention_forward.1} parent=1 // pred_check_branch
      %16 = sbr.rel (0) target = $region13
    $region12: #{vit_self_attention_forward.1} parent=1 // pred_region
      _
    $region13: #{vit_self_attention_forward.1} parent=1 // pred_fallthru
      _
    %v17 = vld [vmem:[%s0] sm:$0xff]
    %v18 = vld [vmem:[%s0 + $0x8] sm:$0xff]
    %v19 = vld [vmem:[%s0 + $0x10] sm:$0xff]
    %v20 = vld [vmem:[%s0 + $0x18] sm:$0xff]
    %v21 = vld [vmem:[%s0 + $0x20] sm:$0xff]
    %v22 = vld [vmem:[%s0 + $0x28] sm:$0xff]
    %v23 = vld [vmem:[%s0 + $0x30] sm:$0xff]
    %v24 = vld [vmem:[%s0 + $0x38] sm:$0xff]
    %v25 = vmul.f32 %v17, 256.0
    %v26 = vmul.f32 %v18, 256.0
    %v27 = vmul.f32 %v19, 256.0
    %v28 = vmul.f32 %v20, 256.0
    %v29 = vmul.f32 %v21, 256.0
    %v30 = vmul.f32 %v22, 256.0
    %v31 = vmul.f32 %v23, 256.0
    %v32 = vmul.f32 %v24, 256.0
    %v33 = vround.ne.pseudo %v25
    %v34 = vround.ne.pseudo %v26
    %v35 = vround.ne.pseudo %v27
    %v36 = vround.ne.pseudo %v28
    %v37 = vround.ne.pseudo %v29
    %v38 = vround.ne.pseudo %v30
    %v39 = vround.ne.pseudo %v31
    %v40 = vround.ne.pseudo %v32
    %v41 = vmax.f32 %v33, -32768.0
    %v42 = vmax.f32 %v34, -32768.0
    %v43 = vmax.f32 %v35, -32768.0
    %v44 = vmax.f32 %v36, -32768.0
    %v45 = vmax.f32 %v37, -32768.0
    %v46 = vmax.f32 %v38, -32768.0
    %v47 = vmax.f32 %v39, -32768.0
    %v48 = vmax.f32 %v40, -32768.0
    %v49 = vmin.f32 %v41, 32767.0
    %v50 = vmin.f32 %v42, 32767.0
    %v51 = vmin.f32 %v43, 32767.0
    %v52 = vmin.f32 %v44, 32767.0
    %v53 = vmin.f32 %v45, 32767.0
    %v54 = vmin.f32 %v46, 32767.0
    %v55 = vmin.f32 %v47, 32767.0
    %v56 = vmin.f32 %v48, 32767.0
    %v57 = vld [vmem:[%s1] sm:$0xff]
    %v58 = vld [vmem:[%s1 + $0x8] sm:$0xff]
    %v59 = vld [vmem:[%s1 + $0x10] sm:$0xff]
    %v60 = vld [vmem:[%s1 + $0x18] sm:$0xff]
    %v61 = vmul.f32 %v57, 256.0
    %v62 = vmul.f32 %v58, 256.0
    %v63 = vmul.f32 %v59, 256.0
    %v64 = vmul.f32 %v60, 256.0
    %v65 = vround.ne.pseudo %v61
    %v66 = vround.ne.pseudo %v62
    %v67 = vround.ne.pseudo %v63
    %v68 = vround.ne.pseudo %v64
    %v69 = vmax.f32 %v65, -32768.0
    %v70 = vmax.f32 %v66, -32768.0
    %v71 = vmax.f32 %v67, -32768.0
    %v72 = vmax.f32 %v68, -32768.0
    %v73 = vmin.f32 %v69, 32767.0
    %v74 = vmin.f32 %v70, 32767.0
    %v75 = vmin.f32 %v71, 32767.0
    %v76 = vmin.f32 %v72, 32767.0
    %v77 = vld [vmem:[%s2] sm:$0x1]
    %v78 = vmul.f32 %v77, 65536.0
    %v79 = vround.ne.pseudo %v78
    %v80 = vmax.f32 %v79, -2.1474836e+09
    %v81 = vmin.f32 %v80, 2.1474836e+09
    %v83 = vlaneseq
    %v84 = vshrl.u32 %v83, 7
    %v85 = vsub.s32 0, %v84
    %v86 = vrot.slane %v81, %v85
    %vm88 = vcmask 261120
    %v90 = vsel %vm88, %v49, 0
    %v93 = vsel %vm88, %v50, 0
    %v96 = vsel %vm88, %v51, 0
    %v99 = vsel %vm88, %v52, 0
    %v102 = vsel %vm88, %v53, 0
    %v105 = vsel %vm88, %v54, 0
    %v108 = vsel %vm88, %v55, 0
    %v111 = vsel %vm88, %v56, 0
    %113 = vmatprep.subr.mxu0 0.0
    %114 = vmatpush1.msra.mxu0 0.0
    %115 = vmatprep.subr.mxu0 0.0
    %116 = vmatpush1.msra.mxu0 0.0
    %117 = vmatprep.subr.mxu0 0.0
    %118 = vmatpush1.msra.mxu0 0.0
    %119 = vmatprep.subr.mxu0 0.0
    %120 = vmatpush1.msra.mxu0 0.0
    %121 = vmatprep.subr.mxu0 0.0
    %122 = vmatpush1.msra.mxu0 0.0
    %123 = vmatprep.subr.mxu0 0.0
    %124 = vmatpush1.msra.mxu0 0.0
    %125 = vmatprep.subr.mxu0 0.0
    %126 = vmatpush1.msra.mxu0 0.0
    %127 = vmatprep.subr.mxu0 0.0
    %128 = vmatpush1.msra.mxu0 0.0
    %129 = vmatprep.subr.mxu0 0.0
    %130 = vmatpush1.msra.mxu0 0.0
    %131 = vmatprep.subr.mxu0 0.0
    %132 = vmatpush1.msra.mxu0 0.0
    %133 = vmatprep.subr.mxu0 0.0
    %134 = vmatpush1.msra.mxu0 0.0
    %135 = vmatprep.subr.mxu0 0.0
    %136 = vmatpush1.msra.mxu0 0.0
    %137 = vmatprep.subr.mxu0 0.0
    %138 = vmatpush1.msra.mxu0 %v76
    %139 = vmatprep.subr.mxu0 0.0
    %140 = vmatpush1.msra.mxu0 %v75
    %141 = vmatprep.subr.mxu0 0.0
    %142 = vmatpush1.msra.mxu0 %v74
    %143 = vmatprep.subr.mxu0 0.0
    %144 = vmatpush1.msra.mxu0 %v73
    %145 = vmatprep.subr.mxu0 0.0
    %146 = vmatpush2.msra.mxu0 0.0
    %147 = vmatprep.subr.mxu0 0.0
    %148 = vmatpush2.msra.mxu0 0.0
    %149 = vmatprep.subr.mxu0 0.0
    %150 = vmatpush2.msra.mxu0 0.0
    %151 = vmatprep.subr.mxu0 0.0
    %152 = vmatpush2.msra.mxu0 0.0
    %153 = vmatprep.subr.mxu0 0.0
    %154 = vmatpush2.msra.mxu0 0.0
    %155 = vmatprep.subr.mxu0 0.0
    %156 = vmatpush2.msra.mxu0 0.0
    %157 = vmatprep.subr.mxu0 0.0
    %158 = vmatpush2.msra.mxu0 0.0
    %159 = vmatprep.subr.mxu0 0.0
    %160 = vmatpush2.msra.mxu0 0.0
    %161 = vmatprep.subr.mxu0 0.0
    %162 = vmatpush2.msra.mxu0 0.0
    %163 = vmatprep.subr.mxu0 0.0
    %164 = vmatpush2.msra.mxu0 0.0
    %165 = vmatprep.subr.mxu0 0.0
    %166 = vmatpush2.msra.mxu0 0.0
    %167 = vmatprep.subr.mxu0 0.0
    %168 = vmatpush2.msra.mxu0 0.0
    %169 = vmatprep.subr.mxu0 0.0
    %170 = vmatpush2.msra.mxu0 0.0
    %171 = vmatprep.subr.mxu0 0.0
    %172 = vmatpush2.msra.mxu0 0.0
    %173 = vmatprep.subr.mxu0 0.0
    %174 = vmatpush2.msra.mxu0 0.0
    %175 = vmatprep.subr.mxu0 0.0
    %176 = vmatpush2.msra.mxu0 0.0
    %177 = vmatprep.mubr.f32.mxu0 0.0
    %178 = vmatmul.mubr.f32.gmra.mxu0 %v90
    %v179 = vpop.f32.mrf.mxu0
    %v180 = vadd.f32 %v86, %v179
    %v181 = vpop.f32.mrf.mxu0
    %182 = vmatprep.mubr.f32.mxu0 0.0
    %183 = vmatmul.mubr.f32.gmra.mxu0 %v93
    %v184 = vpop.f32.mrf.mxu0
    %v185 = vadd.f32 %v86, %v184
    %v186 = vpop.f32.mrf.mxu0
    %187 = vmatprep.mubr.f32.mxu0 0.0
    %188 = vmatmul.mubr.f32.gmra.mxu0 %v96
    %v189 = vpop.f32.mrf.mxu0
    %v190 = vadd.f32 %v86, %v189
    %v191 = vpop.f32.mrf.mxu0
    %192 = vmatprep.mubr.f32.mxu0 0.0
    %193 = vmatmul.mubr.f32.gmra.mxu0 %v99
    %v194 = vpop.f32.mrf.mxu0
    %v195 = vadd.f32 %v86, %v194
    %v196 = vpop.f32.mrf.mxu0
    %197 = vmatprep.mubr.f32.mxu0 0.0
    %198 = vmatmul.mubr.f32.gmra.mxu0 %v102
    %v199 = vpop.f32.mrf.mxu0
    %v200 = vadd.f32 %v86, %v199
    %v201 = vpop.f32.mrf.mxu0
    %202 = vmatprep.mubr.f32.mxu0 0.0
    %203 = vmatmul.mubr.f32.gmra.mxu0 %v105
    %v204 = vpop.f32.mrf.mxu0
    %v205 = vadd.f32 %v86, %v204
    %v206 = vpop.f32.mrf.mxu0
    %207 = vmatprep.mubr.f32.mxu0 0.0
    %208 = vmatmul.mubr.f32.gmra.mxu0 %v108
    %v209 = vpop.f32.mrf.mxu0
    %v210 = vadd.f32 %v86, %v209
    %v211 = vpop.f32.mrf.mxu0
    %212 = vmatprep.mubr.f32.mxu0 0.0
    %213 = vmatmul.mubr.f32.gmra.mxu0 %v111
    %v214 = vpop.f32.mrf.mxu0
    %v215 = vadd.f32 %v86, %v214
    %v216 = vpop.f32.mrf.mxu0
    %217 = vdwg.mxu0
    %v218 = vmul.f32 %v180, 0.00390625
    %v219 = vmul.f32 %v185, 0.00390625
    %v220 = vmul.f32 %v190, 0.00390625
    %v221 = vmul.f32 %v195, 0.00390625
    %v222 = vmul.f32 %v200, 0.00390625
    %v223 = vmul.f32 %v205, 0.00390625
    %v224 = vmul.f32 %v210, 0.00390625
    %v225 = vmul.f32 %v215, 0.00390625
    %v226 = vround.ne.pseudo %v218
    %v227 = vround.ne.pseudo %v219
    %v228 = vround.ne.pseudo %v220
    %v229 = vround.ne.pseudo %v221
    %v230 = vround.ne.pseudo %v222
    %v231 = vround.ne.pseudo %v223
    %v232 = vround.ne.pseudo %v224
    %v233 = vround.ne.pseudo %v225
    %v234 = vmax.f32 %v226, -32768.0
    %v235 = vmax.f32 %v227, -32768.0
    %v236 = vmax.f32 %v228, -32768.0
    %v237 = vmax.f32 %v229, -32768.0
    %v238 = vmax.f32 %v230, -32768.0
    %v239 = vmax.f32 %v231, -32768.0
    %v240 = vmax.f32 %v232, -32768.0
    %v241 = vmax.f32 %v233, -32768.0
    %v242 = vmin.f32 %v234, 32767.0
    %v243 = vmin.f32 %v235, 32767.0
    %v244 = vmin.f32 %v236, 32767.0
    %v245 = vmin.f32 %v237, 32767.0
    %v246 = vmin.f32 %v238, 32767.0
    %v247 = vmin.f32 %v239, 32767.0
    %v248 = vmin.f32 %v240, 32767.0
    %v249 = vmin.f32 %v241, 32767.0
    %v250 = vmul.f32 %v242, 5.3947965e-06
    %v251 = vmul.f32 %v243, 5.3947965e-06
    %v252 = vmul.f32 %v244, 5.3947965e-06
    %v253 = vmul.f32 %v245, 5.3947965e-06
    %v254 = vmul.f32 %v246, 5.3947965e-06
    %v255 = vmul.f32 %v247, 5.3947965e-06
    %v256 = vmul.f32 %v248, 5.3947965e-06
    %v257 = vmul.f32 %v249, 5.3947965e-06
    %266 = vrot.lane.b32.xlu0 %v242, 96
    %v267 = vpop.permute.xlu0 %266
    %268 = vrot.lane.b32.xlu0 %v243, 96
    %v269 = vpop.permute.xlu0 %268
    %270 = vrot.lane.b32.xlu0 %v244, 96
    %v271 = vpop.permute.xlu0 %270
    %272 = vrot.lane.b32.xlu0 %v245, 96
    %v273 = vpop.permute.xlu0 %272
    %274 = vrot.lane.b32.xlu0 %v246, 96
    %v275 = vpop.permute.xlu0 %274
    %276 = vrot.lane.b32.xlu0 %v247, 96
    %v277 = vpop.permute.xlu0 %276
    %278 = vrot.lane.b32.xlu0 %v248, 96
    %v279 = vpop.permute.xlu0 %278
    %280 = vrot.lane.b32.xlu0 %v249, 96
    %v281 = vpop.permute.xlu0 %280
    %vm282 = vcmask 64512
    %v284 = vsel %vm282, %v250, 0
    %v286 = vsel %vm282, %v267, 0
    %v288 = vsel %vm282, %v269, 0
    %v290 = vsel %vm282, %v271, 0
    %v292 = vsel %vm282, %v273, 0
    %v294 = vsel %vm282, %v275, 0
    %v296 = vsel %vm282, %v277, 0
    %v298 = vsel %vm282, %v279, 0
    %v300 = vsel %vm282, %v281, 0
    %302 = vmatprep.subr.mxu0 0.0
    %303 = vmatpush1.xpose.msra.mxu0 0.0
    %304 = vmatprep.subr.mxu0 0.0
    %305 = vmatpush1.xpose.msra.mxu0 0.0
    %306 = vmatprep.subr.mxu0 0.0
    %307 = vmatpush1.xpose.msra.mxu0 0.0
    %308 = vmatprep.subr.mxu0 0.0
    %309 = vmatpush1.xpose.msra.mxu0 0.0
    %310 = vmatprep.subr.mxu0 0.0
    %311 = vmatpush1.xpose.msra.mxu0 0.0
    %312 = vmatprep.subr.mxu0 0.0
    %313 = vmatpush1.xpose.msra.mxu0 0.0
    %314 = vmatprep.subr.mxu0 0.0
    %315 = vmatpush1.xpose.msra.mxu0 0.0
    %316 = vmatprep.subr.mxu0 0.0
    %317 = vmatpush1.xpose.msra.mxu0 0.0
    %318 = vmatprep.subr.mxu0 0.0
    %319 = vmatpush1.xpose.msra.mxu0 %v300
    %320 = vmatprep.subr.mxu0 0.0
    %321 = vmatpush1.xpose.msra.mxu0 %v298
    %322 = vmatprep.subr.mxu0 0.0
    %323 = vmatpush1.xpose.msra.mxu0 %v296
    %324 = vmatprep.subr.mxu0 0.0
    %325 = vmatpush1.xpose.msra.mxu0 %v294
    %326 = vmatprep.subr.mxu0 0.0
    %327 = vmatpush1.xpose.msra.mxu0 %v292
    %328 = vmatprep.subr.mxu0 0.0
    %329 = vmatpush1.xpose.msra.mxu0 %v290
    %330 = vmatprep.subr.mxu0 0.0
    %331 = vmatpush1.xpose.msra.mxu0 %v288
    %332 = vmatprep.subr.mxu0 0.0
    %333 = vmatpush1.xpose.msra.mxu0 %v286
    %334 = vmatprep.subr.mxu0 0.0
    %335 = vmatpush2.xpose.msra.mxu0 0.0
    %336 = vmatprep.subr.mxu0 0.0
    %337 = vmatpush2.xpose.msra.mxu0 0.0
    %338 = vmatprep.subr.mxu0 0.0
    %339 = vmatpush2.xpose.msra.mxu0 0.0
    %340 = vmatprep.subr.mxu0 0.0
    %341 = vmatpush2.xpose.msra.mxu0 0.0
    %342 = vmatprep.subr.mxu0 0.0
    %343 = vmatpush2.xpose.msra.mxu0 0.0
    %344 = vmatprep.subr.mxu0 0.0
    %345 = vmatpush2.xpose.msra.mxu0 0.0
    %346 = vmatprep.subr.mxu0 0.0
    %347 = vmatpush2.xpose.msra.mxu0 0.0
    %348 = vmatprep.subr.mxu0 0.0
    %349 = vmatpush2.xpose.msra.mxu0 0.0
    %350 = vmatprep.subr.mxu0 0.0
    %351 = vmatpush2.xpose.msra.mxu0 0.0
    %352 = vmatprep.subr.mxu0 0.0
    %353 = vmatpush2.xpose.msra.mxu0 0.0
    %354 = vmatprep.subr.mxu0 0.0
    %355 = vmatpush2.xpose.msra.mxu0 0.0
    %356 = vmatprep.subr.mxu0 0.0
    %357 = vmatpush2.xpose.msra.mxu0 0.0
    %358 = vmatprep.subr.mxu0 0.0
    %359 = vmatpush2.xpose.msra.mxu0 0.0
    %360 = vmatprep.subr.mxu0 0.0
    %361 = vmatpush2.xpose.msra.mxu0 0.0
    %362 = vmatprep.subr.mxu0 0.0
    %363 = vmatpush2.xpose.msra.mxu0 0.0
    %364 = vmatprep.subr.mxu0 0.0
    %365 = vmatpush2.xpose.msra.mxu0 0.0
    %366 = vmatprep.mubr.f32.mxu0 0.0
    %367 = vmatmul.mubr.f32.gmra.mxu0 %v284
    %v368 = vpop.f32.mrf.mxu0
    %v369 = vadd.f32 0.0, %v368
    %v370 = vpop.f32.mrf.mxu0
    %371 = vdwg.mxu0
    %vm372 = vcmask 516096
    %v373 = vsel %vm372, %v369, -inf
    %374 = vmax.xlane.f32.xlu0 %v373
    %v375 = vpop.xlane.xlu0 %374
    %v376 = vsub.f32 %v369, %v375
    %v377 = vmul.f32 %v376, 1.442695
    %v378 = vpow.pop %v377
    %v379 = vsel %vm372, %v378, 0.0
    %380 = vadd.xlane.f32.xlu0 %v379
    %v381 = vpop.xlane.xlu0 %380
    %v382 = vrcp.pop %v381
    %v383 = vmul.f32 %v378, %v382
    %v384 = vadd.f32 %v383, 0.0
    %385 = vrot.lane.b32.xlu0 %v250, 120
    %v386 = vpop.permute.xlu0 %385
    %387 = vrot.lane.b32.xlu0 %v242, 88
    %v388 = vpop.permute.xlu0 %387
    %389 = vrot.lane.b32.xlu0 %v243, 88
    %v390 = vpop.permute.xlu0 %389
    %391 = vrot.lane.b32.xlu0 %v244, 88
    %v392 = vpop.permute.xlu0 %391
    %393 = vrot.lane.b32.xlu0 %v245, 88
    %v394 = vpop.permute.xlu0 %393
    %395 = vrot.lane.b32.xlu0 %v246, 88
    %v396 = vpop.permute.xlu0 %395
    %397 = vrot.lane.b32.xlu0 %v247, 88
    %v398 = vpop.permute.xlu0 %397
    %399 = vrot.lane.b32.xlu0 %v248, 88
    %v400 = vpop.permute.xlu0 %399
    %401 = vrot.lane.b32.xlu0 %v249, 88
    %v402 = vpop.permute.xlu0 %401
    %v403 = vsel %vm282, %v386, 0
    %v405 = vsel %vm282, %v388, 0
    %v407 = vsel %vm282, %v390, 0
    %v409 = vsel %vm282, %v392, 0
    %v411 = vsel %vm282, %v394, 0
    %v413 = vsel %vm282, %v396, 0
    %v415 = vsel %vm282, %v398, 0
    %v417 = vsel %vm282, %v400, 0
    %v419 = vsel %vm282, %v402, 0
    %421 = vmatprep.subr.mxu0 0.0
    %422 = vmatpush1.xpose.msra.mxu0 0.0
    %423 = vmatprep.subr.mxu0 0.0
    %424 = vmatpush1.xpose.msra.mxu0 0.0
    %425 = vmatprep.subr.mxu0 0.0
    %426 = vmatpush1.xpose.msra.mxu0 0.0
    %427 = vmatprep.subr.mxu0 0.0
    %428 = vmatpush1.xpose.msra.mxu0 0.0
    %429 = vmatprep.subr.mxu0 0.0
    %430 = vmatpush1.xpose.msra.mxu0 0.0
    %431 = vmatprep.subr.mxu0 0.0
    %432 = vmatpush1.xpose.msra.mxu0 0.0
    %433 = vmatprep.subr.mxu0 0.0
    %434 = vmatpush1.xpose.msra.mxu0 0.0
    %435 = vmatprep.subr.mxu0 0.0
    %436 = vmatpush1.xpose.msra.mxu0 0.0
    %437 = vmatprep.subr.mxu0 0.0
    %438 = vmatpush1.xpose.msra.mxu0 %v419
    %439 = vmatprep.subr.mxu0 0.0
    %440 = vmatpush1.xpose.msra.mxu0 %v417
    %441 = vmatprep.subr.mxu0 0.0
    %442 = vmatpush1.xpose.msra.mxu0 %v415
    %443 = vmatprep.subr.mxu0 0.0
    %444 = vmatpush1.xpose.msra.mxu0 %v413
    %445 = vmatprep.subr.mxu0 0.0
    %446 = vmatpush1.xpose.msra.mxu0 %v411
    %447 = vmatprep.subr.mxu0 0.0
    %448 = vmatpush1.xpose.msra.mxu0 %v409
    %449 = vmatprep.subr.mxu0 0.0
    %450 = vmatpush1.xpose.msra.mxu0 %v407
    %451 = vmatprep.subr.mxu0 0.0
    %452 = vmatpush1.xpose.msra.mxu0 %v405
    %453 = vmatprep.subr.mxu0 0.0
    %454 = vmatpush2.xpose.msra.mxu0 0.0
    %455 = vmatprep.subr.mxu0 0.0
    %456 = vmatpush2.xpose.msra.mxu0 0.0
    %457 = vmatprep.subr.mxu0 0.0
    %458 = vmatpush2.xpose.msra.mxu0 0.0
    %459 = vmatprep.subr.mxu0 0.0
    %460 = vmatpush2.xpose.msra.mxu0 0.0
    %461 = vmatprep.subr.mxu0 0.0
    %462 = vmatpush2.xpose.msra.mxu0 0.0
    %463 = vmatprep.subr.mxu0 0.0
    %464 = vmatpush2.xpose.msra.mxu0 0.0
    %465 = vmatprep.subr.mxu0 0.0
    %466 = vmatpush2.xpose.msra.mxu0 0.0
    %467 = vmatprep.subr.mxu0 0.0
    %468 = vmatpush2.xpose.msra.mxu0 0.0
    %469 = vmatprep.subr.mxu0 0.0
    %470 = vmatpush2.xpose.msra.mxu0 0.0
    %471 = vmatprep.subr.mxu0 0.0
    %472 = vmatpush2.xpose.msra.mxu0 0.0
    %473 = vmatprep.subr.mxu0 0.0
    %474 = vmatpush2.xpose.msra.mxu0 0.0
    %475 = vmatprep.subr.mxu0 0.0
    %476 = vmatpush2.xpose.msra.mxu0 0.0
    %477 = vmatprep.subr.mxu0 0.0
    %478 = vmatpush2.xpose.msra.mxu0 0.0
    %479 = vmatprep.subr.mxu0 0.0
    %480 = vmatpush2.xpose.msra.mxu0 0.0
    %481 = vmatprep.subr.mxu0 0.0
    %482 = vmatpush2.xpose.msra.mxu0 0.0
    %483 = vmatprep.subr.mxu0 0.0
    %484 = vmatpush2.xpose.msra.mxu0 0.0
    %485 = vmatprep.mubr.f32.mxu0 0.0
    %486 = vmatmul.mubr.f32.gmra.mxu0 %v403
    %v487 = vpop.f32.mrf.mxu0
    %v488 = vadd.f32 0.0, %v487
    %v489 = vpop.f32.mrf.mxu0
    %490 = vdwg.mxu0
    %v491 = vsel %vm372, %v488, -inf
    %492 = vmax.xlane.f32.xlu0 %v491
    %v493 = vpop.xlane.xlu0 %492
    %v494 = vsub.f32 %v488, %v493
    %v495 = vmul.f32 %v494, 1.442695
    %v496 = vpow.pop %v495
    %v497 = vsel %vm372, %v496, 0.0
    %498 = vadd.xlane.f32.xlu0 %v497
    %v499 = vpop.xlane.xlu0 %498
    %v500 = vrcp.pop %v499
    %v501 = vmul.f32 %v496, %v500
    %v502 = vadd.f32 %v384, %v501
    %503 = vrot.lane.b32.xlu0 %v250, 112
    %v504 = vpop.permute.xlu0 %503
    %505 = vrot.lane.b32.xlu0 %v242, 80
    %v506 = vpop.permute.xlu0 %505
    %507 = vrot.lane.b32.xlu0 %v243, 80
    %v508 = vpop.permute.xlu0 %507
    %509 = vrot.lane.b32.xlu0 %v244, 80
    %v510 = vpop.permute.xlu0 %509
    %511 = vrot.lane.b32.xlu0 %v245, 80
    %v512 = vpop.permute.xlu0 %511
    %513 = vrot.lane.b32.xlu0 %v246, 80
    %v514 = vpop.permute.xlu0 %513
    %515 = vrot.lane.b32.xlu0 %v247, 80
    %v516 = vpop.permute.xlu0 %515
    %517 = vrot.lane.b32.xlu0 %v248, 80
    %v518 = vpop.permute.xlu0 %517
    %519 = vrot.lane.b32.xlu0 %v249, 80
    %v520 = vpop.permute.xlu0 %519
    %v521 = vsel %vm282, %v504, 0
    %v523 = vsel %vm282, %v506, 0
    %v525 = vsel %vm282, %v508, 0
    %v527 = vsel %vm282, %v510, 0
    %v529 = vsel %vm282, %v512, 0
    %v531 = vsel %vm282, %v514, 0
    %v533 = vsel %vm282, %v516, 0
    %v535 = vsel %vm282, %v518, 0
    %v537 = vsel %vm282, %v520, 0
    %539 = vmatprep.subr.mxu0 0.0
    %540 = vmatpush1.xpose.msra.mxu0 0.0
    %541 = vmatprep.subr.mxu0 0.0
    %542 = vmatpush1.xpose.msra.mxu0 0.0
    %543 = vmatprep.subr.mxu0 0.0
    %544 = vmatpush1.xpose.msra.mxu0 0.0
    %545 = vmatprep.subr.mxu0 0.0
    %546 = vmatpush1.xpose.msra.mxu0 0.0
    %547 = vmatprep.subr.mxu0 0.0
    %548 = vmatpush1.xpose.msra.mxu0 0.0
    %549 = vmatprep.subr.mxu0 0.0
    %550 = vmatpush1.xpose.msra.mxu0 0.0
    %551 = vmatprep.subr.mxu0 0.0
    %552 = vmatpush1.xpose.msra.mxu0 0.0
    %553 = vmatprep.subr.mxu0 0.0
    %554 = vmatpush1.xpose.msra.mxu0 0.0
    %555 = vmatprep.subr.mxu0 0.0
    %556 = vmatpush1.xpose.msra.mxu0 %v537
    %557 = vmatprep.subr.mxu0 0.0
    %558 = vmatpush1.xpose.msra.mxu0 %v535
    %559 = vmatprep.subr.mxu0 0.0
    %560 = vmatpush1.xpose.msra.mxu0 %v533
    %561 = vmatprep.subr.mxu0 0.0
    %562 = vmatpush1.xpose.msra.mxu0 %v531
    %563 = vmatprep.subr.mxu0 0.0
    %564 = vmatpush1.xpose.msra.mxu0 %v529
    %565 = vmatprep.subr.mxu0 0.0
    %566 = vmatpush1.xpose.msra.mxu0 %v527
    %567 = vmatprep.subr.mxu0 0.0
    %568 = vmatpush1.xpose.msra.mxu0 %v525
    %569 = vmatprep.subr.mxu0 0.0
    %570 = vmatpush1.xpose.msra.mxu0 %v523
    %571 = vmatprep.subr.mxu0 0.0
    %572 = vmatpush2.xpose.msra.mxu0 0.0
    %573 = vmatprep.subr.mxu0 0.0
    %574 = vmatpush2.xpose.msra.mxu0 0.0
    %575 = vmatprep.subr.mxu0 0.0
    %576 = vmatpush2.xpose.msra.mxu0 0.0
    %577 = vmatprep.subr.mxu0 0.0
    %578 = vmatpush2.xpose.msra.mxu0 0.0
    %579 = vmatprep.subr.mxu0 0.0
    %580 = vmatpush2.xpose.msra.mxu0 0.0
    %581 = vmatprep.subr.mxu0 0.0
    %582 = vmatpush2.xpose.msra.mxu0 0.0
    %583 = vmatprep.subr.mxu0 0.0
    %584 = vmatpush2.xpose.msra.mxu0 0.0
    %585 = vmatprep.subr.mxu0 0.0
    %586 = vmatpush2.xpose.msra.mxu0 0.0
    %587 = vmatprep.subr.mxu0 0.0
    %588 = vmatpush2.xpose.msra.mxu0 0.0
    %589 = vmatprep.subr.mxu0 0.0
    %590 = vmatpush2.xpose.msra.mxu0 0.0
    %591 = vmatprep.subr.mxu0 0.0
    %592 = vmatpush2.xpose.msra.mxu0 0.0
    %593 = vmatprep.subr.mxu0 0.0
    %594 = vmatpush2.xpose.msra.mxu0 0.0
    %595 = vmatprep.subr.mxu0 0.0
    %596 = vmatpush2.xpose.msra.mxu0 0.0
    %597 = vmatprep.subr.mxu0 0.0
    %598 = vmatpush2.xpose.msra.mxu0 0.0
    %599 = vmatprep.subr.mxu0 0.0
    %600 = vmatpush2.xpose.msra.mxu0 0.0
    %601 = vmatprep.subr.mxu0 0.0
    %602 = vmatpush2.xpose.msra.mxu0 0.0
    %603 = vmatprep.mubr.f32.mxu0 0.0
    %604 = vmatmul.mubr.f32.gmra.mxu0 %v521
    %v605 = vpop.f32.mrf.mxu0
    %v606 = vadd.f32 0.0, %v605
    %v607 = vpop.f32.mrf.mxu0
    %608 = vdwg.mxu0
    %v609 = vsel %vm372, %v606, -inf
    %610 = vmax.xlane.f32.xlu0 %v609
    %v611 = vpop.xlane.xlu0 %610
    %v612 = vsub.f32 %v606, %v611
    %v613 = vmul.f32 %v612, 1.442695
    %v614 = vpow.pop %v613
    %v615 = vsel %vm372, %v614, 0.0
    %616 = vadd.xlane.f32.xlu0 %v615
    %v617 = vpop.xlane.xlu0 %616
    %v618 = vrcp.pop %v617
    %v619 = vmul.f32 %v614, %v618
    %v620 = vadd.f32 %v502, %v619
    %621 = vrot.lane.b32.xlu0 %v250, 104
    %v622 = vpop.permute.xlu0 %621
    %623 = vrot.lane.b32.xlu0 %v242, 72
    %v624 = vpop.permute.xlu0 %623
    %625 = vrot.lane.b32.xlu0 %v243, 72
    %v626 = vpop.permute.xlu0 %625
    %627 = vrot.lane.b32.xlu0 %v244, 72
    %v628 = vpop.permute.xlu0 %627
    %629 = vrot.lane.b32.xlu0 %v245, 72
    %v630 = vpop.permute.xlu0 %629
    %631 = vrot.lane.b32.xlu0 %v246, 72
    %v632 = vpop.permute.xlu0 %631
    %633 = vrot.lane.b32.xlu0 %v247, 72
    %v634 = vpop.permute.xlu0 %633
    %635 = vrot.lane.b32.xlu0 %v248, 72
    %v636 = vpop.permute.xlu0 %635
    %637 = vrot.lane.b32.xlu0 %v249, 72
    %v638 = vpop.permute.xlu0 %637
    %v639 = vsel %vm282, %v622, 0
    %v641 = vsel %vm282, %v624, 0
    %v643 = vsel %vm282, %v626, 0
    %v645 = vsel %vm282, %v628, 0
    %v647 = vsel %vm282, %v630, 0
    %v649 = vsel %vm282, %v632, 0
    %v651 = vsel %vm282, %v634, 0
    %v653 = vsel %vm282, %v636, 0
    %v655 = vsel %vm282, %v638, 0
    %657 = vmatprep.subr.mxu0 0.0
    %658 = vmatpush1.xpose.msra.mxu0 0.0
    %659 = vmatprep.subr.mxu0 0.0
    %660 = vmatpush1.xpose.msra.mxu0 0.0
    %661 = vmatprep.subr.mxu0 0.0
    %662 = vmatpush1.xpose.msra.mxu0 0.0
    %663 = vmatprep.subr.mxu0 0.0
    %664 = vmatpush1.xpose.msra.mxu0 0.0
    %665 = vmatprep.subr.mxu0 0.0
    %666 = vmatpush1.xpose.msra.mxu0 0.0
    %667 = vmatprep.subr.mxu0 0.0
    %668 = vmatpush1.xpose.msra.mxu0 0.0
    %669 = vmatprep.subr.mxu0 0.0
    %670 = vmatpush1.xpose.msra.mxu0 0.0
    %671 = vmatprep.subr.mxu0 0.0
    %672 = vmatpush1.xpose.msra.mxu0 0.0
    %673 = vmatprep.subr.mxu0 0.0
    %674 = vmatpush1.xpose.msra.mxu0 %v655
    %675 = vmatprep.subr.mxu0 0.0
    %676 = vmatpush1.xpose.msra.mxu0 %v653
    %677 = vmatprep.subr.mxu0 0.0
    %678 = vmatpush1.xpose.msra.mxu0 %v651
    %679 = vmatprep.subr.mxu0 0.0
    %680 = vmatpush1.xpose.msra.mxu0 %v649
    %681 = vmatprep.subr.mxu0 0.0
    %682 = vmatpush1.xpose.msra.mxu0 %v647
    %683 = vmatprep.subr.mxu0 0.0
    %684 = vmatpush1.xpose.msra.mxu0 %v645
    %685 = vmatprep.subr.mxu0 0.0
    %686 = vmatpush1.xpose.msra.mxu0 %v643
    %687 = vmatprep.subr.mxu0 0.0
    %688 = vmatpush1.xpose.msra.mxu0 %v641
    %689 = vmatprep.subr.mxu0 0.0
    %690 = vmatpush2.xpose.msra.mxu0 0.0
    %691 = vmatprep.subr.mxu0 0.0
    %692 = vmatpush2.xpose.msra.mxu0 0.0
    %693 = vmatprep.subr.mxu0 0.0
    %694 = vmatpush2.xpose.msra.mxu0 0.0
    %695 = vmatprep.subr.mxu0 0.0
    %696 = vmatpush2.xpose.msra.mxu0 0.0
    %697 = vmatprep.subr.mxu0 0.0
    %698 = vmatpush2.xpose.msra.mxu0 0.0
    %699 = vmatprep.subr.mxu0 0.0
    %700 = vmatpush2.xpose.msra.mxu0 0.0
    %701 = vmatprep.subr.mxu0 0.0
    %702 = vmatpush2.xpose.msra.mxu0 0.0
    %703 = vmatprep.subr.mxu0 0.0
    %704 = vmatpush2.xpose.msra.mxu0 0.0
    %705 = vmatprep.subr.mxu0 0.0
    %706 = vmatpush2.xpose.msra.mxu0 0.0
    %707 = vmatprep.subr.mxu0 0.0
    %708 = vmatpush2.xpose.msra.mxu0 0.0
    %709 = vmatprep.subr.mxu0 0.0
    %710 = vmatpush2.xpose.msra.mxu0 0.0
    %711 = vmatprep.subr.mxu0 0.0
    %712 = vmatpush2.xpose.msra.mxu0 0.0
    %713 = vmatprep.subr.mxu0 0.0
    %714 = vmatpush2.xpose.msra.mxu0 0.0
    %715 = vmatprep.subr.mxu0 0.0
    %716 = vmatpush2.xpose.msra.mxu0 0.0
    %717 = vmatprep.subr.mxu0 0.0
    %718 = vmatpush2.xpose.msra.mxu0 0.0
    %719 = vmatprep.subr.mxu0 0.0
    %720 = vmatpush2.xpose.msra.mxu0 0.0
    %721 = vmatprep.mubr.f32.mxu0 0.0
    %722 = vmatmul.mubr.f32.gmra.mxu0 %v639
    %v723 = vpop.f32.mrf.mxu0
    %v724 = vadd.f32 0.0, %v723
    %v725 = vpop.f32.mrf.mxu0
    %726 = vdwg.mxu0
    %v727 = vsel %vm372, %v724, -inf
    %728 = vmax.xlane.f32.xlu0 %v727
    %v729 = vpop.xlane.xlu0 %728
    %v730 = vsub.f32 %v724, %v729
    %v731 = vmul.f32 %v730, 1.442695
    %v732 = vpow.pop %v731
    %v733 = vsel %vm372, %v732, 0.0
    %734 = vadd.xlane.f32.xlu0 %v733
    %v735 = vpop.xlane.xlu0 %734
    %v736 = vrcp.pop %v735
    %v737 = vmul.f32 %v732, %v736
    %v738 = vadd.f32 %v620, %v737
    %v739 = vlaneseq
    %v740 = vshrl.u32 %v739, 7
    %v741 = vadd.s32 %v740, 8
    %v742 = vadd.s32 %v740, 16
    %v743 = vadd.s32 %v740, 24
    %v744 = vadd.s32 %v740, 32
    %v745 = vadd.s32 %v740, 40
    %v746 = vadd.s32 %v740, 48
    %v747 = vadd.s32 %v740, 56
    %v748 = vlaneseq
    %v749 = vand.u32 %v748, 127
    %vm750 = vcmp.eq.s32.totalorder %v740, %v749
    %vm751 = vcmp.eq.s32.totalorder %v741, %v749
    %vm752 = vcmp.eq.s32.totalorder %v742, %v749
    %vm753 = vcmp.eq.s32.totalorder %v743, %v749
    %vm754 = vcmp.eq.s32.totalorder %v744, %v749
    %vm755 = vcmp.eq.s32.totalorder %v745, %v749
    %vm756 = vcmp.eq.s32.totalorder %v746, %v749
    %vm757 = vcmp.eq.s32.totalorder %v747, %v749
    %v758 = vlaneseq
    %v759 = vshrl.u32 %v758, 7
    %v760 = vsub.s32 0, %v759
    %v761 = vrot.slane %v738, %v760
    %v762 = vsel %vm750, %v761, 0.0
    %v763 = vsel %vm751, %v761, 0.0
    %v764 = vsel %vm752, %v761, 0.0
    %v765 = vsel %vm753, %v761, 0.0
    %v766 = vsel %vm754, %v761, 0.0
    %v767 = vsel %vm755, %v761, 0.0
    %v768 = vsel %vm756, %v761, 0.0
    %v769 = vsel %vm757, %v761, 0.0
    %vm770 = vcmask 523264
    %v771 = vsel %vm770, %v762, 0.0
    %772 = vadd.xlane.f32.xlu0 %v771
    %v773 = vpop.xlane.xlu0 %772
    %v774 = vsel %vm770, %v763, 0.0
    %775 = vadd.xlane.f32.xlu0 %v774
    %v776 = vpop.xlane.xlu0 %775
    %v777 = vsel %vm770, %v764, 0.0
    %778 = vadd.xlane.f32.xlu0 %v777
    %v779 = vpop.xlane.xlu0 %778
    %v780 = vsel %vm770, %v765, 0.0
    %781 = vadd.xlane.f32.xlu0 %v780
    %v782 = vpop.xlane.xlu0 %781
    %v783 = vsel %vm770, %v766, 0.0
    %784 = vadd.xlane.f32.xlu0 %v783
    %v785 = vpop.xlane.xlu0 %784
    %v786 = vsel %vm770, %v767, 0.0
    %787 = vadd.xlane.f32.xlu0 %v786
    %v788 = vpop.xlane.xlu0 %787
    %v789 = vsel %vm770, %v768, 0.0
    %790 = vadd.xlane.f32.xlu0 %v789
    %v791 = vpop.xlane.xlu0 %790
    %v792 = vsel %vm770, %v769, 0.0
    %793 = vadd.xlane.f32.xlu0 %v792
    %v794 = vpop.xlane.xlu0 %793
    %vm795 = vcmp.gt.f32.partialorder %v761, %v773
    %vm796 = vcmp.gt.f32.partialorder %v761, %v776
    %vm797 = vcmp.gt.f32.partialorder %v761, %v779
    %vm798 = vcmp.gt.f32.partialorder %v761, %v782
    %vm799 = vcmp.gt.f32.partialorder %v761, %v785
    %vm800 = vcmp.gt.f32.partialorder %v761, %v788
    %vm801 = vcmp.gt.f32.partialorder %v761, %v791
    %vm802 = vcmp.gt.f32.partialorder %v761, %v794
    %vm803 = vcmp.eq.f32.partialorder %v761, %v773
    %vm804 = vcmp.eq.f32.partialorder %v761, %v776
    %vm805 = vcmp.eq.f32.partialorder %v761, %v779
    %vm806 = vcmp.eq.f32.partialorder %v761, %v782
    %vm807 = vcmp.eq.f32.partialorder %v761, %v785
    %vm808 = vcmp.eq.f32.partialorder %v761, %v788
    %vm809 = vcmp.eq.f32.partialorder %v761, %v791
    %vm810 = vcmp.eq.f32.partialorder %v761, %v794
    %vm811 = vcmp.lt.s32.totalorder %v749, %v740
    %vm812 = vcmp.lt.s32.totalorder %v749, %v741
    %vm813 = vcmp.lt.s32.totalorder %v749, %v742
    %vm814 = vcmp.lt.s32.totalorder %v749, %v743
    %vm815 = vcmp.lt.s32.totalorder %v749, %v744
    %vm816 = vcmp.lt.s32.totalorder %v749, %v745
    %vm817 = vcmp.lt.s32.totalorder %v749, %v746
    %vm818 = vcmp.lt.s32.totalorder %v749, %v747
    %vm819 = vmand %vm803, %vm811
    %vm820 = vmand %vm804, %vm812
    %vm821 = vmand %vm805, %vm813
    %vm822 = vmand %vm806, %vm814
    %vm823 = vmand %vm807, %vm815
    %vm824 = vmand %vm808, %vm816
    %vm825 = vmand %vm809, %vm817
    %vm826 = vmand %vm810, %vm818
    %vm827 = vmor %vm795, %vm819
    %vm828 = vmor %vm796, %vm820
    %vm829 = vmor %vm797, %vm821
    %vm830 = vmor %vm798, %vm822
    %vm831 = vmor %vm799, %vm823
    %vm832 = vmor %vm800, %vm824
    %vm833 = vmor %vm801, %vm825
    %vm834 = vmor %vm802, %vm826
    %vm835 = vcmp.ge.s32.totalorder %v749, 1
    %vm836 = vmand %vm827, %vm835
    %vm837 = vmand %vm828, %vm835
    %vm838 = vmand %vm829, %vm835
    %vm839 = vmand %vm830, %vm835
    %vm840 = vmand %vm831, %vm835
    %vm841 = vmand %vm832, %vm835
    %vm842 = vmand %vm833, %vm835
    %vm843 = vmand %vm834, %vm835
    %v844 = vsel %vm836, %v761, 0.0
    %v845 = vsel %vm837, %v761, 0.0
    %v846 = vsel %vm838, %v761, 0.0
    %v847 = vsel %vm839, %v761, 0.0
    %v848 = vsel %vm840, %v761, 0.0
    %v849 = vsel %vm841, %v761, 0.0
    %v850 = vsel %vm842, %v761, 0.0
    %v851 = vsel %vm843, %v761, 0.0
    %v852 = vsel %vm770, %v844, 0.0
    %853 = vadd.xlane.f32.xlu0 %v852
    %v854 = vpop.xlane.xlu0 %853
    %v855 = vsel %vm770, %v845, 0.0
    %856 = vadd.xlane.f32.xlu0 %v855
    %v857 = vpop.xlane.xlu0 %856
    %v858 = vsel %vm770, %v846, 0.0
    %859 = vadd.xlane.f32.xlu0 %v858
    %v860 = vpop.xlane.xlu0 %859
    %v861 = vsel %vm770, %v847, 0.0
    %862 = vadd.xlane.f32.xlu0 %v861
    %v863 = vpop.xlane.xlu0 %862
    %v864 = vsel %vm770, %v848, 0.0
    %865 = vadd.xlane.f32.xlu0 %v864
    %v866 = vpop.xlane.xlu0 %865
    %v867 = vsel %vm770, %v849, 0.0
    %868 = vadd.xlane.f32.xlu0 %v867
    %v869 = vpop.xlane.xlu0 %868
    %v870 = vsel %vm770, %v850, 0.0
    %871 = vadd.xlane.f32.xlu0 %v870
    %v872 = vpop.xlane.xlu0 %871
    %v873 = vsel %vm770, %v851, 0.0
    %874 = vadd.xlane.f32.xlu0 %v873
    %v875 = vpop.xlane.xlu0 %874
    %v876 = vsub.f32 16.0, %v738
    %v877 = vlaneseq
    %v878 = vshrl.u32 %v877, 7
    %v879 = vsub.s32 0, %v878
    %v880 = vrot.slane %v876, %v879
    %vm881 = vcmp.lt.f32.partialorder %v854, %v880
    %vm882 = vcmp.lt.f32.partialorder %v857, %v880
    %vm883 = vcmp.lt.f32.partialorder %v860, %v880
    %vm884 = vcmp.lt.f32.partialorder %v863, %v880
    %vm885 = vcmp.lt.f32.partialorder %v866, %v880
    %vm886 = vcmp.lt.f32.partialorder %v869, %v880
    %vm887 = vcmp.lt.f32.partialorder %v872, %v880
    %vm888 = vcmp.lt.f32.partialorder %v875, %v880
    %vm889 = vcmp.eq.s32.totalorder %v740, 0
    %vm890 = vcmp.eq.s32.totalorder %v741, 0
    %vm891 = vcmp.eq.s32.totalorder %v742, 0
    %vm892 = vcmp.eq.s32.totalorder %v743, 0
    %vm893 = vcmp.eq.s32.totalorder %v744, 0
    %vm894 = vcmp.eq.s32.totalorder %v745, 0
    %vm895 = vcmp.eq.s32.totalorder %v746, 0
    %vm896 = vcmp.eq.s32.totalorder %v747, 0
    %vm897 = vmor %vm881, %vm889
    %vm898 = vmor %vm882, %vm890
    %vm899 = vmor %vm883, %vm891
    %vm900 = vmor %vm884, %vm892
    %vm901 = vmor %vm885, %vm893
    %vm902 = vmor %vm886, %vm894
    %vm903 = vmor %vm887, %vm895
    %vm904 = vmor %vm888, %vm896
    %v905 = vsel %vm897, 256.0, 0.0
    %v906 = vsel %vm898, 256.0, 0.0
    %v907 = vsel %vm899, 256.0, 0.0
    %v908 = vsel %vm900, 256.0, 0.0
    %v909 = vsel %vm901, 256.0, 0.0
    %v910 = vsel %vm902, 256.0, 0.0
    %v911 = vsel %vm903, 256.0, 0.0
    %v912 = vsel %vm904, 256.0, 0.0
    %v914 = vsel %vm282, %v251, 0
    %v917 = vsel %vm282, %v252, 0
    %v920 = vsel %vm282, %v253, 0
    %v923 = vsel %vm282, %v254, 0
    %v926 = vsel %vm282, %v255, 0
    %v929 = vsel %vm282, %v256, 0
    %v932 = vsel %vm282, %v257, 0
    %934 = vmatprep.subr.mxu0 0.0
    %935 = vmatpush1.xpose.msra.mxu0 0.0
    %936 = vmatprep.subr.mxu0 0.0
    %937 = vmatpush1.xpose.msra.mxu0 0.0
    %938 = vmatprep.subr.mxu0 0.0
    %939 = vmatpush1.xpose.msra.mxu0 0.0
    %940 = vmatprep.subr.mxu0 0.0
    %941 = vmatpush1.xpose.msra.mxu0 0.0
    %942 = vmatprep.subr.mxu0 0.0
    %943 = vmatpush1.xpose.msra.mxu0 0.0
    %944 = vmatprep.subr.mxu0 0.0
    %945 = vmatpush1.xpose.msra.mxu0 0.0
    %946 = vmatprep.subr.mxu0 0.0
    %947 = vmatpush1.xpose.msra.mxu0 0.0
    %948 = vmatprep.subr.mxu0 0.0
    %949 = vmatpush1.xpose.msra.mxu0 0.0
    %950 = vmatprep.subr.mxu0 0.0
    %951 = vmatpush1.xpose.msra.mxu0 %v300
    %952 = vmatprep.subr.mxu0 0.0
    %953 = vmatpush1.xpose.msra.mxu0 %v298
    %954 = vmatprep.subr.mxu0 0.0
    %955 = vmatpush1.xpose.msra.mxu0 %v296
    %956 = vmatprep.subr.mxu0 0.0
    %957 = vmatpush1.xpose.msra.mxu0 %v294
    %958 = vmatprep.subr.mxu0 0.0
    %959 = vmatpush1.xpose.msra.mxu0 %v292
    %960 = vmatprep.subr.mxu0 0.0
    %961 = vmatpush1.xpose.msra.mxu0 %v290
    %962 = vmatprep.subr.mxu0 0.0
    %963 = vmatpush1.xpose.msra.mxu0 %v288
    %964 = vmatprep.subr.mxu0 0.0
    %965 = vmatpush1.xpose.msra.mxu0 %v286
    %966 = vmatprep.subr.mxu0 0.0
    %967 = vmatpush2.xpose.msra.mxu0 0.0
    %968 = vmatprep.subr.mxu0 0.0
    %969 = vmatpush2.xpose.msra.mxu0 0.0
    %970 = vmatprep.subr.mxu0 0.0
    %971 = vmatpush2.xpose.msra.mxu0 0.0
    %972 = vmatprep.subr.mxu0 0.0
    %973 = vmatpush2.xpose.msra.mxu0 0.0
    %974 = vmatprep.subr.mxu0 0.0
    %975 = vmatpush2.xpose.msra.mxu0 0.0
    %976 = vmatprep.subr.mxu0 0.0
    %977 = vmatpush2.xpose.msra.mxu0 0.0
    %978 = vmatprep.subr.mxu0 0.0
    %979 = vmatpush2.xpose.msra.mxu0 0.0
    %980 = vmatprep.subr.mxu0 0.0
    %981 = vmatpush2.xpose.msra.mxu0 0.0
    %982 = vmatprep.subr.mxu0 0.0
    %983 = vmatpush2.xpose.msra.mxu0 0.0
    %984 = vmatprep.subr.mxu0 0.0
    %985 = vmatpush2.xpose.msra.mxu0 0.0
    %986 = vmatprep.subr.mxu0 0.0
    %987 = vmatpush2.xpose.msra.mxu0 0.0
    %988 = vmatprep.subr.mxu0 0.0
    %989 = vmatpush2.xpose.msra.mxu0 0.0
    %990 = vmatprep.subr.mxu0 0.0
    %991 = vmatpush2.xpose.msra.mxu0 0.0
    %992 = vmatprep.subr.mxu0 0.0
    %993 = vmatpush2.xpose.msra.mxu0 0.0
    %994 = vmatprep.subr.mxu0 0.0
    %995 = vmatpush2.xpose.msra.mxu0 0.0
    %996 = vmatprep.subr.mxu0 0.0
    %997 = vmatpush2.xpose.msra.mxu0 0.0
    %998 = vmatprep.mubr.f32.mxu0 0.0
    %999 = vmatmul.mubr.f32.gmra.mxu0 %v284
    %v1000 = vpop.f32.mrf.mxu0
    %v1001 = vadd.f32 0.0, %v1000
    %v1002 = vpop.f32.mrf.mxu0
    %1003 = vmatprep.mubr.f32.mxu0 0.0
    %1004 = vmatmul.mubr.f32.gmra.mxu0 %v914
    %v1005 = vpop.f32.mrf.mxu0
    %v1006 = vadd.f32 0.0, %v1005
    %v1007 = vpop.f32.mrf.mxu0
    %1008 = vmatprep.mubr.f32.mxu0 0.0
    %1009 = vmatmul.mubr.f32.gmra.mxu0 %v917
    %v1010 = vpop.f32.mrf.mxu0
    %v1011 = vadd.f32 0.0, %v1010
    %v1012 = vpop.f32.mrf.mxu0
    %1013 = vmatprep.mubr.f32.mxu0 0.0
    %1014 = vmatmul.mubr.f32.gmra.mxu0 %v920
    %v1015 = vpop.f32.mrf.mxu0
    %v1016 = vadd.f32 0.0, %v1015
    %v1017 = vpop.f32.mrf.mxu0
    %1018 = vmatprep.mubr.f32.mxu0 0.0
    %1019 = vmatmul.mubr.f32.gmra.mxu0 %v923
    %v1020 = vpop.f32.mrf.mxu0
    %v1021 = vadd.f32 0.0, %v1020
    %v1022 = vpop.f32.mrf.mxu0
    %1023 = vmatprep.mubr.f32.mxu0 0.0
    %1024 = vmatmul.mubr.f32.gmra.mxu0 %v926
    %v1025 = vpop.f32.mrf.mxu0
    %v1026 = vadd.f32 0.0, %v1025
    %v1027 = vpop.f32.mrf.mxu0
    %1028 = vmatprep.mubr.f32.mxu0 0.0
    %1029 = vmatmul.mubr.f32.gmra.mxu0 %v929
    %v1030 = vpop.f32.mrf.mxu0
    %v1031 = vadd.f32 0.0, %v1030
    %v1032 = vpop.f32.mrf.mxu0
    %1033 = vmatprep.mubr.f32.mxu0 0.0
    %1034 = vmatmul.mubr.f32.gmra.mxu0 %v932
    %v1035 = vpop.f32.mrf.mxu0
    %v1036 = vadd.f32 0.0, %v1035
    %v1037 = vpop.f32.mrf.mxu0
    %1038 = vdwg.mxu0
    %v1039 = vsel %vm770, %v1001, -inf
    %1040 = vmax.xlane.f32.xlu0 %v1039
    %v1041 = vpop.xlane.xlu0 %1040
    %v1042 = vsel %vm770, %v1006, -inf
    %1043 = vmax.xlane.f32.xlu0 %v1042
    %v1044 = vpop.xlane.xlu0 %1043
    %v1045 = vsel %vm770, %v1011, -inf
    %1046 = vmax.xlane.f32.xlu0 %v1045
    %v1047 = vpop.xlane.xlu0 %1046
    %v1048 = vsel %vm770, %v1016, -inf
    %1049 = vmax.xlane.f32.xlu0 %v1048
    %v1050 = vpop.xlane.xlu0 %1049
    %v1051 = vsel %vm770, %v1021, -inf
    %1052 = vmax.xlane.f32.xlu0 %v1051
    %v1053 = vpop.xlane.xlu0 %1052
    %v1054 = vsel %vm770, %v1026, -inf
    %1055 = vmax.xlane.f32.xlu0 %v1054
    %v1056 = vpop.xlane.xlu0 %1055
    %v1057 = vsel %vm770, %v1031, -inf
    %1058 = vmax.xlane.f32.xlu0 %v1057
    %v1059 = vpop.xlane.xlu0 %1058
    %v1060 = vsel %vm770, %v1036, -inf
    %1061 = vmax.xlane.f32.xlu0 %v1060
    %v1062 = vpop.xlane.xlu0 %1061
    %v1063 = vsub.f32 %v1001, %v1041
    %v1064 = vsub.f32 %v1006, %v1044
    %v1065 = vsub.f32 %v1011, %v1047
    %v1066 = vsub.f32 %v1016, %v1050
    %v1067 = vsub.f32 %v1021, %v1053
    %v1068 = vsub.f32 %v1026, %v1056
    %v1069 = vsub.f32 %v1031, %v1059
    %v1070 = vsub.f32 %v1036, %v1062
    %v1071 = vmul.f32 %v1063, 1.442695
    %v1072 = vpow.pop %v1071
    %v1073 = vmul.f32 %v1064, 1.442695
    %v1074 = vpow.pop %v1073
    %v1075 = vmul.f32 %v1065, 1.442695
    %v1076 = vpow.pop %v1075
    %v1077 = vmul.f32 %v1066, 1.442695
    %v1078 = vpow.pop %v1077
    %v1079 = vmul.f32 %v1067, 1.442695
    %v1080 = vpow.pop %v1079
    %v1081 = vmul.f32 %v1068, 1.442695
    %v1082 = vpow.pop %v1081
    %v1083 = vmul.f32 %v1069, 1.442695
    %v1084 = vpow.pop %v1083
    %v1085 = vmul.f32 %v1070, 1.442695
    %v1086 = vpow.pop %v1085
    %v1087 = vsel %vm770, %v1072, 0.0
    %1088 = vadd.xlane.f32.xlu0 %v1087
    %v1089 = vpop.xlane.xlu0 %1088
    %v1090 = vsel %vm770, %v1074, 0.0
    %1091 = vadd.xlane.f32.xlu0 %v1090
    %v1092 = vpop.xlane.xlu0 %1091
    %v1093 = vsel %vm770, %v1076, 0.0
    %1094 = vadd.xlane.f32.xlu0 %v1093
    %v1095 = vpop.xlane.xlu0 %1094
    %v1096 = vsel %vm770, %v1078, 0.0
    %1097 = vadd.xlane.f32.xlu0 %v1096
    %v1098 = vpop.xlane.xlu0 %1097
    %v1099 = vsel %vm770, %v1080, 0.0
    %1100 = vadd.xlane.f32.xlu0 %v1099
    %v1101 = vpop.xlane.xlu0 %1100
    %v1102 = vsel %vm770, %v1082, 0.0
    %1103 = vadd.xlane.f32.xlu0 %v1102
    %v1104 = vpop.xlane.xlu0 %1103
    %v1105 = vsel %vm770, %v1084, 0.0
    %1106 = vadd.xlane.f32.xlu0 %v1105
    %v1107 = vpop.xlane.xlu0 %1106
    %v1108 = vsel %vm770, %v1086, 0.0
    %1109 = vadd.xlane.f32.xlu0 %v1108
    %v1110 = vpop.xlane.xlu0 %1109
    %v1111 = vrcp.pop %v1089
    %v1112 = vmul.f32 %v1072, %v1111
    %v1113 = vrcp.pop %v1092
    %v1114 = vmul.f32 %v1074, %v1113
    %v1115 = vrcp.pop %v1095
    %v1116 = vmul.f32 %v1076, %v1115
    %v1117 = vrcp.pop %v1098
    %v1118 = vmul.f32 %v1078, %v1117
    %v1119 = vrcp.pop %v1101
    %v1120 = vmul.f32 %v1080, %v1119
    %v1121 = vrcp.pop %v1104
    %v1122 = vmul.f32 %v1082, %v1121
    %v1123 = vrcp.pop %v1107
    %v1124 = vmul.f32 %v1084, %v1123
    %v1125 = vrcp.pop %v1110
    %v1126 = vmul.f32 %v1086, %v1125
    %1128 = vset.pattern.permute.xlu0 0
    %1129 = vperm.xlu0 %1128, %v905
    %v1130 = vpop.permute.xlu0 %1129
    %1133 = vset.pattern.permute.xlu0 0
    %1134 = vperm.xlu0 %1133, %v906
    %v1135 = vpop.permute.xlu0 %1134
    %1138 = vset.pattern.permute.xlu0 0
    %1139 = vperm.xlu0 %1138, %v907
    %v1140 = vpop.permute.xlu0 %1139
    %1143 = vset.pattern.permute.xlu0 0
    %1144 = vperm.xlu0 %1143, %v908
    %v1145 = vpop.permute.xlu0 %1144
    %1148 = vset.pattern.permute.xlu0 0
    %1149 = vperm.xlu0 %1148, %v909
    %v1150 = vpop.permute.xlu0 %1149
    %1153 = vset.pattern.permute.xlu0 0
    %1154 = vperm.xlu0 %1153, %v910
    %v1155 = vpop.permute.xlu0 %1154
    %1158 = vset.pattern.permute.xlu0 0
    %1159 = vperm.xlu0 %1158, %v911
    %v1160 = vpop.permute.xlu0 %1159
    %1163 = vset.pattern.permute.xlu0 0
    %1164 = vperm.xlu0 %1163, %v912
    %v1165 = vpop.permute.xlu0 %1164
    %v1167 = vmul.f32 %v1112, %v1130
    %v1168 = vmul.f32 %v1114, %v1135
    %v1169 = vmul.f32 %v1116, %v1140
    %v1170 = vmul.f32 %v1118, %v1145
    %v1171 = vmul.f32 %v1120, %v1150
    %v1172 = vmul.f32 %v1122, %v1155
    %v1173 = vmul.f32 %v1124, %v1160
    %v1174 = vmul.f32 %v1126, %v1165
    %v1175 = vround.ne.pseudo %v1167
    %v1176 = vround.ne.pseudo %v1168
    %v1177 = vround.ne.pseudo %v1169
    %v1178 = vround.ne.pseudo %v1170
    %v1179 = vround.ne.pseudo %v1171
    %v1180 = vround.ne.pseudo %v1172
    %v1181 = vround.ne.pseudo %v1173
    %v1182 = vround.ne.pseudo %v1174
    %v1183 = vmax.f32 %v1175, -32768.0
    %v1184 = vmax.f32 %v1176, -32768.0
    %v1185 = vmax.f32 %v1177, -32768.0
    %v1186 = vmax.f32 %v1178, -32768.0
    %v1187 = vmax.f32 %v1179, -32768.0
    %v1188 = vmax.f32 %v1180, -32768.0
    %v1189 = vmax.f32 %v1181, -32768.0
    %v1190 = vmax.f32 %v1182, -32768.0
    %v1191 = vmin.f32 %v1183, 32767.0
    %v1192 = vmin.f32 %v1184, 32767.0
    %v1193 = vmin.f32 %v1185, 32767.0
    %v1194 = vmin.f32 %v1186, 32767.0
    %v1195 = vmin.f32 %v1187, 32767.0
    %v1196 = vmin.f32 %v1188, 32767.0
    %v1197 = vmin.f32 %v1189, 32767.0
    %v1198 = vmin.f32 %v1190, 32767.0
    %1199 = vst.msk [vmem:[#allocation2] sm:$0xff] %vm770, %v1191
    %1200 = vst.msk [vmem:[#allocation2 + $0x8] sm:$0xff] %vm770, %v1192
    %1201 = vst.msk [vmem:[#allocation2 + $0x10] sm:$0xff] %vm770, %v1193
    %1202 = vst.msk [vmem:[#allocation2 + $0x18] sm:$0xff] %vm770, %v1194
    %1203 = vst.msk [vmem:[#allocation2 + $0x20] sm:$0xff] %vm770, %v1195
    %1204 = vst.msk [vmem:[#allocation2 + $0x28] sm:$0xff] %vm770, %v1196
    %1205 = vst.msk [vmem:[#allocation2 + $0x30] sm:$0xff] %vm770, %v1197
    %1206 = vst.msk [vmem:[#allocation2 + $0x38] sm:$0xff] %vm770, %v1198
    %1207 = vrot.lane.b32.xlu0 %v242, 64
    %v1208 = vpop.permute.xlu0 %1207
    %1209 = vrot.lane.b32.xlu0 %v243, 64
    %v1210 = vpop.permute.xlu0 %1209
    %1211 = vrot.lane.b32.xlu0 %v244, 64
    %v1212 = vpop.permute.xlu0 %1211
    %1213 = vrot.lane.b32.xlu0 %v245, 64
    %v1214 = vpop.permute.xlu0 %1213
    %1215 = vrot.lane.b32.xlu0 %v246, 64
    %v1216 = vpop.permute.xlu0 %1215
    %1217 = vrot.lane.b32.xlu0 %v247, 64
    %v1218 = vpop.permute.xlu0 %1217
    %1219 = vrot.lane.b32.xlu0 %v248, 64
    %v1220 = vpop.permute.xlu0 %1219
    %1221 = vrot.lane.b32.xlu0 %v249, 64
    %v1222 = vpop.permute.xlu0 %1221
    %v1232 = vsel %vm770, %v1191, 0
    %v1235 = vsel %vm770, %v1192, 0
    %v1238 = vsel %vm770, %v1193, 0
    %v1241 = vsel %vm770, %v1194, 0
    %v1244 = vsel %vm770, %v1195, 0
    %v1247 = vsel %vm770, %v1196, 0
    %v1250 = vsel %vm770, %v1197, 0
    %v1253 = vsel %vm770, %v1198, 0
    %1255 = vmatprep.subr.mxu0 0.0
    %1256 = vmatpush1.msra.mxu0 0.0
    %1257 = vmatprep.subr.mxu0 0.0
    %1258 = vmatpush1.msra.mxu0 0.0
    %1259 = vmatprep.subr.mxu0 0.0
    %1260 = vmatpush1.msra.mxu0 0.0
    %1261 = vmatprep.subr.mxu0 0.0
    %1262 = vmatpush1.msra.mxu0 0.0
    %1263 = vmatprep.subr.mxu0 0.0
    %1264 = vmatpush1.msra.mxu0 0.0
    %1265 = vmatprep.subr.mxu0 0.0
    %1266 = vmatpush1.msra.mxu0 0.0
    %1267 = vmatprep.subr.mxu0 0.0
    %1268 = vmatpush1.msra.mxu0 0.0
    %1269 = vmatprep.subr.mxu0 0.0
    %1270 = vmatpush1.msra.mxu0 0.0
    %1271 = vmatprep.subr.mxu0 0.0
    %1272 = vmatpush1.msra.mxu0 %v1222
    %1273 = vmatprep.subr.mxu0 0.0
    %1274 = vmatpush1.msra.mxu0 %v1220
    %1275 = vmatprep.subr.mxu0 0.0
    %1276 = vmatpush1.msra.mxu0 %v1218
    %1277 = vmatprep.subr.mxu0 0.0
    %1278 = vmatpush1.msra.mxu0 %v1216
    %1279 = vmatprep.subr.mxu0 0.0
    %1280 = vmatpush1.msra.mxu0 %v1214
    %1281 = vmatprep.subr.mxu0 0.0
    %1282 = vmatpush1.msra.mxu0 %v1212
    %1283 = vmatprep.subr.mxu0 0.0
    %1284 = vmatpush1.msra.mxu0 %v1210
    %1285 = vmatprep.subr.mxu0 0.0
    %1286 = vmatpush1.msra.mxu0 %v1208
    %1287 = vmatprep.subr.mxu0 0.0
    %1288 = vmatpush2.msra.mxu0 0.0
    %1289 = vmatprep.subr.mxu0 0.0
    %1290 = vmatpush2.msra.mxu0 0.0
    %1291 = vmatprep.subr.mxu0 0.0
    %1292 = vmatpush2.msra.mxu0 0.0
    %1293 = vmatprep.subr.mxu0 0.0
    %1294 = vmatpush2.msra.mxu0 0.0
    %1295 = vmatprep.subr.mxu0 0.0
    %1296 = vmatpush2.msra.mxu0 0.0
    %1297 = vmatprep.subr.mxu0 0.0
    %1298 = vmatpush2.msra.mxu0 0.0
    %1299 = vmatprep.subr.mxu0 0.0
    %1300 = vmatpush2.msra.mxu0 0.0
    %1301 = vmatprep.subr.mxu0 0.0
    %1302 = vmatpush2.msra.mxu0 0.0
    %1303 = vmatprep.subr.mxu0 0.0
    %1304 = vmatpush2.msra.mxu0 0.0
    %1305 = vmatprep.subr.mxu0 0.0
    %1306 = vmatpush2.msra.mxu0 0.0
    %1307 = vmatprep.subr.mxu0 0.0
    %1308 = vmatpush2.msra.mxu0 0.0
    %1309 = vmatprep.subr.mxu0 0.0
    %1310 = vmatpush2.msra.mxu0 0.0
    %1311 = vmatprep.subr.mxu0 0.0
    %1312 = vmatpush2.msra.mxu0 0.0
    %1313 = vmatprep.subr.mxu0 0.0
    %1314 = vmatpush2.msra.mxu0 0.0
    %1315 = vmatprep.subr.mxu0 0.0
    %1316 = vmatpush2.msra.mxu0 0.0
    %1317 = vmatprep.subr.mxu0 0.0
    %1318 = vmatpush2.msra.mxu0 0.0
    %1319 = vmatprep.mubr.f32.mxu0 0.0
    %1320 = vmatmul.mubr.f32.gmra.mxu0 %v1232
    %v1321 = vpop.f32.mrf.mxu0
    %v1322 = vadd.f32 0.0, %v1321
    %v1323 = vpop.f32.mrf.mxu0
    %1324 = vmatprep.mubr.f32.mxu0 0.0
    %1325 = vmatmul.mubr.f32.gmra.mxu0 %v1235
    %v1326 = vpop.f32.mrf.mxu0
    %v1327 = vadd.f32 0.0, %v1326
    %v1328 = vpop.f32.mrf.mxu0
    %1329 = vmatprep.mubr.f32.mxu0 0.0
    %1330 = vmatmul.mubr.f32.gmra.mxu0 %v1238
    %v1331 = vpop.f32.mrf.mxu0
    %v1332 = vadd.f32 0.0, %v1331
    %v1333 = vpop.f32.mrf.mxu0
    %1334 = vmatprep.mubr.f32.mxu0 0.0
    %1335 = vmatmul.mubr.f32.gmra.mxu0 %v1241
    %v1336 = vpop.f32.mrf.mxu0
    %v1337 = vadd.f32 0.0, %v1336
    %v1338 = vpop.f32.mrf.mxu0
    %1339 = vmatprep.mubr.f32.mxu0 0.0
    %1340 = vmatmul.mubr.f32.gmra.mxu0 %v1244
    %v1341 = vpop.f32.mrf.mxu0
    %v1342 = vadd.f32 0.0, %v1341
    %v1343 = vpop.f32.mrf.mxu0
    %1344 = vmatprep.mubr.f32.mxu0 0.0
    %1345 = vmatmul.mubr.f32.gmra.mxu0 %v1247
    %v1346 = vpop.f32.mrf.mxu0
    %v1347 = vadd.f32 0.0, %v1346
    %v1348 = vpop.f32.mrf.mxu0
    %1349 = vmatprep.mubr.f32.mxu0 0.0
    %1350 = vmatmul.mubr.f32.gmra.mxu0 %v1250
    %v1351 = vpop.f32.mrf.mxu0
    %v1352 = vadd.f32 0.0, %v1351
    %v1353 = vpop.f32.mrf.mxu0
    %1354 = vmatprep.mubr.f32.mxu0 0.0
    %1355 = vmatmul.mubr.f32.gmra.mxu0 %v1253
    %v1356 = vpop.f32.mrf.mxu0
    %v1357 = vadd.f32 0.0, %v1356
    %v1358 = vpop.f32.mrf.mxu0
    %1359 = vdwg.mxu0
    %v1360 = vmul.f32 %v1322, 1.5258789e-05
    %v1361 = vmul.f32 %v1327, 1.5258789e-05
    %v1362 = vmul.f32 %v1332, 1.5258789e-05
    %v1363 = vmul.f32 %v1337, 1.5258789e-05
    %v1364 = vmul.f32 %v1342, 1.5258789e-05
    %v1365 = vmul.f32 %v1347, 1.5258789e-05
    %v1366 = vmul.f32 %v1352, 1.5258789e-05
    %v1367 = vmul.f32 %v1357, 1.5258789e-05
    %1368 = vst.msk [vmem:[%s4] sm:$0xff] %vm282, %v1360
    %1369 = vst.msk [vmem:[%s4 + $0x8] sm:$0xff] %vm282, %v1361
    %1370 = vst.msk [vmem:[%s4 + $0x10] sm:$0xff] %vm282, %v1362
    %1371 = vst.msk [vmem:[%s4 + $0x18] sm:$0xff] %vm282, %v1363
    %1372 = vst.msk [vmem:[%s4 + $0x20] sm:$0xff] %vm282, %v1364
    %1373 = vst.msk [vmem:[%s4 + $0x28] sm:$0xff] %vm282, %v1365
    %1374 = vst.msk [vmem:[%s4 + $0x30] sm:$0xff] %vm282, %v1366
    %1375 = vst.msk [vmem:[%s4 + $0x38] sm:$0xff] %vm282, %v1367
    %1376 = vrot.lane.b32.xlu0 %v251, 120
    %v1377 = vpop.permute.xlu0 %1376
    %1378 = vrot.lane.b32.xlu0 %v252, 120
    %v1379 = vpop.permute.xlu0 %1378
    %1380 = vrot.lane.b32.xlu0 %v253, 120
    %v1381 = vpop.permute.xlu0 %1380
    %1382 = vrot.lane.b32.xlu0 %v254, 120
    %v1383 = vpop.permute.xlu0 %1382
    %1384 = vrot.lane.b32.xlu0 %v255, 120
    %v1385 = vpop.permute.xlu0 %1384
    %1386 = vrot.lane.b32.xlu0 %v256, 120
    %v1387 = vpop.permute.xlu0 %1386
    %1388 = vrot.lane.b32.xlu0 %v257, 120
    %v1389 = vpop.permute.xlu0 %1388
    %v1390 = vsel %vm282, %v1377, 0
    %v1392 = vsel %vm282, %v1379, 0
    %v1394 = vsel %vm282, %v1381, 0
    %v1396 = vsel %vm282, %v1383, 0
    %v1398 = vsel %vm282, %v1385, 0
    %v1400 = vsel %vm282, %v1387, 0
    %v1402 = vsel %vm282, %v1389, 0
    %1404 = vmatprep.subr.mxu0 0.0
    %1405 = vmatpush1.xpose.msra.mxu0 0.0
    %1406 = vmatprep.subr.mxu0 0.0
    %1407 = vmatpush1.xpose.msra.mxu0 0.0
    %1408 = vmatprep.subr.mxu0 0.0
    %1409 = vmatpush1.xpose.msra.mxu0 0.0
    %1410 = vmatprep.subr.mxu0 0.0
    %1411 = vmatpush1.xpose.msra.mxu0 0.0
    %1412 = vmatprep.subr.mxu0 0.0
    %1413 = vmatpush1.xpose.msra.mxu0 0.0
    %1414 = vmatprep.subr.mxu0 0.0
    %1415 = vmatpush1.xpose.msra.mxu0 0.0
    %1416 = vmatprep.subr.mxu0 0.0
    %1417 = vmatpush1.xpose.msra.mxu0 0.0
    %1418 = vmatprep.subr.mxu0 0.0
    %1419 = vmatpush1.xpose.msra.mxu0 0.0
    %1420 = vmatprep.subr.mxu0 0.0
    %1421 = vmatpush1.xpose.msra.mxu0 %v419
    %1422 = vmatprep.subr.mxu0 0.0
    %1423 = vmatpush1.xpose.msra.mxu0 %v417
    %1424 = vmatprep.subr.mxu0 0.0
    %1425 = vmatpush1.xpose.msra.mxu0 %v415
    %1426 = vmatprep.subr.mxu0 0.0
    %1427 = vmatpush1.xpose.msra.mxu0 %v413
    %1428 = vmatprep.subr.mxu0 0.0
    %1429 = vmatpush1.xpose.msra.mxu0 %v411
    %1430 = vmatprep.subr.mxu0 0.0
    %1431 = vmatpush1.xpose.msra.mxu0 %v409
    %1432 = vmatprep.subr.mxu0 0.0
    %1433 = vmatpush1.xpose.msra.mxu0 %v407
    %1434 = vmatprep.subr.mxu0 0.0
    %1435 = vmatpush1.xpose.msra.mxu0 %v405
    %1436 = vmatprep.subr.mxu0 0.0
    %1437 = vmatpush2.xpose.msra.mxu0 0.0
    %1438 = vmatprep.subr.mxu0 0.0
    %1439 = vmatpush2.xpose.msra.mxu0 0.0
    %1440 = vmatprep.subr.mxu0 0.0
    %1441 = vmatpush2.xpose.msra.mxu0 0.0
    %1442 = vmatprep.subr.mxu0 0.0
    %1443 = vmatpush2.xpose.msra.mxu0 0.0
    %1444 = vmatprep.subr.mxu0 0.0
    %1445 = vmatpush2.xpose.msra.mxu0 0.0
    %1446 = vmatprep.subr.mxu0 0.0
    %1447 = vmatpush2.xpose.msra.mxu0 0.0
    %1448 = vmatprep.subr.mxu0 0.0
    %1449 = vmatpush2.xpose.msra.mxu0 0.0
    %1450 = vmatprep.subr.mxu0 0.0
    %1451 = vmatpush2.xpose.msra.mxu0 0.0
    %1452 = vmatprep.subr.mxu0 0.0
    %1453 = vmatpush2.xpose.msra.mxu0 0.0
    %1454 = vmatprep.subr.mxu0 0.0
    %1455 = vmatpush2.xpose.msra.mxu0 0.0
    %1456 = vmatprep.subr.mxu0 0.0
    %1457 = vmatpush2.xpose.msra.mxu0 0.0
    %1458 = vmatprep.subr.mxu0 0.0
    %1459 = vmatpush2.xpose.msra.mxu0 0.0
    %1460 = vmatprep.subr.mxu0 0.0
    %1461 = vmatpush2.xpose.msra.mxu0 0.0
    %1462 = vmatprep.subr.mxu0 0.0
    %1463 = vmatpush2.xpose.msra.mxu0 0.0
    %1464 = vmatprep.subr.mxu0 0.0
    %1465 = vmatpush2.xpose.msra.mxu0 0.0
    %1466 = vmatprep.subr.mxu0 0.0
    %1467 = vmatpush2.xpose.msra.mxu0 0.0
    %1468 = vmatprep.mubr.f32.mxu0 0.0
    %1469 = vmatmul.mubr.f32.gmra.mxu0 %v403
    %v1470 = vpop.f32.mrf.mxu0
    %v1471 = vadd.f32 0.0, %v1470
    %v1472 = vpop.f32.mrf.mxu0
    %1473 = vmatprep.mubr.f32.mxu0 0.0
    %1474 = vmatmul.mubr.f32.gmra.mxu0 %v1390
    %v1475 = vpop.f32.mrf.mxu0
    %v1476 = vadd.f32 0.0, %v1475
    %v1477 = vpop.f32.mrf.mxu0
    %1478 = vmatprep.mubr.f32.mxu0 0.0
    %1479 = vmatmul.mubr.f32.gmra.mxu0 %v1392
    %v1480 = vpop.f32.mrf.mxu0
    %v1481 = vadd.f32 0.0, %v1480
    %v1482 = vpop.f32.mrf.mxu0
    %1483 = vmatprep.mubr.f32.mxu0 0.0
    %1484 = vmatmul.mubr.f32.gmra.mxu0 %v1394
    %v1485 = vpop.f32.mrf.mxu0
    %v1486 = vadd.f32 0.0, %v1485
    %v1487 = vpop.f32.mrf.mxu0
    %1488 = vmatprep.mubr.f32.mxu0 0.0
    %1489 = vmatmul.mubr.f32.gmra.mxu0 %v1396
    %v1490 = vpop.f32.mrf.mxu0
    %v1491 = vadd.f32 0.0, %v1490
    %v1492 = vpop.f32.mrf.mxu0
    %1493 = vmatprep.mubr.f32.mxu0 0.0
    %1494 = vmatmul.mubr.f32.gmra.mxu0 %v1398
    %v1495 = vpop.f32.mrf.mxu0
    %v1496 = vadd.f32 0.0, %v1495
    %v1497 = vpop.f32.mrf.mxu0
    %1498 = vmatprep.mubr.f32.mxu0 0.0
    %1499 = vmatmul.mubr.f32.gmra.mxu0 %v1400
    %v1500 = vpop.f32.mrf.mxu0
    %v1501 = vadd.f32 0.0, %v1500
    %v1502 = vpop.f32.mrf.mxu0
    %1503 = vmatprep.mubr.f32.mxu0 0.0
    %1504 = vmatmul.mubr.f32.gmra.mxu0 %v1402
    %v1505 = vpop.f32.mrf.mxu0
    %v1506 = vadd.f32 0.0, %v1505
    %v1507 = vpop.f32.mrf.mxu0
    %1508 = vdwg.mxu0
    %v1509 = vsel %vm770, %v1471, -inf
    %1510 = vmax.xlane.f32.xlu0 %v1509
    %v1511 = vpop.xlane.xlu0 %1510
    %v1512 = vsel %vm770, %v1476, -inf
    %1513 = vmax.xlane.f32.xlu0 %v1512
    %v1514 = vpop.xlane.xlu0 %1513
    %v1515 = vsel %vm770, %v1481, -inf
    %1516 = vmax.xlane.f32.xlu0 %v1515
    %v1517 = vpop.xlane.xlu0 %1516
    %v1518 = vsel %vm770, %v1486, -inf
    %1519 = vmax.xlane.f32.xlu0 %v1518
    %v1520 = vpop.xlane.xlu0 %1519
    %v1521 = vsel %vm770, %v1491, -inf
    %1522 = vmax.xlane.f32.xlu0 %v1521
    %v1523 = vpop.xlane.xlu0 %1522
    %v1524 = vsel %vm770, %v1496, -inf
    %1525 = vmax.xlane.f32.xlu0 %v1524
    %v1526 = vpop.xlane.xlu0 %1525
    %v1527 = vsel %vm770, %v1501, -inf
    %1528 = vmax.xlane.f32.xlu0 %v1527
    %v1529 = vpop.xlane.xlu0 %1528
    %v1530 = vsel %vm770, %v1506, -inf
    %1531 = vmax.xlane.f32.xlu0 %v1530
    %v1532 = vpop.xlane.xlu0 %1531
    %v1533 = vsub.f32 %v1471, %v1511
    %v1534 = vsub.f32 %v1476, %v1514
    %v1535 = vsub.f32 %v1481, %v1517
    %v1536 = vsub.f32 %v1486, %v1520
    %v1537 = vsub.f32 %v1491, %v1523
    %v1538 = vsub.f32 %v1496, %v1526
    %v1539 = vsub.f32 %v1501, %v1529
    %v1540 = vsub.f32 %v1506, %v1532
    %v1541 = vmul.f32 %v1533, 1.442695
    %v1542 = vpow.pop %v1541
    %v1543 = vmul.f32 %v1534, 1.442695
    %v1544 = vpow.pop %v1543
    %v1545 = vmul.f32 %v1535, 1.442695
    %v1546 = vpow.pop %v1545
    %v1547 = vmul.f32 %v1536, 1.442695
    %v1548 = vpow.pop %v1547
    %v1549 = vmul.f32 %v1537, 1.442695
    %v1550 = vpow.pop %v1549
    %v1551 = vmul.f32 %v1538, 1.442695
    %v1552 = vpow.pop %v1551
    %v1553 = vmul.f32 %v1539, 1.442695
    %v1554 = vpow.pop %v1553
    %v1555 = vmul.f32 %v1540, 1.442695
    %v1556 = vpow.pop %v1555
    %v1557 = vsel %vm770, %v1542, 0.0
    %1558 = vadd.xlane.f32.xlu0 %v1557
    %v1559 = vpop.xlane.xlu0 %1558
    %v1560 = vsel %vm770, %v1544, 0.0
    %1561 = vadd.xlane.f32.xlu0 %v1560
    %v1562 = vpop.xlane.xlu0 %1561
    %v1563 = vsel %vm770, %v1546, 0.0
    %1564 = vadd.xlane.f32.xlu0 %v1563
    %v1565 = vpop.xlane.xlu0 %1564
    %v1566 = vsel %vm770, %v1548, 0.0
    %1567 = vadd.xlane.f32.xlu0 %v1566
    %v1568 = vpop.xlane.xlu0 %1567
    %v1569 = vsel %vm770, %v1550, 0.0
    %1570 = vadd.xlane.f32.xlu0 %v1569
    %v1571 = vpop.xlane.xlu0 %1570
    %v1572 = vsel %vm770, %v1552, 0.0
    %1573 = vadd.xlane.f32.xlu0 %v1572
    %v1574 = vpop.xlane.xlu0 %1573
    %v1575 = vsel %vm770, %v1554, 0.0
    %1576 = vadd.xlane.f32.xlu0 %v1575
    %v1577 = vpop.xlane.xlu0 %1576
    %v1578 = vsel %vm770, %v1556, 0.0
    %1579 = vadd.xlane.f32.xlu0 %v1578
    %v1580 = vpop.xlane.xlu0 %1579
    %v1581 = vrcp.pop %v1559
    %v1582 = vmul.f32 %v1542, %v1581
    %v1583 = vrcp.pop %v1562
    %v1584 = vmul.f32 %v1544, %v1583
    %v1585 = vrcp.pop %v1565
    %v1586 = vmul.f32 %v1546, %v1585
    %v1587 = vrcp.pop %v1568
    %v1588 = vmul.f32 %v1548, %v1587
    %v1589 = vrcp.pop %v1571
    %v1590 = vmul.f32 %v1550, %v1589
    %v1591 = vrcp.pop %v1574
    %v1592 = vmul.f32 %v1552, %v1591
    %v1593 = vrcp.pop %v1577
    %v1594 = vmul.f32 %v1554, %v1593
    %v1595 = vrcp.pop %v1580
    %v1596 = vmul.f32 %v1556, %v1595
    %v1597 = vmul.f32 %v1582, %v1130
    %v1598 = vmul.f32 %v1584, %v1135
    %v1599 = vmul.f32 %v1586, %v1140
    %v1600 = vmul.f32 %v1588, %v1145
    %v1601 = vmul.f32 %v1590, %v1150
    %v1602 = vmul.f32 %v1592, %v1155
    %v1603 = vmul.f32 %v1594, %v1160
    %v1604 = vmul.f32 %v1596, %v1165
    %v1605 = vround.ne.pseudo %v1597
    %v1606 = vround.ne.pseudo %v1598
    %v1607 = vround.ne.pseudo %v1599
    %v1608 = vround.ne.pseudo %v1600
    %v1609 = vround.ne.pseudo %v1601
    %v1610 = vround.ne.pseudo %v1602
    %v1611 = vround.ne.pseudo %v1603
    %v1612 = vround.ne.pseudo %v1604
    %v1613 = vmax.f32 %v1605, -32768.0
    %v1614 = vmax.f32 %v1606, -32768.0
    %v1615 = vmax.f32 %v1607, -32768.0
    %v1616 = vmax.f32 %v1608, -32768.0
    %v1617 = vmax.f32 %v1609, -32768.0
    %v1618 = vmax.f32 %v1610, -32768.0
    %v1619 = vmax.f32 %v1611, -32768.0
    %v1620 = vmax.f32 %v1612, -32768.0
    %v1621 = vmin.f32 %v1613, 32767.0
    %v1622 = vmin.f32 %v1614, 32767.0
    %v1623 = vmin.f32 %v1615, 32767.0
    %v1624 = vmin.f32 %v1616, 32767.0
    %v1625 = vmin.f32 %v1617, 32767.0
    %v1626 = vmin.f32 %v1618, 32767.0
    %v1627 = vmin.f32 %v1619, 32767.0
    %v1628 = vmin.f32 %v1620, 32767.0
    %1629 = vst.msk [vmem:[#allocation2 + $0x40] sm:$0xff] %vm770, %v1621
    %1630 = vst.msk [vmem:[#allocation2 + $0x48] sm:$0xff] %vm770, %v1622
    %1631 = vst.msk [vmem:[#allocation2 + $0x50] sm:$0xff] %vm770, %v1623
    %1632 = vst.msk [vmem:[#allocation2 + $0x58] sm:$0xff] %vm770, %v1624
    %1633 = vst.msk [vmem:[#allocation2 + $0x60] sm:$0xff] %vm770, %v1625
    %1634 = vst.msk [vmem:[#allocation2 + $0x68] sm:$0xff] %vm770, %v1626
    %1635 = vst.msk [vmem:[#allocation2 + $0x70] sm:$0xff] %vm770, %v1627
    %1636 = vst.msk [vmem:[#allocation2 + $0x78] sm:$0xff] %vm770, %v1628
    %1637 = vrot.lane.b32.xlu0 %v242, 56
    %v1638 = vpop.permute.xlu0 %1637
    %1639 = vrot.lane.b32.xlu0 %v243, 56
    %v1640 = vpop.permute.xlu0 %1639
    %1641 = vrot.lane.b32.xlu0 %v244, 56
    %v1642 = vpop.permute.xlu0 %1641
    %1643 = vrot.lane.b32.xlu0 %v245, 56
    %v1644 = vpop.permute.xlu0 %1643
    %1645 = vrot.lane.b32.xlu0 %v246, 56
    %v1646 = vpop.permute.xlu0 %1645
    %1647 = vrot.lane.b32.xlu0 %v247, 56
    %v1648 = vpop.permute.xlu0 %1647
    %1649 = vrot.lane.b32.xlu0 %v248, 56
    %v1650 = vpop.permute.xlu0 %1649
    %1651 = vrot.lane.b32.xlu0 %v249, 56
    %v1652 = vpop.permute.xlu0 %1651
    %v1662 = vsel %vm770, %v1621, 0
    %v1665 = vsel %vm770, %v1622, 0
    %v1668 = vsel %vm770, %v1623, 0
    %v1671 = vsel %vm770, %v1624, 0
    %v1674 = vsel %vm770, %v1625, 0
    %v1677 = vsel %vm770, %v1626, 0
    %v1680 = vsel %vm770, %v1627, 0
    %v1683 = vsel %vm770, %v1628, 0
    %1685 = vmatprep.subr.mxu0 0.0
    %1686 = vmatpush1.msra.mxu0 0.0
    %1687 = vmatprep.subr.mxu0 0.0
    %1688 = vmatpush1.msra.mxu0 0.0
    %1689 = vmatprep.subr.mxu0 0.0
    %1690 = vmatpush1.msra.mxu0 0.0
    %1691 = vmatprep.subr.mxu0 0.0
    %1692 = vmatpush1.msra.mxu0 0.0
    %1693 = vmatprep.subr.mxu0 0.0
    %1694 = vmatpush1.msra.mxu0 0.0
    %1695 = vmatprep.subr.mxu0 0.0
    %1696 = vmatpush1.msra.mxu0 0.0
    %1697 = vmatprep.subr.mxu0 0.0
    %1698 = vmatpush1.msra.mxu0 0.0
    %1699 = vmatprep.subr.mxu0 0.0
    %1700 = vmatpush1.msra.mxu0 0.0
    %1701 = vmatprep.subr.mxu0 0.0
    %1702 = vmatpush1.msra.mxu0 %v1652
    %1703 = vmatprep.subr.mxu0 0.0
    %1704 = vmatpush1.msra.mxu0 %v1650
    %1705 = vmatprep.subr.mxu0 0.0
    %1706 = vmatpush1.msra.mxu0 %v1648
    %1707 = vmatprep.subr.mxu0 0.0
    %1708 = vmatpush1.msra.mxu0 %v1646
    %1709 = vmatprep.subr.mxu0 0.0
    %1710 = vmatpush1.msra.mxu0 %v1644
    %1711 = vmatprep.subr.mxu0 0.0
    %1712 = vmatpush1.msra.mxu0 %v1642
    %1713 = vmatprep.subr.mxu0 0.0
    %1714 = vmatpush1.msra.mxu0 %v1640
    %1715 = vmatprep.subr.mxu0 0.0
    %1716 = vmatpush1.msra.mxu0 %v1638
    %1717 = vmatprep.subr.mxu0 0.0
    %1718 = vmatpush2.msra.mxu0 0.0
    %1719 = vmatprep.subr.mxu0 0.0
    %1720 = vmatpush2.msra.mxu0 0.0
    %1721 = vmatprep.subr.mxu0 0.0
    %1722 = vmatpush2.msra.mxu0 0.0
    %1723 = vmatprep.subr.mxu0 0.0
    %1724 = vmatpush2.msra.mxu0 0.0
    %1725 = vmatprep.subr.mxu0 0.0
    %1726 = vmatpush2.msra.mxu0 0.0
    %1727 = vmatprep.subr.mxu0 0.0
    %1728 = vmatpush2.msra.mxu0 0.0
    %1729 = vmatprep.subr.mxu0 0.0
    %1730 = vmatpush2.msra.mxu0 0.0
    %1731 = vmatprep.subr.mxu0 0.0
    %1732 = vmatpush2.msra.mxu0 0.0
    %1733 = vmatprep.subr.mxu0 0.0
    %1734 = vmatpush2.msra.mxu0 0.0
    %1735 = vmatprep.subr.mxu0 0.0
    %1736 = vmatpush2.msra.mxu0 0.0
    %1737 = vmatprep.subr.mxu0 0.0
    %1738 = vmatpush2.msra.mxu0 0.0
    %1739 = vmatprep.subr.mxu0 0.0
    %1740 = vmatpush2.msra.mxu0 0.0
    %1741 = vmatprep.subr.mxu0 0.0
    %1742 = vmatpush2.msra.mxu0 0.0
    %1743 = vmatprep.subr.mxu0 0.0
    %1744 = vmatpush2.msra.mxu0 0.0
    %1745 = vmatprep.subr.mxu0 0.0
    %1746 = vmatpush2.msra.mxu0 0.0
    %1747 = vmatprep.subr.mxu0 0.0
    %1748 = vmatpush2.msra.mxu0 0.0
    %1749 = vmatprep.mubr.f32.mxu0 0.0
    %1750 = vmatmul.mubr.f32.gmra.mxu0 %v1662
    %v1751 = vpop.f32.mrf.mxu0
    %v1752 = vadd.f32 0.0, %v1751
    %v1753 = vpop.f32.mrf.mxu0
    %1754 = vmatprep.mubr.f32.mxu0 0.0
    %1755 = vmatmul.mubr.f32.gmra.mxu0 %v1665
    %v1756 = vpop.f32.mrf.mxu0
    %v1757 = vadd.f32 0.0, %v1756
    %v1758 = vpop.f32.mrf.mxu0
    %1759 = vmatprep.mubr.f32.mxu0 0.0
    %1760 = vmatmul.mubr.f32.gmra.mxu0 %v1668
    %v1761 = vpop.f32.mrf.mxu0
    %v1762 = vadd.f32 0.0, %v1761
    %v1763 = vpop.f32.mrf.mxu0
    %1764 = vmatprep.mubr.f32.mxu0 0.0
    %1765 = vmatmul.mubr.f32.gmra.mxu0 %v1671
    %v1766 = vpop.f32.mrf.mxu0
    %v1767 = vadd.f32 0.0, %v1766
    %v1768 = vpop.f32.mrf.mxu0
    %1769 = vmatprep.mubr.f32.mxu0 0.0
    %1770 = vmatmul.mubr.f32.gmra.mxu0 %v1674
    %v1771 = vpop.f32.mrf.mxu0
    %v1772 = vadd.f32 0.0, %v1771
    %v1773 = vpop.f32.mrf.mxu0
    %1774 = vmatprep.mubr.f32.mxu0 0.0
    %1775 = vmatmul.mubr.f32.gmra.mxu0 %v1677
    %v1776 = vpop.f32.mrf.mxu0
    %v1777 = vadd.f32 0.0, %v1776
    %v1778 = vpop.f32.mrf.mxu0
    %1779 = vmatprep.mubr.f32.mxu0 0.0
    %1780 = vmatmul.mubr.f32.gmra.mxu0 %v1680
    %v1781 = vpop.f32.mrf.mxu0
    %v1782 = vadd.f32 0.0, %v1781
    %v1783 = vpop.f32.mrf.mxu0
    %1784 = vmatprep.mubr.f32.mxu0 0.0
    %1785 = vmatmul.mubr.f32.gmra.mxu0 %v1683
    %v1786 = vpop.f32.mrf.mxu0
    %v1787 = vadd.f32 0.0, %v1786
    %v1788 = vpop.f32.mrf.mxu0
    %1789 = vdwg.mxu0
    %v1790 = vmul.f32 %v1752, 1.5258789e-05
    %v1791 = vmul.f32 %v1757, 1.5258789e-05
    %v1792 = vmul.f32 %v1762, 1.5258789e-05
    %v1793 = vmul.f32 %v1767, 1.5258789e-05
    %v1794 = vmul.f32 %v1772, 1.5258789e-05
    %v1795 = vmul.f32 %v1777, 1.5258789e-05
    %v1796 = vmul.f32 %v1782, 1.5258789e-05
    %v1797 = vmul.f32 %v1787, 1.5258789e-05
    %1806 = vrot.lane.b32.xlu0 %v1790, 8
    %v1807 = vpop.permute.xlu0 %1806
    %1808 = vrot.lane.b32.xlu0 %v1791, 8
    %v1809 = vpop.permute.xlu0 %1808
    %1810 = vrot.lane.b32.xlu0 %v1792, 8
    %v1811 = vpop.permute.xlu0 %1810
    %1812 = vrot.lane.b32.xlu0 %v1793, 8
    %v1813 = vpop.permute.xlu0 %1812
    %1814 = vrot.lane.b32.xlu0 %v1794, 8
    %v1815 = vpop.permute.xlu0 %1814
    %1816 = vrot.lane.b32.xlu0 %v1795, 8
    %v1817 = vpop.permute.xlu0 %1816
    %1818 = vrot.lane.b32.xlu0 %v1796, 8
    %v1819 = vpop.permute.xlu0 %1818
    %1820 = vrot.lane.b32.xlu0 %v1797, 8
    %v1821 = vpop.permute.xlu0 %1820
    %vm1830 = vcmask 130112
    %1831 = vst.msk [vmem:[%s4] sm:$0xff] %vm1830, %v1807
    %1832 = vst.msk [vmem:[%s4 + $0x8] sm:$0xff] %vm1830, %v1809
    %1833 = vst.msk [vmem:[%s4 + $0x10] sm:$0xff] %vm1830, %v1811
    %1834 = vst.msk [vmem:[%s4 + $0x18] sm:$0xff] %vm1830, %v1813
    %1835 = vst.msk [vmem:[%s4 + $0x20] sm:$0xff] %vm1830, %v1815
    %1836 = vst.msk [vmem:[%s4 + $0x28] sm:$0xff] %vm1830, %v1817
    %1837 = vst.msk [vmem:[%s4 + $0x30] sm:$0xff] %vm1830, %v1819
    %1838 = vst.msk [vmem:[%s4 + $0x38] sm:$0xff] %vm1830, %v1821
    %1839 = vrot.lane.b32.xlu0 %v251, 112
    %v1840 = vpop.permute.xlu0 %1839
    %1841 = vrot.lane.b32.xlu0 %v252, 112
    %v1842 = vpop.permute.xlu0 %1841
    %1843 = vrot.lane.b32.xlu0 %v253, 112
    %v1844 = vpop.permute.xlu0 %1843
    %1845 = vrot.lane.b32.xlu0 %v254, 112
    %v1846 = vpop.permute.xlu0 %1845
    %1847 = vrot.lane.b32.xlu0 %v255, 112
    %v1848 = vpop.permute.xlu0 %1847
    %1849 = vrot.lane.b32.xlu0 %v256, 112
    %v1850 = vpop.permute.xlu0 %1849
    %1851 = vrot.lane.b32.xlu0 %v257, 112
    %v1852 = vpop.permute.xlu0 %1851
    %v1853 = vsel %vm282, %v1840, 0
    %v1855 = vsel %vm282, %v1842, 0
    %v1857 = vsel %vm282, %v1844, 0
    %v1859 = vsel %vm282, %v1846, 0
    %v1861 = vsel %vm282, %v1848, 0
    %v1863 = vsel %vm282, %v1850, 0
    %v1865 = vsel %vm282, %v1852, 0
    %1867 = vmatprep.subr.mxu0 0.0
    %1868 = vmatpush1.xpose.msra.mxu0 0.0
    %1869 = vmatprep.subr.mxu0 0.0
    %1870 = vmatpush1.xpose.msra.mxu0 0.0
    %1871 = vmatprep.subr.mxu0 0.0
    %1872 = vmatpush1.xpose.msra.mxu0 0.0
    %1873 = vmatprep.subr.mxu0 0.0
    %1874 = vmatpush1.xpose.msra.mxu0 0.0
    %1875 = vmatprep.subr.mxu0 0.0
    %1876 = vmatpush1.xpose.msra.mxu0 0.0
    %1877 = vmatprep.subr.mxu0 0.0
    %1878 = vmatpush1.xpose.msra.mxu0 0.0
    %1879 = vmatprep.subr.mxu0 0.0
    %1880 = vmatpush1.xpose.msra.mxu0 0.0
    %1881 = vmatprep.subr.mxu0 0.0
    %1882 = vmatpush1.xpose.msra.mxu0 0.0
    %1883 = vmatprep.subr.mxu0 0.0
    %1884 = vmatpush1.xpose.msra.mxu0 %v537
    %1885 = vmatprep.subr.mxu0 0.0
    %1886 = vmatpush1.xpose.msra.mxu0 %v535
    %1887 = vmatprep.subr.mxu0 0.0
    %1888 = vmatpush1.xpose.msra.mxu0 %v533
    %1889 = vmatprep.subr.mxu0 0.0
    %1890 = vmatpush1.xpose.msra.mxu0 %v531
    %1891 = vmatprep.subr.mxu0 0.0
    %1892 = vmatpush1.xpose.msra.mxu0 %v529
    %1893 = vmatprep.subr.mxu0 0.0
    %1894 = vmatpush1.xpose.msra.mxu0 %v527
    %1895 = vmatprep.subr.mxu0 0.0
    %1896 = vmatpush1.xpose.msra.mxu0 %v525
    %1897 = vmatprep.subr.mxu0 0.0
    %1898 = vmatpush1.xpose.msra.mxu0 %v523
    %1899 = vmatprep.subr.mxu0 0.0
    %1900 = vmatpush2.xpose.msra.mxu0 0.0
    %1901 = vmatprep.subr.mxu0 0.0
    %1902 = vmatpush2.xpose.msra.mxu0 0.0
    %1903 = vmatprep.subr.mxu0 0.0
    %1904 = vmatpush2.xpose.msra.mxu0 0.0
    %1905 = vmatprep.subr.mxu0 0.0
    %1906 = vmatpush2.xpose.msra.mxu0 0.0
    %1907 = vmatprep.subr.mxu0 0.0
    %1908 = vmatpush2.xpose.msra.mxu0 0.0
    %1909 = vmatprep.subr.mxu0 0.0
    %1910 = vmatpush2.xpose.msra.mxu0 0.0
    %1911 = vmatprep.subr.mxu0 0.0
    %1912 = vmatpush2.xpose.msra.mxu0 0.0
    %1913 = vmatprep.subr.mxu0 0.0
    %1914 = vmatpush2.xpose.msra.mxu0 0.0
    %1915 = vmatprep.subr.mxu0 0.0
    %1916 = vmatpush2.xpose.msra.mxu0 0.0
    %1917 = vmatprep.subr.mxu0 0.0
    %1918 = vmatpush2.xpose.msra.mxu0 0.0
    %1919 = vmatprep.subr.mxu0 0.0
    %1920 = vmatpush2.xpose.msra.mxu0 0.0
    %1921 = vmatprep.subr.mxu0 0.0
    %1922 = vmatpush2.xpose.msra.mxu0 0.0
    %1923 = vmatprep.subr.mxu0 0.0
    %1924 = vmatpush2.xpose.msra.mxu0 0.0
    %1925 = vmatprep.subr.mxu0 0.0
    %1926 = vmatpush2.xpose.msra.mxu0 0.0
    %1927 = vmatprep.subr.mxu0 0.0
    %1928 = vmatpush2.xpose.msra.mxu0 0.0
    %1929 = vmatprep.subr.mxu0 0.0
    %1930 = vmatpush2.xpose.msra.mxu0 0.0
    %1931 = vmatprep.mubr.f32.mxu0 0.0
    %1932 = vmatmul.mubr.f32.gmra.mxu0 %v521
    %v1933 = vpop.f32.mrf.mxu0
    %v1934 = vadd.f32 0.0, %v1933
    %v1935 = vpop.f32.mrf.mxu0
    %1936 = vmatprep.mubr.f32.mxu0 0.0
    %1937 = vmatmul.mubr.f32.gmra.mxu0 %v1853
    %v1938 = vpop.f32.mrf.mxu0
    %v1939 = vadd.f32 0.0, %v1938
    %v1940 = vpop.f32.mrf.mxu0
    %1941 = vmatprep.mubr.f32.mxu0 0.0
    %1942 = vmatmul.mubr.f32.gmra.mxu0 %v1855
    %v1943 = vpop.f32.mrf.mxu0
    %v1944 = vadd.f32 0.0, %v1943
    %v1945 = vpop.f32.mrf.mxu0
    %1946 = vmatprep.mubr.f32.mxu0 0.0
    %1947 = vmatmul.mubr.f32.gmra.mxu0 %v1857
    %v1948 = vpop.f32.mrf.mxu0
    %v1949 = vadd.f32 0.0, %v1948
    %v1950 = vpop.f32.mrf.mxu0
    %1951 = vmatprep.mubr.f32.mxu0 0.0
    %1952 = vmatmul.mubr.f32.gmra.mxu0 %v1859
    %v1953 = vpop.f32.mrf.mxu0
    %v1954 = vadd.f32 0.0, %v1953
    %v1955 = vpop.f32.mrf.mxu0
    %1956 = vmatprep.mubr.f32.mxu0 0.0
    %1957 = vmatmul.mubr.f32.gmra.mxu0 %v1861
    %v1958 = vpop.f32.mrf.mxu0
    %v1959 = vadd.f32 0.0, %v1958
    %v1960 = vpop.f32.mrf.mxu0
    %1961 = vmatprep.mubr.f32.mxu0 0.0
    %1962 = vmatmul.mubr.f32.gmra.mxu0 %v1863
    %v1963 = vpop.f32.mrf.mxu0
    %v1964 = vadd.f32 0.0, %v1963
    %v1965 = vpop.f32.mrf.mxu0
    %1966 = vmatprep.mubr.f32.mxu0 0.0
    %1967 = vmatmul.mubr.f32.gmra.mxu0 %v1865
    %v1968 = vpop.f32.mrf.mxu0
    %v1969 = vadd.f32 0.0, %v1968
    %v1970 = vpop.f32.mrf.mxu0
    %1971 = vdwg.mxu0
    %v1972 = vsel %vm770, %v1934, -inf
    %1973 = vmax.xlane.f32.xlu0 %v1972
    %v1974 = vpop.xlane.xlu0 %1973
    %v1975 = vsel %vm770, %v1939, -inf
    %1976 = vmax.xlane.f32.xlu0 %v1975
    %v1977 = vpop.xlane.xlu0 %1976
    %v1978 = vsel %vm770, %v1944, -inf
    %1979 = vmax.xlane.f32.xlu0 %v1978
    %v1980 = vpop.xlane.xlu0 %1979
    %v1981 = vsel %vm770, %v1949, -inf
    %1982 = vmax.xlane.f32.xlu0 %v1981
    %v1983 = vpop.xlane.xlu0 %1982
    %v1984 = vsel %vm770, %v1954, -inf
    %1985 = vmax.xlane.f32.xlu0 %v1984
    %v1986 = vpop.xlane.xlu0 %1985
    %v1987 = vsel %vm770, %v1959, -inf
    %1988 = vmax.xlane.f32.xlu0 %v1987
    %v1989 = vpop.xlane.xlu0 %1988
    %v1990 = vsel %vm770, %v1964, -inf
    %1991 = vmax.xlane.f32.xlu0 %v1990
    %v1992 = vpop.xlane.xlu0 %1991
    %v1993 = vsel %vm770, %v1969, -inf
    %1994 = vmax.xlane.f32.xlu0 %v1993
    %v1995 = vpop.xlane.xlu0 %1994
    %v1996 = vsub.f32 %v1934, %v1974
    %v1997 = vsub.f32 %v1939, %v1977
    %v1998 = vsub.f32 %v1944, %v1980
    %v1999 = vsub.f32 %v1949, %v1983
    %v2000 = vsub.f32 %v1954, %v1986
    %v2001 = vsub.f32 %v1959, %v1989
    %v2002 = vsub.f32 %v1964, %v1992
    %v2003 = vsub.f32 %v1969, %v1995
    %v2004 = vmul.f32 %v1996, 1.442695
    %v2005 = vpow.pop %v2004
    %v2006 = vmul.f32 %v1997, 1.442695
    %v2007 = vpow.pop %v2006
    %v2008 = vmul.f32 %v1998, 1.442695
    %v2009 = vpow.pop %v2008
    %v2010 = vmul.f32 %v1999, 1.442695
    %v2011 = vpow.pop %v2010
    %v2012 = vmul.f32 %v2000, 1.442695
    %v2013 = vpow.pop %v2012
    %v2014 = vmul.f32 %v2001, 1.442695
    %v2015 = vpow.pop %v2014
    %v2016 = vmul.f32 %v2002, 1.442695
    %v2017 = vpow.pop %v2016
    %v2018 = vmul.f32 %v2003, 1.442695
    %v2019 = vpow.pop %v2018
    %v2020 = vsel %vm770, %v2005, 0.0
    %2021 = vadd.xlane.f32.xlu0 %v2020
    %v2022 = vpop.xlane.xlu0 %2021
    %v2023 = vsel %vm770, %v2007, 0.0
    %2024 = vadd.xlane.f32.xlu0 %v2023
    %v2025 = vpop.xlane.xlu0 %2024
    %v2026 = vsel %vm770, %v2009, 0.0
    %2027 = vadd.xlane.f32.xlu0 %v2026
    %v2028 = vpop.xlane.xlu0 %2027
    %v2029 = vsel %vm770, %v2011, 0.0
    %2030 = vadd.xlane.f32.xlu0 %v2029
    %v2031 = vpop.xlane.xlu0 %2030
    %v2032 = vsel %vm770, %v2013, 0.0
    %2033 = vadd.xlane.f32.xlu0 %v2032
    %v2034 = vpop.xlane.xlu0 %2033
    %v2035 = vsel %vm770, %v2015, 0.0
    %2036 = vadd.xlane.f32.xlu0 %v2035
    %v2037 = vpop.xlane.xlu0 %2036
    %v2038 = vsel %vm770, %v2017, 0.0
    %2039 = vadd.xlane.f32.xlu0 %v2038
    %v2040 = vpop.xlane.xlu0 %2039
    %v2041 = vsel %vm770, %v2019, 0.0
    %2042 = vadd.xlane.f32.xlu0 %v2041
    %v2043 = vpop.xlane.xlu0 %2042
    %v2044 = vrcp.pop %v2022
    %v2045 = vmul.f32 %v2005, %v2044
    %v2046 = vrcp.pop %v2025
    %v2047 = vmul.f32 %v2007, %v2046
    %v2048 = vrcp.pop %v2028
    %v2049 = vmul.f32 %v2009, %v2048
    %v2050 = vrcp.pop %v2031
    %v2051 = vmul.f32 %v2011, %v2050
    %v2052 = vrcp.pop %v2034
    %v2053 = vmul.f32 %v2013, %v2052
    %v2054 = vrcp.pop %v2037
    %v2055 = vmul.f32 %v2015, %v2054
    %v2056 = vrcp.pop %v2040
    %v2057 = vmul.f32 %v2017, %v2056
    %v2058 = vrcp.pop %v2043
    %v2059 = vmul.f32 %v2019, %v2058
    %v2060 = vmul.f32 %v2045, %v1130
    %v2061 = vmul.f32 %v2047, %v1135
    %v2062 = vmul.f32 %v2049, %v1140
    %v2063 = vmul.f32 %v2051, %v1145
    %v2064 = vmul.f32 %v2053, %v1150
    %v2065 = vmul.f32 %v2055, %v1155
    %v2066 = vmul.f32 %v2057, %v1160
    %v2067 = vmul.f32 %v2059, %v1165
    %v2068 = vround.ne.pseudo %v2060
    %v2069 = vround.ne.pseudo %v2061
    %v2070 = vround.ne.pseudo %v2062
    %v2071 = vround.ne.pseudo %v2063
    %v2072 = vround.ne.pseudo %v2064
    %v2073 = vround.ne.pseudo %v2065
    %v2074 = vround.ne.pseudo %v2066
    %v2075 = vround.ne.pseudo %v2067
    %v2076 = vmax.f32 %v2068, -32768.0
    %v2077 = vmax.f32 %v2069, -32768.0
    %v2078 = vmax.f32 %v2070, -32768.0
    %v2079 = vmax.f32 %v2071, -32768.0
    %v2080 = vmax.f32 %v2072, -32768.0
    %v2081 = vmax.f32 %v2073, -32768.0
    %v2082 = vmax.f32 %v2074, -32768.0
    %v2083 = vmax.f32 %v2075, -32768.0
    %v2084 = vmin.f32 %v2076, 32767.0
    %v2085 = vmin.f32 %v2077, 32767.0
    %v2086 = vmin.f32 %v2078, 32767.0
    %v2087 = vmin.f32 %v2079, 32767.0
    %v2088 = vmin.f32 %v2080, 32767.0
    %v2089 = vmin.f32 %v2081, 32767.0
    %v2090 = vmin.f32 %v2082, 32767.0
    %v2091 = vmin.f32 %v2083, 32767.0
    %2092 = vst.msk [vmem:[#allocation2 + $0x80] sm:$0xff] %vm770, %v2084
    %2093 = vst.msk [vmem:[#allocation2 + $0x88] sm:$0xff] %vm770, %v2085
    %2094 = vst.msk [vmem:[#allocation2 + $0x90] sm:$0xff] %vm770, %v2086
    %2095 = vst.msk [vmem:[#allocation2 + $0x98] sm:$0xff] %vm770, %v2087
    %2096 = vst.msk [vmem:[#allocation2 + $0xa0] sm:$0xff] %vm770, %v2088
    %2097 = vst.msk [vmem:[#allocation2 + $0xa8] sm:$0xff] %vm770, %v2089
    %2098 = vst.msk [vmem:[#allocation2 + $0xb0] sm:$0xff] %vm770, %v2090
    %2099 = vst.msk [vmem:[#allocation2 + $0xb8] sm:$0xff] %vm770, %v2091
    %2100 = vrot.lane.b32.xlu0 %v242, 48
    %v2101 = vpop.permute.xlu0 %2100
    %2102 = vrot.lane.b32.xlu0 %v243, 48
    %v2103 = vpop.permute.xlu0 %2102
    %2104 = vrot.lane.b32.xlu0 %v244, 48
    %v2105 = vpop.permute.xlu0 %2104
    %2106 = vrot.lane.b32.xlu0 %v245, 48
    %v2107 = vpop.permute.xlu0 %2106
    %2108 = vrot.lane.b32.xlu0 %v246, 48
    %v2109 = vpop.permute.xlu0 %2108
    %2110 = vrot.lane.b32.xlu0 %v247, 48
    %v2111 = vpop.permute.xlu0 %2110
    %2112 = vrot.lane.b32.xlu0 %v248, 48
    %v2113 = vpop.permute.xlu0 %2112
    %2114 = vrot.lane.b32.xlu0 %v249, 48
    %v2115 = vpop.permute.xlu0 %2114
    %v2125 = vsel %vm770, %v2084, 0
    %v2128 = vsel %vm770, %v2085, 0
    %v2131 = vsel %vm770, %v2086, 0
    %v2134 = vsel %vm770, %v2087, 0
    %v2137 = vsel %vm770, %v2088, 0
    %v2140 = vsel %vm770, %v2089, 0
    %v2143 = vsel %vm770, %v2090, 0
    %v2146 = vsel %vm770, %v2091, 0
    %2148 = vmatprep.subr.mxu0 0.0
    %2149 = vmatpush1.msra.mxu0 0.0
    %2150 = vmatprep.subr.mxu0 0.0
    %2151 = vmatpush1.msra.mxu0 0.0
    %2152 = vmatprep.subr.mxu0 0.0
    %2153 = vmatpush1.msra.mxu0 0.0
    %2154 = vmatprep.subr.mxu0 0.0
    %2155 = vmatpush1.msra.mxu0 0.0
    %2156 = vmatprep.subr.mxu0 0.0
    %2157 = vmatpush1.msra.mxu0 0.0
    %2158 = vmatprep.subr.mxu0 0.0
    %2159 = vmatpush1.msra.mxu0 0.0
    %2160 = vmatprep.subr.mxu0 0.0
    %2161 = vmatpush1.msra.mxu0 0.0
    %2162 = vmatprep.subr.mxu0 0.0
    %2163 = vmatpush1.msra.mxu0 0.0
    %2164 = vmatprep.subr.mxu0 0.0
    %2165 = vmatpush1.msra.mxu0 %v2115
    %2166 = vmatprep.subr.mxu0 0.0
    %2167 = vmatpush1.msra.mxu0 %v2113
    %2168 = vmatprep.subr.mxu0 0.0
    %2169 = vmatpush1.msra.mxu0 %v2111
    %2170 = vmatprep.subr.mxu0 0.0
    %2171 = vmatpush1.msra.mxu0 %v2109
    %2172 = vmatprep.subr.mxu0 0.0
    %2173 = vmatpush1.msra.mxu0 %v2107
    %2174 = vmatprep.subr.mxu0 0.0
    %2175 = vmatpush1.msra.mxu0 %v2105
    %2176 = vmatprep.subr.mxu0 0.0
    %2177 = vmatpush1.msra.mxu0 %v2103
    %2178 = vmatprep.subr.mxu0 0.0
    %2179 = vmatpush1.msra.mxu0 %v2101
    %2180 = vmatprep.subr.mxu0 0.0
    %2181 = vmatpush2.msra.mxu0 0.0
    %2182 = vmatprep.subr.mxu0 0.0
    %2183 = vmatpush2.msra.mxu0 0.0
    %2184 = vmatprep.subr.mxu0 0.0
    %2185 = vmatpush2.msra.mxu0 0.0
    %2186 = vmatprep.subr.mxu0 0.0
    %2187 = vmatpush2.msra.mxu0 0.0
    %2188 = vmatprep.subr.mxu0 0.0
    %2189 = vmatpush2.msra.mxu0 0.0
    %2190 = vmatprep.subr.mxu0 0.0
    %2191 = vmatpush2.msra.mxu0 0.0
    %2192 = vmatprep.subr.mxu0 0.0
    %2193 = vmatpush2.msra.mxu0 0.0
    %2194 = vmatprep.subr.mxu0 0.0
    %2195 = vmatpush2.msra.mxu0 0.0
    %2196 = vmatprep.subr.mxu0 0.0
    %2197 = vmatpush2.msra.mxu0 0.0
    %2198 = vmatprep.subr.mxu0 0.0
    %2199 = vmatpush2.msra.mxu0 0.0
    %2200 = vmatprep.subr.mxu0 0.0
    %2201 = vmatpush2.msra.mxu0 0.0
    %2202 = vmatprep.subr.mxu0 0.0
    %2203 = vmatpush2.msra.mxu0 0.0
    %2204 = vmatprep.subr.mxu0 0.0
    %2205 = vmatpush2.msra.mxu0 0.0
    %2206 = vmatprep.subr.mxu0 0.0
    %2207 = vmatpush2.msra.mxu0 0.0
    %2208 = vmatprep.subr.mxu0 0.0
    %2209 = vmatpush2.msra.mxu0 0.0
    %2210 = vmatprep.subr.mxu0 0.0
    %2211 = vmatpush2.msra.mxu0 0.0
    %2212 = vmatprep.mubr.f32.mxu0 0.0
    %2213 = vmatmul.mubr.f32.gmra.mxu0 %v2125
    %v2214 = vpop.f32.mrf.mxu0
    %v2215 = vadd.f32 0.0, %v2214
    %v2216 = vpop.f32.mrf.mxu0
    %2217 = vmatprep.mubr.f32.mxu0 0.0
    %2218 = vmatmul.mubr.f32.gmra.mxu0 %v2128
    %v2219 = vpop.f32.mrf.mxu0
    %v2220 = vadd.f32 0.0, %v2219
    %v2221 = vpop.f32.mrf.mxu0
    %2222 = vmatprep.mubr.f32.mxu0 0.0
    %2223 = vmatmul.mubr.f32.gmra.mxu0 %v2131
    %v2224 = vpop.f32.mrf.mxu0
    %v2225 = vadd.f32 0.0, %v2224
    %v2226 = vpop.f32.mrf.mxu0
    %2227 = vmatprep.mubr.f32.mxu0 0.0
    %2228 = vmatmul.mubr.f32.gmra.mxu0 %v2134
    %v2229 = vpop.f32.mrf.mxu0
    %v2230 = vadd.f32 0.0, %v2229
    %v2231 = vpop.f32.mrf.mxu0
    %2232 = vmatprep.mubr.f32.mxu0 0.0
    %2233 = vmatmul.mubr.f32.gmra.mxu0 %v2137
    %v2234 = vpop.f32.mrf.mxu0
    %v2235 = vadd.f32 0.0, %v2234
    %v2236 = vpop.f32.mrf.mxu0
    %2237 = vmatprep.mubr.f32.mxu0 0.0
    %2238 = vmatmul.mubr.f32.gmra.mxu0 %v2140
    %v2239 = vpop.f32.mrf.mxu0
    %v2240 = vadd.f32 0.0, %v2239
    %v2241 = vpop.f32.mrf.mxu0
    %2242 = vmatprep.mubr.f32.mxu0 0.0
    %2243 = vmatmul.mubr.f32.gmra.mxu0 %v2143
    %v2244 = vpop.f32.mrf.mxu0
    %v2245 = vadd.f32 0.0, %v2244
    %v2246 = vpop.f32.mrf.mxu0
    %2247 = vmatprep.mubr.f32.mxu0 0.0
    %2248 = vmatmul.mubr.f32.gmra.mxu0 %v2146
    %v2249 = vpop.f32.mrf.mxu0
    %v2250 = vadd.f32 0.0, %v2249
    %v2251 = vpop.f32.mrf.mxu0
    %2252 = vdwg.mxu0
    %v2253 = vmul.f32 %v2215, 1.5258789e-05
    %v2254 = vmul.f32 %v2220, 1.5258789e-05
    %v2255 = vmul.f32 %v2225, 1.5258789e-05
    %v2256 = vmul.f32 %v2230, 1.5258789e-05
    %v2257 = vmul.f32 %v2235, 1.5258789e-05
    %v2258 = vmul.f32 %v2240, 1.5258789e-05
    %v2259 = vmul.f32 %v2245, 1.5258789e-05
    %v2260 = vmul.f32 %v2250, 1.5258789e-05
    %2269 = vrot.lane.b32.xlu0 %v2253, 16
    %v2270 = vpop.permute.xlu0 %2269
    %2271 = vrot.lane.b32.xlu0 %v2254, 16
    %v2272 = vpop.permute.xlu0 %2271
    %2273 = vrot.lane.b32.xlu0 %v2255, 16
    %v2274 = vpop.permute.xlu0 %2273
    %2275 = vrot.lane.b32.xlu0 %v2256, 16
    %v2276 = vpop.permute.xlu0 %2275
    %2277 = vrot.lane.b32.xlu0 %v2257, 16
    %v2278 = vpop.permute.xlu0 %2277
    %2279 = vrot.lane.b32.xlu0 %v2258, 16
    %v2280 = vpop.permute.xlu0 %2279
    %2281 = vrot.lane.b32.xlu0 %v2259, 16
    %v2282 = vpop.permute.xlu0 %2281
    %2283 = vrot.lane.b32.xlu0 %v2260, 16
    %v2284 = vpop.permute.xlu0 %2283
    %vm2293 = vcmask 195712
    %2294 = vst.msk [vmem:[%s4] sm:$0xff] %vm2293, %v2270
    %2295 = vst.msk [vmem:[%s4 + $0x8] sm:$0xff] %vm2293, %v2272
    %2296 = vst.msk [vmem:[%s4 + $0x10] sm:$0xff] %vm2293, %v2274
    %2297 = vst.msk [vmem:[%s4 + $0x18] sm:$0xff] %vm2293, %v2276
    %2298 = vst.msk [vmem:[%s4 + $0x20] sm:$0xff] %vm2293, %v2278
    %2299 = vst.msk [vmem:[%s4 + $0x28] sm:$0xff] %vm2293, %v2280
    %2300 = vst.msk [vmem:[%s4 + $0x30] sm:$0xff] %vm2293, %v2282
    %2301 = vst.msk [vmem:[%s4 + $0x38] sm:$0xff] %vm2293, %v2284
    %2302 = vrot.lane.b32.xlu0 %v251, 104
    %v2303 = vpop.permute.xlu0 %2302
    %2304 = vrot.lane.b32.xlu0 %v252, 104
    %v2305 = vpop.permute.xlu0 %2304
    %2306 = vrot.lane.b32.xlu0 %v253, 104
    %v2307 = vpop.permute.xlu0 %2306
    %2308 = vrot.lane.b32.xlu0 %v254, 104
    %v2309 = vpop.permute.xlu0 %2308
    %2310 = vrot.lane.b32.xlu0 %v255, 104
    %v2311 = vpop.permute.xlu0 %2310
    %2312 = vrot.lane.b32.xlu0 %v256, 104
    %v2313 = vpop.permute.xlu0 %2312
    %2314 = vrot.lane.b32.xlu0 %v257, 104
    %v2315 = vpop.permute.xlu0 %2314
    %v2316 = vsel %vm282, %v2303, 0
    %v2318 = vsel %vm282, %v2305, 0
    %v2320 = vsel %vm282, %v2307, 0
    %v2322 = vsel %vm282, %v2309, 0
    %v2324 = vsel %vm282, %v2311, 0
    %v2326 = vsel %vm282, %v2313, 0
    %v2328 = vsel %vm282, %v2315, 0
    %2330 = vmatprep.subr.mxu0 0.0
    %2331 = vmatpush1.xpose.msra.mxu0 0.0
    %2332 = vmatprep.subr.mxu0 0.0
    %2333 = vmatpush1.xpose.msra.mxu0 0.0
    %2334 = vmatprep.subr.mxu0 0.0
    %2335 = vmatpush1.xpose.msra.mxu0 0.0
    %2336 = vmatprep.subr.mxu0 0.0
    %2337 = vmatpush1.xpose.msra.mxu0 0.0
    %2338 = vmatprep.subr.mxu0 0.0
    %2339 = vmatpush1.xpose.msra.mxu0 0.0
    %2340 = vmatprep.subr.mxu0 0.0
    %2341 = vmatpush1.xpose.msra.mxu0 0.0
    %2342 = vmatprep.subr.mxu0 0.0
    %2343 = vmatpush1.xpose.msra.mxu0 0.0
    %2344 = vmatprep.subr.mxu0 0.0
    %2345 = vmatpush1.xpose.msra.mxu0 0.0
    %2346 = vmatprep.subr.mxu0 0.0
    %2347 = vmatpush1.xpose.msra.mxu0 %v655
    %2348 = vmatprep.subr.mxu0 0.0
    %2349 = vmatpush1.xpose.msra.mxu0 %v653
    %2350 = vmatprep.subr.mxu0 0.0
    %2351 = vmatpush1.xpose.msra.mxu0 %v651
    %2352 = vmatprep.subr.mxu0 0.0
    %2353 = vmatpush1.xpose.msra.mxu0 %v649
    %2354 = vmatprep.subr.mxu0 0.0
    %2355 = vmatpush1.xpose.msra.mxu0 %v647
    %2356 = vmatprep.subr.mxu0 0.0
    %2357 = vmatpush1.xpose.msra.mxu0 %v645
    %2358 = vmatprep.subr.mxu0 0.0
    %2359 = vmatpush1.xpose.msra.mxu0 %v643
    %2360 = vmatprep.subr.mxu0 0.0
    %2361 = vmatpush1.xpose.msra.mxu0 %v641
    %2362 = vmatprep.subr.mxu0 0.0
    %2363 = vmatpush2.xpose.msra.mxu0 0.0
    %2364 = vmatprep.subr.mxu0 0.0
    %2365 = vmatpush2.xpose.msra.mxu0 0.0
    %2366 = vmatprep.subr.mxu0 0.0
    %2367 = vmatpush2.xpose.msra.mxu0 0.0
    %2368 = vmatprep.subr.mxu0 0.0
    %2369 = vmatpush2.xpose.msra.mxu0 0.0
    %2370 = vmatprep.subr.mxu0 0.0
    %2371 = vmatpush2.xpose.msra.mxu0 0.0
    %2372 = vmatprep.subr.mxu0 0.0
    %2373 = vmatpush2.xpose.msra.mxu0 0.0
    %2374 = vmatprep.subr.mxu0 0.0
    %2375 = vmatpush2.xpose.msra.mxu0 0.0
    %2376 = vmatprep.subr.mxu0 0.0
    %2377 = vmatpush2.xpose.msra.mxu0 0.0
    %2378 = vmatprep.subr.mxu0 0.0
    %2379 = vmatpush2.xpose.msra.mxu0 0.0
    %2380 = vmatprep.subr.mxu0 0.0
    %2381 = vmatpush2.xpose.msra.mxu0 0.0
    %2382 = vmatprep.subr.mxu0 0.0
    %2383 = vmatpush2.xpose.msra.mxu0 0.0
    %2384 = vmatprep.subr.mxu0 0.0
    %2385 = vmatpush2.xpose.msra.mxu0 0.0
    %2386 = vmatprep.subr.mxu0 0.0
    %2387 = vmatpush2.xpose.msra.mxu0 0.0
    %2388 = vmatprep.subr.mxu0 0.0
    %2389 = vmatpush2.xpose.msra.mxu0 0.0
    %2390 = vmatprep.subr.mxu0 0.0
    %2391 = vmatpush2.xpose.msra.mxu0 0.0
    %2392 = vmatprep.subr.mxu0 0.0
    %2393 = vmatpush2.xpose.msra.mxu0 0.0
    %2394 = vmatprep.mubr.f32.mxu0 0.0
    %2395 = vmatmul.mubr.f32.gmra.mxu0 %v639
    %v2396 = vpop.f32.mrf.mxu0
    %v2397 = vadd.f32 0.0, %v2396
    %v2398 = vpop.f32.mrf.mxu0
    %2399 = vmatprep.mubr.f32.mxu0 0.0
    %2400 = vmatmul.mubr.f32.gmra.mxu0 %v2316
    %v2401 = vpop.f32.mrf.mxu0
    %v2402 = vadd.f32 0.0, %v2401
    %v2403 = vpop.f32.mrf.mxu0
    %2404 = vmatprep.mubr.f32.mxu0 0.0
    %2405 = vmatmul.mubr.f32.gmra.mxu0 %v2318
    %v2406 = vpop.f32.mrf.mxu0
    %v2407 = vadd.f32 0.0, %v2406
    %v2408 = vpop.f32.mrf.mxu0
    %2409 = vmatprep.mubr.f32.mxu0 0.0
    %2410 = vmatmul.mubr.f32.gmra.mxu0 %v2320
    %v2411 = vpop.f32.mrf.mxu0
    %v2412 = vadd.f32 0.0, %v2411
    %v2413 = vpop.f32.mrf.mxu0
    %2414 = vmatprep.mubr.f32.mxu0 0.0
    %2415 = vmatmul.mubr.f32.gmra.mxu0 %v2322
    %v2416 = vpop.f32.mrf.mxu0
    %v2417 = vadd.f32 0.0, %v2416
    %v2418 = vpop.f32.mrf.mxu0
    %2419 = vmatprep.mubr.f32.mxu0 0.0
    %2420 = vmatmul.mubr.f32.gmra.mxu0 %v2324
    %v2421 = vpop.f32.mrf.mxu0
    %v2422 = vadd.f32 0.0, %v2421
    %v2423 = vpop.f32.mrf.mxu0
    %2424 = vmatprep.mubr.f32.mxu0 0.0
    %2425 = vmatmul.mubr.f32.gmra.mxu0 %v2326
    %v2426 = vpop.f32.mrf.mxu0
    %v2427 = vadd.f32 0.0, %v2426
    %v2428 = vpop.f32.mrf.mxu0
    %2429 = vmatprep.mubr.f32.mxu0 0.0
    %2430 = vmatmul.mubr.f32.gmra.mxu0 %v2328
    %v2431 = vpop.f32.mrf.mxu0
    %v2432 = vadd.f32 0.0, %v2431
    %v2433 = vpop.f32.mrf.mxu0
    %2434 = vdwg.mxu0
    %v2435 = vsel %vm770, %v2397, -inf
    %2436 = vmax.xlane.f32.xlu0 %v2435
    %v2437 = vpop.xlane.xlu0 %2436
    %v2438 = vsel %vm770, %v2402, -inf
    %2439 = vmax.xlane.f32.xlu0 %v2438
    %v2440 = vpop.xlane.xlu0 %2439
    %v2441 = vsel %vm770, %v2407, -inf
    %2442 = vmax.xlane.f32.xlu0 %v2441
    %v2443 = vpop.xlane.xlu0 %2442
    %v2444 = vsel %vm770, %v2412, -inf
    %2445 = vmax.xlane.f32.xlu0 %v2444
    %v2446 = vpop.xlane.xlu0 %2445
    %v2447 = vsel %vm770, %v2417, -inf
    %2448 = vmax.xlane.f32.xlu0 %v2447
    %v2449 = vpop.xlane.xlu0 %2448
    %v2450 = vsel %vm770, %v2422, -inf
    %2451 = vmax.xlane.f32.xlu0 %v2450
    %v2452 = vpop.xlane.xlu0 %2451
    %v2453 = vsel %vm770, %v2427, -inf
    %2454 = vmax.xlane.f32.xlu0 %v2453
    %v2455 = vpop.xlane.xlu0 %2454
    %v2456 = vsel %vm770, %v2432, -inf
    %2457 = vmax.xlane.f32.xlu0 %v2456
    %v2458 = vpop.xlane.xlu0 %2457
    %v2459 = vsub.f32 %v2397, %v2437
    %v2460 = vsub.f32 %v2402, %v2440
    %v2461 = vsub.f32 %v2407, %v2443
    %v2462 = vsub.f32 %v2412, %v2446
    %v2463 = vsub.f32 %v2417, %v2449
    %v2464 = vsub.f32 %v2422, %v2452
    %v2465 = vsub.f32 %v2427, %v2455
    %v2466 = vsub.f32 %v2432, %v2458
    %v2467 = vmul.f32 %v2459, 1.442695
    %v2468 = vpow.pop %v2467
    %v2469 = vmul.f32 %v2460, 1.442695
    %v2470 = vpow.pop %v2469
    %v2471 = vmul.f32 %v2461, 1.442695
    %v2472 = vpow.pop %v2471
    %v2473 = vmul.f32 %v2462, 1.442695
    %v2474 = vpow.pop %v2473
    %v2475 = vmul.f32 %v2463, 1.442695
    %v2476 = vpow.pop %v2475
    %v2477 = vmul.f32 %v2464, 1.442695
    %v2478 = vpow.pop %v2477
    %v2479 = vmul.f32 %v2465, 1.442695
    %v2480 = vpow.pop %v2479
    %v2481 = vmul.f32 %v2466, 1.442695
    %v2482 = vpow.pop %v2481
    %v2483 = vsel %vm770, %v2468, 0.0
    %2484 = vadd.xlane.f32.xlu0 %v2483
    %v2485 = vpop.xlane.xlu0 %2484
    %v2486 = vsel %vm770, %v2470, 0.0
    %2487 = vadd.xlane.f32.xlu0 %v2486
    %v2488 = vpop.xlane.xlu0 %2487
    %v2489 = vsel %vm770, %v2472, 0.0
    %2490 = vadd.xlane.f32.xlu0 %v2489
    %v2491 = vpop.xlane.xlu0 %2490
    %v2492 = vsel %vm770, %v2474, 0.0
    %2493 = vadd.xlane.f32.xlu0 %v2492
    %v2494 = vpop.xlane.xlu0 %2493
    %v2495 = vsel %vm770, %v2476, 0.0
    %2496 = vadd.xlane.f32.xlu0 %v2495
    %v2497 = vpop.xlane.xlu0 %2496
    %v2498 = vsel %vm770, %v2478, 0.0
    %2499 = vadd.xlane.f32.xlu0 %v2498
    %v2500 = vpop.xlane.xlu0 %2499
    %v2501 = vsel %vm770, %v2480, 0.0
    %2502 = vadd.xlane.f32.xlu0 %v2501
    %v2503 = vpop.xlane.xlu0 %2502
    %v2504 = vsel %vm770, %v2482, 0.0
    %2505 = vadd.xlane.f32.xlu0 %v2504
    %v2506 = vpop.xlane.xlu0 %2505
    %v2507 = vrcp.pop %v2485
    %v2508 = vmul.f32 %v2468, %v2507
    %v2509 = vrcp.pop %v2488
    %v2510 = vmul.f32 %v2470, %v2509
    %v2511 = vrcp.pop %v2491
    %v2512 = vmul.f32 %v2472, %v2511
    %v2513 = vrcp.pop %v2494
    %v2514 = vmul.f32 %v2474, %v2513
    %v2515 = vrcp.pop %v2497
    %v2516 = vmul.f32 %v2476, %v2515
    %v2517 = vrcp.pop %v2500
    %v2518 = vmul.f32 %v2478, %v2517
    %v2519 = vrcp.pop %v2503
    %v2520 = vmul.f32 %v2480, %v2519
    %v2521 = vrcp.pop %v2506
    %v2522 = vmul.f32 %v2482, %v2521
    %v2523 = vmul.f32 %v2508, %v1130
    %v2524 = vmul.f32 %v2510, %v1135
    %v2525 = vmul.f32 %v2512, %v1140
    %v2526 = vmul.f32 %v2514, %v1145
    %v2527 = vmul.f32 %v2516, %v1150
    %v2528 = vmul.f32 %v2518, %v1155
    %v2529 = vmul.f32 %v2520, %v1160
    %v2530 = vmul.f32 %v2522, %v1165
    %v2531 = vround.ne.pseudo %v2523
    %v2532 = vround.ne.pseudo %v2524
    %v2533 = vround.ne.pseudo %v2525
    %v2534 = vround.ne.pseudo %v2526
    %v2535 = vround.ne.pseudo %v2527
    %v2536 = vround.ne.pseudo %v2528
    %v2537 = vround.ne.pseudo %v2529
    %v2538 = vround.ne.pseudo %v2530
    %v2539 = vmax.f32 %v2531, -32768.0
    %v2540 = vmax.f32 %v2532, -32768.0
    %v2541 = vmax.f32 %v2533, -32768.0
    %v2542 = vmax.f32 %v2534, -32768.0
    %v2543 = vmax.f32 %v2535, -32768.0
    %v2544 = vmax.f32 %v2536, -32768.0
    %v2545 = vmax.f32 %v2537, -32768.0
    %v2546 = vmax.f32 %v2538, -32768.0
    %v2547 = vmin.f32 %v2539, 32767.0
    %v2548 = vmin.f32 %v2540, 32767.0
    %v2549 = vmin.f32 %v2541, 32767.0
    %v2550 = vmin.f32 %v2542, 32767.0
    %v2551 = vmin.f32 %v2543, 32767.0
    %v2552 = vmin.f32 %v2544, 32767.0
    %v2553 = vmin.f32 %v2545, 32767.0
    %v2554 = vmin.f32 %v2546, 32767.0
    %2555 = vst.msk [vmem:[#allocation2 + $0xc0] sm:$0xff] %vm770, %v2547
    %2556 = vst.msk [vmem:[#allocation2 + $0xc8] sm:$0xff] %vm770, %v2548
    %2557 = vst.msk [vmem:[#allocation2 + $0xd0] sm:$0xff] %vm770, %v2549
    %2558 = vst.msk [vmem:[#allocation2 + $0xd8] sm:$0xff] %vm770, %v2550
    %2559 = vst.msk [vmem:[#allocation2 + $0xe0] sm:$0xff] %vm770, %v2551
    %2560 = vst.msk [vmem:[#allocation2 + $0xe8] sm:$0xff] %vm770, %v2552
    %2561 = vst.msk [vmem:[#allocation2 + $0xf0] sm:$0xff] %vm770, %v2553
    %2562 = vst.msk [vmem:[#allocation2 + $0xf8] sm:$0xff] %vm770, %v2554
    %2563 = vrot.lane.b32.xlu0 %v242, 40
    %v2564 = vpop.permute.xlu0 %2563
    %2565 = vrot.lane.b32.xlu0 %v243, 40
    %v2566 = vpop.permute.xlu0 %2565
    %2567 = vrot.lane.b32.xlu0 %v244, 40
    %v2568 = vpop.permute.xlu0 %2567
    %2569 = vrot.lane.b32.xlu0 %v245, 40
    %v2570 = vpop.permute.xlu0 %2569
    %2571 = vrot.lane.b32.xlu0 %v246, 40
    %v2572 = vpop.permute.xlu0 %2571
    %2573 = vrot.lane.b32.xlu0 %v247, 40
    %v2574 = vpop.permute.xlu0 %2573
    %2575 = vrot.lane.b32.xlu0 %v248, 40
    %v2576 = vpop.permute.xlu0 %2575
    %2577 = vrot.lane.b32.xlu0 %v249, 40
    %v2578 = vpop.permute.xlu0 %2577
    %v2588 = vsel %vm770, %v2547, 0
    %v2591 = vsel %vm770, %v2548, 0
    %v2594 = vsel %vm770, %v2549, 0
    %v2597 = vsel %vm770, %v2550, 0
    %v2600 = vsel %vm770, %v2551, 0
    %v2603 = vsel %vm770, %v2552, 0
    %v2606 = vsel %vm770, %v2553, 0
    %v2609 = vsel %vm770, %v2554, 0
    %2611 = vmatprep.subr.mxu0 0.0
    %2612 = vmatpush1.msra.mxu0 0.0
    %2613 = vmatprep.subr.mxu0 0.0
    %2614 = vmatpush1.msra.mxu0 0.0
    %2615 = vmatprep.subr.mxu0 0.0
    %2616 = vmatpush1.msra.mxu0 0.0
    %2617 = vmatprep.subr.mxu0 0.0
    %2618 = vmatpush1.msra.mxu0 0.0
    %2619 = vmatprep.subr.mxu0 0.0
    %2620 = vmatpush1.msra.mxu0 0.0
    %2621 = vmatprep.subr.mxu0 0.0
    %2622 = vmatpush1.msra.mxu0 0.0
    %2623 = vmatprep.subr.mxu0 0.0
    %2624 = vmatpush1.msra.mxu0 0.0
    %2625 = vmatprep.subr.mxu0 0.0
    %2626 = vmatpush1.msra.mxu0 0.0
    %2627 = vmatprep.subr.mxu0 0.0
    %2628 = vmatpush1.msra.mxu0 %v2578
    %2629 = vmatprep.subr.mxu0 0.0
    %2630 = vmatpush1.msra.mxu0 %v2576
    %2631 = vmatprep.subr.mxu0 0.0
    %2632 = vmatpush1.msra.mxu0 %v2574
    %2633 = vmatprep.subr.mxu0 0.0
    %2634 = vmatpush1.msra.mxu0 %v2572
    %2635 = vmatprep.subr.mxu0 0.0
    %2636 = vmatpush1.msra.mxu0 %v2570
    %2637 = vmatprep.subr.mxu0 0.0
    %2638 = vmatpush1.msra.mxu0 %v2568
    %2639 = vmatprep.subr.mxu0 0.0
    %2640 = vmatpush1.msra.mxu0 %v2566
    %2641 = vmatprep.subr.mxu0 0.0
    %2642 = vmatpush1.msra.mxu0 %v2564
    %2643 = vmatprep.subr.mxu0 0.0
    %2644 = vmatpush2.msra.mxu0 0.0
    %2645 = vmatprep.subr.mxu0 0.0
    %2646 = vmatpush2.msra.mxu0 0.0
    %2647 = vmatprep.subr.mxu0 0.0
    %2648 = vmatpush2.msra.mxu0 0.0
    %2649 = vmatprep.subr.mxu0 0.0
    %2650 = vmatpush2.msra.mxu0 0.0
    %2651 = vmatprep.subr.mxu0 0.0
    %2652 = vmatpush2.msra.mxu0 0.0
    %2653 = vmatprep.subr.mxu0 0.0
    %2654 = vmatpush2.msra.mxu0 0.0
    %2655 = vmatprep.subr.mxu0 0.0
    %2656 = vmatpush2.msra.mxu0 0.0
    %2657 = vmatprep.subr.mxu0 0.0
    %2658 = vmatpush2.msra.mxu0 0.0
    %2659 = vmatprep.subr.mxu0 0.0
    %2660 = vmatpush2.msra.mxu0 0.0
    %2661 = vmatprep.subr.mxu0 0.0
    %2662 = vmatpush2.msra.mxu0 0.0
    %2663 = vmatprep.subr.mxu0 0.0
    %2664 = vmatpush2.msra.mxu0 0.0
    %2665 = vmatprep.subr.mxu0 0.0
    %2666 = vmatpush2.msra.mxu0 0.0
    %2667 = vmatprep.subr.mxu0 0.0
    %2668 = vmatpush2.msra.mxu0 0.0
    %2669 = vmatprep.subr.mxu0 0.0
    %2670 = vmatpush2.msra.mxu0 0.0
    %2671 = vmatprep.subr.mxu0 0.0
    %2672 = vmatpush2.msra.mxu0 0.0
    %2673 = vmatprep.subr.mxu0 0.0
    %2674 = vmatpush2.msra.mxu0 0.0
    %2675 = vmatprep.mubr.f32.mxu0 0.0
    %2676 = vmatmul.mubr.f32.gmra.mxu0 %v2588
    %v2677 = vpop.f32.mrf.mxu0
    %v2678 = vadd.f32 0.0, %v2677
    %v2679 = vpop.f32.mrf.mxu0
    %2680 = vmatprep.mubr.f32.mxu0 0.0
    %2681 = vmatmul.mubr.f32.gmra.mxu0 %v2591
    %v2682 = vpop.f32.mrf.mxu0
    %v2683 = vadd.f32 0.0, %v2682
    %v2684 = vpop.f32.mrf.mxu0
    %2685 = vmatprep.mubr.f32.mxu0 0.0
    %2686 = vmatmul.mubr.f32.gmra.mxu0 %v2594
    %v2687 = vpop.f32.mrf.mxu0
    %v2688 = vadd.f32 0.0, %v2687
    %v2689 = vpop.f32.mrf.mxu0
    %2690 = vmatprep.mubr.f32.mxu0 0.0
    %2691 = vmatmul.mubr.f32.gmra.mxu0 %v2597
    %v2692 = vpop.f32.mrf.mxu0
    %v2693 = vadd.f32 0.0, %v2692
    %v2694 = vpop.f32.mrf.mxu0
    %2695 = vmatprep.mubr.f32.mxu0 0.0
    %2696 = vmatmul.mubr.f32.gmra.mxu0 %v2600
    %v2697 = vpop.f32.mrf.mxu0
    %v2698 = vadd.f32 0.0, %v2697
    %v2699 = vpop.f32.mrf.mxu0
    %2700 = vmatprep.mubr.f32.mxu0 0.0
    %2701 = vmatmul.mubr.f32.gmra.mxu0 %v2603
    %v2702 = vpop.f32.mrf.mxu0
    %v2703 = vadd.f32 0.0, %v2702
    %v2704 = vpop.f32.mrf.mxu0
    %2705 = vmatprep.mubr.f32.mxu0 0.0
    %2706 = vmatmul.mubr.f32.gmra.mxu0 %v2606
    %v2707 = vpop.f32.mrf.mxu0
    %v2708 = vadd.f32 0.0, %v2707
    %v2709 = vpop.f32.mrf.mxu0
    %2710 = vmatprep.mubr.f32.mxu0 0.0
    %2711 = vmatmul.mubr.f32.gmra.mxu0 %v2609
    %v2712 = vpop.f32.mrf.mxu0
    %v2713 = vadd.f32 0.0, %v2712
    %v2714 = vpop.f32.mrf.mxu0
    %2715 = vdwg.mxu0
    %v2716 = vmul.f32 %v2678, 1.5258789e-05
    %v2717 = vmul.f32 %v2683, 1.5258789e-05
    %v2718 = vmul.f32 %v2688, 1.5258789e-05
    %v2719 = vmul.f32 %v2693, 1.5258789e-05
    %v2720 = vmul.f32 %v2698, 1.5258789e-05
    %v2721 = vmul.f32 %v2703, 1.5258789e-05
    %v2722 = vmul.f32 %v2708, 1.5258789e-05
    %v2723 = vmul.f32 %v2713, 1.5258789e-05
    %2732 = vrot.lane.b32.xlu0 %v2716, 24
    %v2733 = vpop.permute.xlu0 %2732
    %2734 = vrot.lane.b32.xlu0 %v2717, 24
    %v2735 = vpop.permute.xlu0 %2734
    %2736 = vrot.lane.b32.xlu0 %v2718, 24
    %v2737 = vpop.permute.xlu0 %2736
    %2738 = vrot.lane.b32.xlu0 %v2719, 24
    %v2739 = vpop.permute.xlu0 %2738
    %2740 = vrot.lane.b32.xlu0 %v2720, 24
    %v2741 = vpop.permute.xlu0 %2740
    %2742 = vrot.lane.b32.xlu0 %v2721, 24
    %v2743 = vpop.permute.xlu0 %2742
    %2744 = vrot.lane.b32.xlu0 %v2722, 24
    %v2745 = vpop.permute.xlu0 %2744
    %2746 = vrot.lane.b32.xlu0 %v2723, 24
    %v2747 = vpop.permute.xlu0 %2746
    %vm2756 = vcmask 261312
    %2757 = vst.msk [vmem:[%s4] sm:$0xff] %vm2756, %v2733
    %2758 = vst.msk [vmem:[%s4 + $0x8] sm:$0xff] %vm2756, %v2735
    %2759 = vst.msk [vmem:[%s4 + $0x10] sm:$0xff] %vm2756, %v2737
    %2760 = vst.msk [vmem:[%s4 + $0x18] sm:$0xff] %vm2756, %v2739
    %2761 = vst.msk [vmem:[%s4 + $0x20] sm:$0xff] %vm2756, %v2741
    %2762 = vst.msk [vmem:[%s4 + $0x28] sm:$0xff] %vm2756, %v2743
    %2763 = vst.msk [vmem:[%s4 + $0x30] sm:$0xff] %vm2756, %v2745
    %2764 = vst.msk [vmem:[%s4 + $0x38] sm:$0xff] %vm2756, %v2747
    // Predicated region
    $region14: #{vit_self_attention_forward.1} parent=1 // pred_check
      _
    $region15: #{vit_self_attention_forward.1} parent=1 // pred_check_branch
      %2766 = sbr.rel (0) target = $region17
    $region16: #{vit_self_attention_forward.1} parent=1 // pred_region
      %s2768 = ssub.s32 4096, 4096
      %2769 = vsyncadd [#allocation3], %s2768
      %s2770 = sshll.u32 [#allocation2], 4
      %s2771 = int_to_ptr.vmem [resolvable:$true] %s2770
      %2776 = dma.vmem_to_hbm [thread:$0]  %s2771, 4096, %s3, [#allocation3], 128, 128, 8
    $region17: #{vit_self_attention_forward.1} parent=1 // pred_fallthru
      _
    // Predicated region
    $region18: #{vit_self_attention_forward.1} parent=1 // pred_check
      _
    $region19: #{vit_self_attention_forward.1} parent=1 // pred_check_branch
      %2778 = sbr.rel (0) target = $region21
    $region20: #{vit_self_attention_forward.1} parent=1 // pred_region
      _
    $region21: #{vit_self_attention_forward.1} parent=1 // pred_fallthru
      _
    // Predicated region
    $region22: #{vit_self_attention_forward.1} parent=1 // pred_check
      _
    $region23: #{vit_self_attention_forward.1} parent=1 // pred_check_branch
      %2780 = sbr.rel (0) target = $region25
    $region24: #{vit_self_attention_forward.1} parent=1 // pred_region
      %2781 = dma.done [#allocation3], 4096
    $region25: #{vit_self_attention_forward.1} parent=1 // pred_fallthru
      _
    // Predicated region
    $region26: #{vit_self_attention_forward.1} parent=1 // pred_check
      _
    $region27: #{vit_self_attention_forward.1} parent=1 // pred_check_branch
      %2783 = sbr.rel (0) target = $region29
    $region28: #{vit_self_attention_forward.1} parent=1 // pred_region
      _
    $region29: #{vit_self_attention_forward.1} parent=1 // pred_fallthru
      _
    %2784 = vsyncpa [#allocation3], 1

</llo_original>
